<compile_context>
chip_gen: v6e
topology: v6e:2x2x1
jax: 0.10.0
libtpu: 0.0.40
codegen_flags: <defaults>
</compile_context>

<pallas_src>
import jax
import jax.numpy as jnp
from jax.experimental import pallas as pl
from jax.experimental.pallas import tpu as pltpu

_VMEM = pl.BlockSpec(memory_space=pltpu.MemorySpace.VMEM)
_SMEM = pl.BlockSpec(memory_space=pltpu.MemorySpace.SMEM)
_OUT_W = 128   # lane-dense packed scorer output width (arc = col 0, labels = cols 1:1+R)


def _lstm_step(xg_row, h, c, w_hh, L):
    """One nn.LSTMCell step; xg_row already holds x @ W_ih + (b_ih + b_hh)."""
    gates = xg_row + jnp.dot(h, w_hh, preferred_element_type=jnp.float32)   # (1, 4L)
    i_g = jax.nn.sigmoid(gates[:, 0 * L:1 * L])
    f_g = jax.nn.sigmoid(gates[:, 1 * L:2 * L])
    g_g = jnp.tanh(gates[:, 2 * L:3 * L])
    o_g = jax.nn.sigmoid(gates[:, 3 * L:4 * L])
    c_new = f_g * c + i_g * g_g
    h_new = o_g * jnp.tanh(c_new)
    return h_new, c_new


def _bilstm(x_in, w_ih_f, w_hh_f, b_f, w_ih_b, w_hh_b, b_b, h_out_ref):
    """Bidirectional LSTM; writes [backward | forward] columns into h_out_ref (T, 2L)."""
    T = x_in.shape[0]
    L = w_hh_f.shape[0]
    # Hoisted input projections: one (T,D)x(D,4L) matmul per direction.
    xg_f = jnp.dot(x_in, w_ih_f, preferred_element_type=jnp.float32) + b_f
    xg_b = jnp.dot(x_in, w_ih_b, preferred_element_type=jnp.float32) + b_b
    # forward direction -> columns [L:2L]  (== entry.lstms[1])
    h = jnp.zeros((1, L), jnp.float32)
    c = jnp.zeros((1, L), jnp.float32)
    for t in range(T):                       # static T -> fully unrolled
        h, c = _lstm_step(xg_f[t:t + 1, :], h, c, w_hh_f, L)
        h_out_ref[t:t + 1, L:2 * L] = h
    # backward direction -> columns [0:L]   (== entry.lstms[0]); no array reversal
    h = jnp.zeros((1, L), jnp.float32)
    c = jnp.zeros((1, L), jnp.float32)
    for t in range(T):
        tt = T - 1 - t
        h, c = _lstm_step(xg_b[tt:tt + 1, :], h, c, w_hh_b, L)
        h_out_ref[tt:tt + 1, 0:L] = h


def fused_parser_kernel(x_ref,
                        wih_f1, whh_f1, b_f1, wih_b1, whh_b1, b_b1,
                        wih_f2, whh_f2, b_f2, wih_b2, whh_b2, b_b2,
                        wproj_ref, wout_ref, brow_ref, sbias_ref,
                        out_ref, h1_ref, h2_ref):
    T = x_ref.shape[0]
    U = wproj_ref.shape[1] // 4

    # ---- BiLSTM stack (builders, then bbuilders), fully VMEM resident ------- #
    _bilstm(x_ref[...], wih_f1[...], whh_f1[...], b_f1[...],
            wih_b1[...], whh_b1[...], b_b1[...], h1_ref)
    _bilstm(h1_ref[...], wih_f2[...], whh_f2[...], b_f2[...],
            wih_b2[...], whh_b2[...], b_b2[...], h2_ref)
    h = h2_ref[...]                                                  # (T, 2L)

    # ---- biaffine-MLP arc + label scorer ------------------------------------ #
    # One fused projection (T,2L)x(2L,4U) instead of four separate matmuls.
    proj = jnp.dot(h, wproj_ref[...], preferred_element_type=jnp.float32)   # (T, 4U)
    headfov = proj[:, 0 * U:1 * U]
    modfov = proj[:, 1 * U:2 * U]
    rheadfov = proj[:, 2 * U:3 * U]
    rmodfov = proj[:, 3 * U:4 * U]

    hb00 = sbias_ref[0]    # hidBias[0,0]   (see faithfulness note at top)
    rhb00 = sbias_ref[1]   # rhidBias[0,0]

    # Batched activations, flattened to (T*T, U):
    #   arc   row a = i*T + j : tanh(headfov[i] + modfov[j]  + hb00)
    #   label row a = m*T + h : tanh(rheadfov[h] + rmodfov[m] + rhb00)
    a_flat = jnp.concatenate(
        [jnp.tanh(headfov[i:i + 1, :] + modfov + hb00) for i in range(T)], axis=0)
    ra_flat = jnp.concatenate(
        [jnp.tanh(rmodfov[m:m + 1, :] + rheadfov + rhb00) for m in range(T)], axis=0)

    # Block-diagonal packed output weight -> one lane-dense (T*T, 128) store.
    wout = wout_ref[...]                                             # (2U, 128)
    out = (jnp.dot(a_flat, wout[0:U, :], preferred_element_type=jnp.float32)
           + jnp.dot(ra_flat, wout[U:2 * U, :], preferred_element_type=jnp.float32)
           + brow_ref[...])                       # adds routBias[0,0] on label cols
    out_ref[...] = out


@jax.jit
def forward(word_ids, pos_ids, params):
    """Embedding gather + one fused Pallas kernel; returns (scores, lscores)."""
    p = params
    # embedding lookup == wlookup / plookup; cat([wordvec, posvec]) per token
    x = jnp.concatenate([p["wemb"][word_ids], p["pemb"][pos_ids]], axis=-1)  # (T, D)
    T = x.shape[0]
    L = p["lstm_f1"][1].shape[0]
    U = p["hidLayerFOH"].shape[1]
    R = p["routLayer"].shape[1]
    assert 1 + R <= _OUT_W, "packed scorer output must fit in 128 lanes"

    # Pack the four (2L,U) scorer projections into one (2L, 4U) weight.
    w_proj = jnp.concatenate([p["hidLayerFOH"], p["hidLayerFOM"],
                              p["rhidLayerFOH"], p["rhidLayerFOM"]], axis=1)
    # Block-diagonal [outLayer | routLayer] packed into 128 lanes.
    w_out = jnp.zeros((2 * U, _OUT_W), jnp.float32)
    w_out = w_out.at[0:U, 0:1].set(p["outLayer"])
    w_out = w_out.at[U:2 * U, 1:1 + R].set(p["routLayer"])
    bias_row = jnp.zeros((1, _OUT_W), jnp.float32).at[0, 1:1 + R].set(p["routBias"][0, 0])
    bias_scalars = jnp.stack([p["hidBias"][0, 0], p["rhidBias"][0, 0]])      # -> SMEM

    packed = pl.pallas_call(
        fused_parser_kernel,
        out_shape=jax.ShapeDtypeStruct((T * T, _OUT_W), jnp.float32),
        in_specs=[_VMEM] * 16 + [_SMEM],
        out_specs=_VMEM,
        scratch_shapes=[pltpu.VMEM((T, 2 * L), jnp.float32),   # h1 (first BiLSTM)
                        pltpu.VMEM((T, 2 * L), jnp.float32)],  # h2 (second BiLSTM)
    )(x,
      *p["lstm_f1"], *p["lstm_b1"], *p["lstm_f2"], *p["lstm_b2"],
      w_proj, w_out, bias_row, bias_scalars)

    scores = packed[:, 0].reshape(T, T)              # (head, modifier)
    lscores = packed[:, 1:1 + R].reshape(T, T, R)    # (modifier, head, rel)
    # TODO(synk): bistdecoder.parse_proj(scores) and err/lerr hinge selection are
    # host-side Python and intentionally not implemented here.
    return scores, lscores


# ----------------------------------------------------------------------------- #
# Pure-JAX reference of the same forward math (for correctness checking only).
# ----------------------------------------------------------------------------- #
def _reference_forward(word_ids, pos_ids, params):
    p = params
    x = jnp.concatenate([p["wemb"][word_ids], p["pemb"][pos_ids]], axis=-1)

    def run_lstm(xs, w_ih, w_hh, b):
        L = w_hh.shape[0]

        def step(carry, x_t):
            h, c = carry
            g = x_t[None, :] @ w_ih + h @ w_hh + b
            i = jax.nn.sigmoid(g[:, 0:L])
            f = jax.nn.sigmoid(g[:, L:2 * L])
            gg = jnp.tanh(g[:, 2 * L:3 * L])
            o = jax.nn.sigmoid(g[:, 3 * L:4 * L])
            c = f * c + i * gg
            h = o * jnp.tanh(c)
            return (h, c), h[0]

        init = (jnp.zeros((1, L), jnp.float32), jnp.zeros((1, L), jnp.float32))
        _, hs = jax.lax.scan(step, init, xs)
        return hs

    hf1 = run_lstm(x, *p["lstm_f1"])
    hb1 = run_lstm(x[::-1], *p["lstm_b1"])[::-1]
    h1 = jnp.concatenate([hb1, hf1], axis=-1)
    hf2 = run_lstm(h1, *p["lstm_f2"])
    hb2 = run_lstm(h1[::-1], *p["lstm_b2"])[::-1]
    h = jnp.concatenate([hb2, hf2], axis=-1)

    headfov = h @ p["hidLayerFOH"]
    modfov = h @ p["hidLayerFOM"]
    rheadfov = h @ p["rhidLayerFOH"]
    rmodfov = h @ p["rhidLayerFOM"]
    hb0 = p["hidBias"][0, 0]
    rhb0 = p["rhidBias"][0, 0]
    rb0 = p["routBias"][0, 0]
    scores = (jnp.tanh(headfov[:, None, :] + modfov[None, :, :] + hb0)
              @ p["outLayer"])[:, :, 0]
    lscores = (jnp.tanh(rmodfov[:, None, :] + rheadfov[None, :, :] + rhb0)
               @ p["routLayer"]) + rb0
    return scores, lscores


# ----------------------------------------------------------------------------- #
# Deterministic parameter construction (shapes from MSTParserLSTMModel.__init__).
# ----------------------------------------------------------------------------- #
def xavier_uniform(key, shape):
    fan_in, fan_out = shape[0], shape[1]
    a = (6.0 / (fan_in + fan_out)) ** 0.5
    return jax.random.uniform(key, shape, jnp.float32, -a, a)


def lstm_cell_params(key, in_dim, hidden):
    # nn.LSTMCell-style init; weights stored column-layout (in_dim, 4H) with the
    # PyTorch i|f|g|o gate packing; b = bias_ih + bias_hh.
    # (Loading a real torch checkpoint would require transposing its (4H, in) tensors.)
    k1, k2, k3 = jax.random.split(key, 3)
    s = 1.0 / (hidden ** 0.5)
    w_ih = jax.random.uniform(k1, (in_dim, 4 * hidden), jnp.float32, -s, s)
    w_hh = jax.random.uniform(k2, (hidden, 4 * hidden), jnp.float32, -s, s)
    b = jax.random.uniform(k3, (1, 4 * hidden), jnp.float32, -s, s)
    return w_ih, w_hh, b


if __name__ == "__main__":
    # small, self-consistent shapes
    T = 8              # sentence length (incl. ROOT)
    wdims, pdims = 32, 16
    ldims = 32
    hidden_units = 64
    n_rels = 64        # == hidden_units (keeps the original routBias broadcast valid)
    vocab_size, pos_size = 100, 20

    key = jax.random.PRNGKey(0)
    ks = jax.random.split(key, 16)

    params = {
        "wemb": jax.random.normal(ks[0], (vocab_size + 3, wdims), jnp.float32),
        "pemb": jax.random.normal(ks[1], (pos_size + 3, pdims), jnp.float32),
        "lstm_f1": lstm_cell_params(ks[2], wdims + pdims, ldims),
        "lstm_b1": lstm_cell_params(ks[3], wdims + pdims, ldims),
        "lstm_f2": lstm_cell_params(ks[4], 2 * ldims, ldims),
        "lstm_b2": lstm_cell_params(ks[5], 2 * ldims, ldims),
        "hidLayerFOH": xavier_uniform(ks[6], (2 * ldims, hidden_units)),
        "hidLayerFOM": xavier_uniform(ks[7], (2 * ldims, hidden_units)),
        "hidBias": xavier_uniform(ks[8], (hidden_units, 1)),        # Parameter(int) -> (U,1)
        "outLayer": xavier_uniform(ks[9], (hidden_units, 1)),
        "rhidLayerFOH": xavier_uniform(ks[10], (2 * ldims, hidden_units)),
        "rhidLayerFOM": xavier_uniform(ks[11], (2 * ldims, hidden_units)),
        "rhidBias": xavier_uniform(ks[12], (hidden_units, 1)),
        "routLayer": xavier_uniform(ks[13], (hidden_units, n_rels)),
        "routBias": xavier_uniform(ks[14], (n_rels, 1)),
    }

    word_ids = jax.random.randint(ks[15], (T,), 3, vocab_size + 3, dtype=jnp.int32)
    pos_ids = jax.random.randint(jax.random.fold_in(key, 99), (T,), 3, pos_size + 3,
                                 dtype=jnp.int32)

    scores, lscores = forward(word_ids, pos_ids, params)
    jax.block_until_ready((scores, lscores))
    assert scores.shape == (T, T) and lscores.shape == (T, T, n_rels)
    assert bool(jnp.all(jnp.isfinite(scores))) and bool(jnp.all(jnp.isfinite(lscores)))

    ref_scores, ref_lscores = _reference_forward(word_ids, pos_ids, params)
    err_s = float(jnp.max(jnp.abs(scores - ref_scores)))
    err_l = float(jnp.max(jnp.abs(lscores - ref_lscores)))
    assert err_s < 5e-2 and err_l < 5e-2, ("mismatch vs reference", err_s, err_l)

    print("KERNEL_OK")
</pallas_src>

<mosaic_0001>
module attributes {stable_mosaic.version = 11 : i64} {
  func.func @fused_parser_kernel(%arg0: memref<8x48xf32, #tpu.memory_space<vmem>>, %arg1: memref<48x128xf32, #tpu.memory_space<vmem>>, %arg2: memref<32x128xf32, #tpu.memory_space<vmem>>, %arg3: memref<1x128xf32, #tpu.memory_space<vmem>>, %arg4: memref<48x128xf32, #tpu.memory_space<vmem>>, %arg5: memref<32x128xf32, #tpu.memory_space<vmem>>, %arg6: memref<1x128xf32, #tpu.memory_space<vmem>>, %arg7: memref<64x128xf32, #tpu.memory_space<vmem>>, %arg8: memref<32x128xf32, #tpu.memory_space<vmem>>, %arg9: memref<1x128xf32, #tpu.memory_space<vmem>>, %arg10: memref<64x128xf32, #tpu.memory_space<vmem>>, %arg11: memref<32x128xf32, #tpu.memory_space<vmem>>, %arg12: memref<1x128xf32, #tpu.memory_space<vmem>>, %arg13: memref<64x256xf32, #tpu.memory_space<vmem>>, %arg14: memref<128x128xf32, #tpu.memory_space<vmem>>, %arg15: memref<1x128xf32, #tpu.memory_space<vmem>>, %arg16: memref<2xf32, #tpu.memory_space<smem>>, %arg17: memref<64x128xf32, #tpu.memory_space<vmem>>, %arg18: memref<8x64xf32, #tpu.memory_space<vmem>>, %arg19: memref<8x64xf32, #tpu.memory_space<vmem>>) attributes {dimension_semantics = [], scalar_prefetch = 0 : i64, scratch_operands = 2 : i64, tpu.core_type = #tpu.core_type<tc>} {
    %c0 = arith.constant 0 : index
    %c0_0 = arith.constant 0 : index
    %0 = vector.load %arg0[%c0, %c0_0] : memref<8x48xf32, #tpu.memory_space<vmem>>, vector<8x48xf32>
    %c0_1 = arith.constant 0 : index
    %c0_2 = arith.constant 0 : index
    %1 = vector.load %arg1[%c0_1, %c0_2] : memref<48x128xf32, #tpu.memory_space<vmem>>, vector<48x128xf32>
    %c0_3 = arith.constant 0 : index
    %c0_4 = arith.constant 0 : index
    %2 = vector.load %arg2[%c0_3, %c0_4] : memref<32x128xf32, #tpu.memory_space<vmem>>, vector<32x128xf32>
    %c0_5 = arith.constant 0 : index
    %c0_6 = arith.constant 0 : index
    %3 = vector.load %arg3[%c0_5, %c0_6] : memref<1x128xf32, #tpu.memory_space<vmem>>, vector<1x128xf32>
    %c0_7 = arith.constant 0 : index
    %c0_8 = arith.constant 0 : index
    %4 = vector.load %arg4[%c0_7, %c0_8] : memref<48x128xf32, #tpu.memory_space<vmem>>, vector<48x128xf32>
    %c0_9 = arith.constant 0 : index
    %c0_10 = arith.constant 0 : index
    %5 = vector.load %arg5[%c0_9, %c0_10] : memref<32x128xf32, #tpu.memory_space<vmem>>, vector<32x128xf32>
    %c0_11 = arith.constant 0 : index
    %c0_12 = arith.constant 0 : index
    %6 = vector.load %arg6[%c0_11, %c0_12] : memref<1x128xf32, #tpu.memory_space<vmem>>, vector<1x128xf32>
    %cst = arith.constant dense<0.000000e+00> : vector<8x128xf32>
    %7 = tpu.matmul %0, %1, %cst {dimension_numbers = #tpu.dot_dimension_numbers<[1], [0], [0], [1], [0, 0, 1, 1], [], []>} : vector<8x48xf32>, vector<48x128xf32>, vector<8x128xf32> -> vector<8x128xf32>
    %8 = vector.broadcast %3 : vector<1x128xf32> to vector<8x128xf32>
    %9 = arith.addf %7, %8 : vector<8x128xf32>
    %cst_13 = arith.constant dense<0.000000e+00> : vector<8x128xf32>
    %10 = tpu.matmul %0, %4, %cst_13 {dimension_numbers = #tpu.dot_dimension_numbers<[1], [0], [0], [1], [0, 0, 1, 1], [], []>} : vector<8x48xf32>, vector<48x128xf32>, vector<8x128xf32> -> vector<8x128xf32>
    %11 = vector.broadcast %6 : vector<1x128xf32> to vector<8x128xf32>
    %12 = arith.addf %10, %11 : vector<8x128xf32>
    %cst_14 = arith.constant 0.000000e+00 : f32
    %13 = vector.broadcast %cst_14 : f32 to vector<1x32xf32>
    %cst_15 = arith.constant 0.000000e+00 : f32
    %14 = vector.broadcast %cst_15 : f32 to vector<1x32xf32>
    %15 = vector.extract_strided_slice %9 {offsets = [0, 0], sizes = [1, 128], strides = [1, 1]} : vector<8x128xf32> to vector<1x128xf32>
    %cst_16 = arith.constant dense<0.000000e+00> : vector<1x128xf32>
    %16 = tpu.matmul %13, %2, %cst_16 {dimension_numbers = #tpu.dot_dimension_numbers<[1], [0], [0], [1], [0, 0, 1, 1], [], []>} : vector<1x32xf32>, vector<32x128xf32>, vector<1x128xf32> -> vector<1x128xf32>
    %17 = arith.addf %15, %16 : vector<1x128xf32>
    %18 = vector.extract_strided_slice %17 {offsets = [0, 0], sizes = [1, 32], strides = [1, 1]} : vector<1x128xf32> to vector<1x32xf32>
    %19 = arith.negf %18 : vector<1x32xf32>
    %20 = math.exp %19 : vector<1x32xf32>
    %cst_17 = arith.constant 1.000000e+00 : f32
    %21 = vector.broadcast %cst_17 : f32 to vector<1x32xf32>
    %22 = arith.addf %21, %20 : vector<1x32xf32>
    %23 = arith.divf %21, %22 : vector<1x32xf32>
    %24 = vector.extract_strided_slice %17 {offsets = [0, 32], sizes = [1, 32], strides = [1, 1]} : vector<1x128xf32> to vector<1x32xf32>
    %25 = arith.negf %24 : vector<1x32xf32>
    %26 = math.exp %25 : vector<1x32xf32>
    %cst_18 = arith.constant 1.000000e+00 : f32
    %27 = vector.broadcast %cst_18 : f32 to vector<1x32xf32>
    %28 = arith.addf %27, %26 : vector<1x32xf32>
    %29 = arith.divf %27, %28 : vector<1x32xf32>
    %30 = vector.extract_strided_slice %17 {offsets = [0, 64], sizes = [1, 32], strides = [1, 1]} : vector<1x128xf32> to vector<1x32xf32>
    %31 = math.tanh %30 : vector<1x32xf32>
    %32 = vector.extract_strided_slice %17 {offsets = [0, 96], sizes = [1, 32], strides = [1, 1]} : vector<1x128xf32> to vector<1x32xf32>
    %33 = arith.negf %32 : vector<1x32xf32>
    %34 = math.exp %33 : vector<1x32xf32>
    %cst_19 = arith.constant 1.000000e+00 : f32
    %35 = vector.broadcast %cst_19 : f32 to vector<1x32xf32>
    %36 = arith.addf %35, %34 : vector<1x32xf32>
    %37 = arith.divf %35, %36 : vector<1x32xf32>
    %38 = arith.mulf %29, %14 : vector<1x32xf32>
    %39 = arith.mulf %23, %31 : vector<1x32xf32>
    %40 = arith.addf %38, %39 : vector<1x32xf32>
    %41 = math.tanh %40 : vector<1x32xf32>
    %42 = arith.mulf %37, %41 : vector<1x32xf32>
    %c0_20 = arith.constant 0 : index
    %c32 = arith.constant 32 : index
    %43 = vector.load %arg18[%c0_20, %c32] : memref<8x64xf32, #tpu.memory_space<vmem>>, vector<1x32xf32>
    tpu.vector_store %arg18[%c0_20, %c32], %42 {strides = array<i32>} : memref<8x64xf32, #tpu.memory_space<vmem>>, vector<1x32xf32>,
    %44 = vector.extract_strided_slice %9 {offsets = [1, 0], sizes = [1, 128], strides = [1, 1]} : vector<8x128xf32> to vector<1x128xf32>
    %cst_21 = arith.constant dense<0.000000e+00> : vector<1x128xf32>
    %45 = tpu.matmul %42, %2, %cst_21 {dimension_numbers = #tpu.dot_dimension_numbers<[1], [0], [0], [1], [0, 0, 1, 1], [], []>} : vector<1x32xf32>, vector<32x128xf32>, vector<1x128xf32> -> vector<1x128xf32>
    %46 = arith.addf %44, %45 : vector<1x128xf32>
    %47 = vector.extract_strided_slice %46 {offsets = [0, 0], sizes = [1, 32], strides = [1, 1]} : vector<1x128xf32> to vector<1x32xf32>
    %48 = arith.negf %47 : vector<1x32xf32>
    %49 = math.exp %48 : vector<1x32xf32>
    %cst_22 = arith.constant 1.000000e+00 : f32
    %50 = vector.broadcast %cst_22 : f32 to vector<1x32xf32>
    %51 = arith.addf %50, %49 : vector<1x32xf32>
    %52 = arith.divf %50, %51 : vector<1x32xf32>
    %53 = vector.extract_strided_slice %46 {offsets = [0, 32], sizes = [1, 32], strides = [1, 1]} : vector<1x128xf32> to vector<1x32xf32>
    %54 = arith.negf %53 : vector<1x32xf32>
    %55 = math.exp %54 : vector<1x32xf32>
    %cst_23 = arith.constant 1.000000e+00 : f32
    %56 = vector.broadcast %cst_23 : f32 to vector<1x32xf32>
    %57 = arith.addf %56, %55 : vector<1x32xf32>
    %58 = arith.divf %56, %57 : vector<1x32xf32>
    %59 = vector.extract_strided_slice %46 {offsets = [0, 64], sizes = [1, 32], strides = [1, 1]} : vector<1x128xf32> to vector<1x32xf32>
    %60 = math.tanh %59 : vector<1x32xf32>
    %61 = vector.extract_strided_slice %46 {offsets = [0, 96], sizes = [1, 32], strides = [1, 1]} : vector<1x128xf32> to vector<1x32xf32>
    %62 = arith.negf %61 : vector<1x32xf32>
    %63 = math.exp %62 : vector<1x32xf32>
    %cst_24 = arith.constant 1.000000e+00 : f32
    %64 = vector.broadcast %cst_24 : f32 to vector<1x32xf32>
    %65 = arith.addf %64, %63 : vector<1x32xf32>
    %66 = arith.divf %64, %65 : vector<1x32xf32>
    %67 = arith.mulf %58, %40 : vector<1x32xf32>
    %68 = arith.mulf %52, %60 : vector<1x32xf32>
    %69 = arith.addf %67, %68 : vector<1x32xf32>
    %70 = math.tanh %69 : vector<1x32xf32>
    %71 = arith.mulf %66, %70 : vector<1x32xf32>
    %c1 = arith.constant 1 : index
    %c32_25 = arith.constant 32 : index
    %72 = vector.load %arg18[%c1, %c32_25] : memref<8x64xf32, #tpu.memory_space<vmem>>, vector<1x32xf32>
    tpu.vector_store %arg18[%c1, %c32_25], %71 {strides = array<i32>} : memref<8x64xf32, #tpu.memory_space<vmem>>, vector<1x32xf32>,
    %73 = vector.extract_strided_slice %9 {offsets = [2, 0], sizes = [1, 128], strides = [1, 1]} : vector<8x128xf32> to vector<1x128xf32>
    %cst_26 = arith.constant dense<0.000000e+00> : vector<1x128xf32>
    %74 = tpu.matmul %71, %2, %cst_26 {dimension_numbers = #tpu.dot_dimension_numbers<[1], [0], [0], [1], [0, 0, 1, 1], [], []>} : vector<1x32xf32>, vector<32x128xf32>, vector<1x128xf32> -> vector<1x128xf32>
    %75 = arith.addf %73, %74 : vector<1x128xf32>
    %76 = vector.extract_strided_slice %75 {offsets = [0, 0], sizes = [1, 32], strides = [1, 1]} : vector<1x128xf32> to vector<1x32xf32>
    %77 = arith.negf %76 : vector<1x32xf32>
    %78 = math.exp %77 : vector<1x32xf32>
    %cst_27 = arith.constant 1.000000e+00 : f32
    %79 = vector.broadcast %cst_27 : f32 to vector<1x32xf32>
    %80 = arith.addf %79, %78 : vector<1x32xf32>
    %81 = arith.divf %79, %80 : vector<1x32xf32>
    %82 = vector.extract_strided_slice %75 {offsets = [0, 32], sizes = [1, 32], strides = [1, 1]} : vector<1x128xf32> to vector<1x32xf32>
    %83 = arith.negf %82 : vector<1x32xf32>
    %84 = math.exp %83 : vector<1x32xf32>
    %cst_28 = arith.constant 1.000000e+00 : f32
    %85 = vector.broadcast %cst_28 : f32 to vector<1x32xf32>
    %86 = arith.addf %85, %84 : vector<1x32xf32>
    %87 = arith.divf %85, %86 : vector<1x32xf32>
    %88 = vector.extract_strided_slice %75 {offsets = [0, 64], sizes = [1, 32], strides = [1, 1]} : vector<1x128xf32> to vector<1x32xf32>
    %89 = math.tanh %88 : vector<1x32xf32>
    %90 = vector.extract_strided_slice %75 {offsets = [0, 96], sizes = [1, 32], strides = [1, 1]} : vector<1x128xf32> to vector<1x32xf32>
    %91 = arith.negf %90 : vector<1x32xf32>
    %92 = math.exp %91 : vector<1x32xf32>
    %cst_29 = arith.constant 1.000000e+00 : f32
    %93 = vector.broadcast %cst_29 : f32 to vector<1x32xf32>
    %94 = arith.addf %93, %92 : vector<1x32xf32>
    %95 = arith.divf %93, %94 : vector<1x32xf32>
    %96 = arith.mulf %87, %69 : vector<1x32xf32>
    %97 = arith.mulf %81, %89 : vector<1x32xf32>
    %98 = arith.addf %96, %97 : vector<1x32xf32>
    %99 = math.tanh %98 : vector<1x32xf32>
    %100 = arith.mulf %95, %99 : vector<1x32xf32>
    %c2 = arith.constant 2 : index
    %c32_30 = arith.constant 32 : index
    %101 = vector.load %arg18[%c2, %c32_30] : memref<8x64xf32, #tpu.memory_space<vmem>>, vector<1x32xf32>
    tpu.vector_store %arg18[%c2, %c32_30], %100 {strides = array<i32>} : memref<8x64xf32, #tpu.memory_space<vmem>>, vector<1x32xf32>,
    %102 = vector.extract_strided_slice %9 {offsets = [3, 0], sizes = [1, 128], strides = [1, 1]} : vector<8x128xf32> to vector<1x128xf32>
    %cst_31 = arith.constant dense<0.000000e+00> : vector<1x128xf32>
    %103 = tpu.matmul %100, %2, %cst_31 {dimension_numbers = #tpu.dot_dimension_numbers<[1], [0], [0], [1], [0, 0, 1, 1], [], []>} : vector<1x32xf32>, vector<32x128xf32>, vector<1x128xf32> -> vector<1x128xf32>
    %104 = arith.addf %102, %103 : vector<1x128xf32>
    %105 = vector.extract_strided_slice %104 {offsets = [0, 0], sizes = [1, 32], strides = [1, 1]} : vector<1x128xf32> to vector<1x32xf32>
    %106 = arith.negf %105 : vector<1x32xf32>
    %107 = math.exp %106 : vector<1x32xf32>
    %cst_32 = arith.constant 1.000000e+00 : f32
    %108 = vector.broadcast %cst_32 : f32 to vector<1x32xf32>
    %109 = arith.addf %108, %107 : vector<1x32xf32>
    %110 = arith.divf %108, %109 : vector<1x32xf32>
    %111 = vector.extract_strided_slice %104 {offsets = [0, 32], sizes = [1, 32], strides = [1, 1]} : vector<1x128xf32> to vector<1x32xf32>
    %112 = arith.negf %111 : vector<1x32xf32>
    %113 = math.exp %112 : vector<1x32xf32>
    %cst_33 = arith.constant 1.000000e+00 : f32
    %114 = vector.broadcast %cst_33 : f32 to vector<1x32xf32>
    %115 = arith.addf %114, %113 : vector<1x32xf32>
    %116 = arith.divf %114, %115 : vector<1x32xf32>
    %117 = vector.extract_strided_slice %104 {offsets = [0, 64], sizes = [1, 32], strides = [1, 1]} : vector<1x128xf32> to vector<1x32xf32>
    %118 = math.tanh %117 : vector<1x32xf32>
    %119 = vector.extract_strided_slice %104 {offsets = [0, 96], sizes = [1, 32], strides = [1, 1]} : vector<1x128xf32> to vector<1x32xf32>
    %120 = arith.negf %119 : vector<1x32xf32>
    %121 = math.exp %120 : vector<1x32xf32>
    %cst_34 = arith.constant 1.000000e+00 : f32
    %122 = vector.broadcast %cst_34 : f32 to vector<1x32xf32>
    %123 = arith.addf %122, %121 : vector<1x32xf32>
    %124 = arith.divf %122, %123 : vector<1x32xf32>
    %125 = arith.mulf %116, %98 : vector<1x32xf32>
    %126 = arith.mulf %110, %118 : vector<1x32xf32>
    %127 = arith.addf %125, %126 : vector<1x32xf32>
    %128 = math.tanh %127 : vector<1x32xf32>
    %129 = arith.mulf %124, %128 : vector<1x32xf32>
    %c3 = arith.constant 3 : index
    %c32_35 = arith.constant 32 : index
    %130 = vector.load %arg18[%c3, %c32_35] : memref<8x64xf32, #tpu.memory_space<vmem>>, vector<1x32xf32>
    tpu.vector_store %arg18[%c3, %c32_35], %129 {strides = array<i32>} : memref<8x64xf32, #tpu.memory_space<vmem>>, vector<1x32xf32>,
    %131 = vector.extract_strided_slice %9 {offsets = [4, 0], sizes = [1, 128], strides = [1, 1]} : vector<8x128xf32> to vector<1x128xf32>
    %cst_36 = arith.constant dense<0.000000e+00> : vector<1x128xf32>
    %132 = tpu.matmul %129, %2, %cst_36 {dimension_numbers = #tpu.dot_dimension_numbers<[1], [0], [0], [1], [0, 0, 1, 1], [], []>} : vector<1x32xf32>, vector<32x128xf32>, vector<1x128xf32> -> vector<1x128xf32>
    %133 = arith.addf %131, %132 : vector<1x128xf32>
    %134 = vector.extract_strided_slice %133 {offsets = [0, 0], sizes = [1, 32], strides = [1, 1]} : vector<1x128xf32> to vector<1x32xf32>
    %135 = arith.negf %134 : vector<1x32xf32>
    %136 = math.exp %135 : vector<1x32xf32>
    %cst_37 = arith.constant 1.000000e+00 : f32
    %137 = vector.broadcast %cst_37 : f32 to vector<1x32xf32>
    %138 = arith.addf %137, %136 : vector<1x32xf32>
    %139 = arith.divf %137, %138 : vector<1x32xf32>
    %140 = vector.extract_strided_slice %133 {offsets = [0, 32], sizes = [1, 32], strides = [1, 1]} : vector<1x128xf32> to vector<1x32xf32>
    %141 = arith.negf %140 : vector<1x32xf32>
    %142 = math.exp %141 : vector<1x32xf32>
    %cst_38 = arith.constant 1.000000e+00 : f32
    %143 = vector.broadcast %cst_38 : f32 to vector<1x32xf32>
    %144 = arith.addf %143, %142 : vector<1x32xf32>
    %145 = arith.divf %143, %144 : vector<1x32xf32>
    %146 = vector.extract_strided_slice %133 {offsets = [0, 64], sizes = [1, 32], strides = [1, 1]} : vector<1x128xf32> to vector<1x32xf32>
    %147 = math.tanh %146 : vector<1x32xf32>
    %148 = vector.extract_strided_slice %133 {offsets = [0, 96], sizes = [1, 32], strides = [1, 1]} : vector<1x128xf32> to vector<1x32xf32>
    %149 = arith.negf %148 : vector<1x32xf32>
    %150 = math.exp %149 : vector<1x32xf32>
    %cst_39 = arith.constant 1.000000e+00 : f32
    %151 = vector.broadcast %cst_39 : f32 to vector<1x32xf32>
    %152 = arith.addf %151, %150 : vector<1x32xf32>
    %153 = arith.divf %151, %152 : vector<1x32xf32>
    %154 = arith.mulf %145, %127 : vector<1x32xf32>
    %155 = arith.mulf %139, %147 : vector<1x32xf32>
    %156 = arith.addf %154, %155 : vector<1x32xf32>
    %157 = math.tanh %156 : vector<1x32xf32>
    %158 = arith.mulf %153, %157 : vector<1x32xf32>
    %c4 = arith.constant 4 : index
    %c32_40 = arith.constant 32 : index
    %159 = vector.load %arg18[%c4, %c32_40] : memref<8x64xf32, #tpu.memory_space<vmem>>, vector<1x32xf32>
    tpu.vector_store %arg18[%c4, %c32_40], %158 {strides = array<i32>} : memref<8x64xf32, #tpu.memory_space<vmem>>, vector<1x32xf32>,
    %160 = vector.extract_strided_slice %9 {offsets = [5, 0], sizes = [1, 128], strides = [1, 1]} : vector<8x128xf32> to vector<1x128xf32>
    %cst_41 = arith.constant dense<0.000000e+00> : vector<1x128xf32>
    %161 = tpu.matmul %158, %2, %cst_41 {dimension_numbers = #tpu.dot_dimension_numbers<[1], [0], [0], [1], [0, 0, 1, 1], [], []>} : vector<1x32xf32>, vector<32x128xf32>, vector<1x128xf32> -> vector<1x128xf32>
    %162 = arith.addf %160, %161 : vector<1x128xf32>
    %163 = vector.extract_strided_slice %162 {offsets = [0, 0], sizes = [1, 32], strides = [1, 1]} : vector<1x128xf32> to vector<1x32xf32>
    %164 = arith.negf %163 : vector<1x32xf32>
    %165 = math.exp %164 : vector<1x32xf32>
    %cst_42 = arith.constant 1.000000e+00 : f32
    %166 = vector.broadcast %cst_42 : f32 to vector<1x32xf32>
    %167 = arith.addf %166, %165 : vector<1x32xf32>
    %168 = arith.divf %166, %167 : vector<1x32xf32>
    %169 = vector.extract_strided_slice %162 {offsets = [0, 32], sizes = [1, 32], strides = [1, 1]} : vector<1x128xf32> to vector<1x32xf32>
    %170 = arith.negf %169 : vector<1x32xf32>
    %171 = math.exp %170 : vector<1x32xf32>
    %cst_43 = arith.constant 1.000000e+00 : f32
    %172 = vector.broadcast %cst_43 : f32 to vector<1x32xf32>
    %173 = arith.addf %172, %171 : vector<1x32xf32>
    %174 = arith.divf %172, %173 : vector<1x32xf32>
    %175 = vector.extract_strided_slice %162 {offsets = [0, 64], sizes = [1, 32], strides = [1, 1]} : vector<1x128xf32> to vector<1x32xf32>
    %176 = math.tanh %175 : vector<1x32xf32>
    %177 = vector.extract_strided_slice %162 {offsets = [0, 96], sizes = [1, 32], strides = [1, 1]} : vector<1x128xf32> to vector<1x32xf32>
    %178 = arith.negf %177 : vector<1x32xf32>
    %179 = math.exp %178 : vector<1x32xf32>
    %cst_44 = arith.constant 1.000000e+00 : f32
    %180 = vector.broadcast %cst_44 : f32 to vector<1x32xf32>
    %181 = arith.addf %180, %179 : vector<1x32xf32>
    %182 = arith.divf %180, %181 : vector<1x32xf32>
    %183 = arith.mulf %174, %156 : vector<1x32xf32>
    %184 = arith.mulf %168, %176 : vector<1x32xf32>
    %185 = arith.addf %183, %184 : vector<1x32xf32>
    %186 = math.tanh %185 : vector<1x32xf32>
    %187 = arith.mulf %182, %186 : vector<1x32xf32>
    %c5 = arith.constant 5 : index
    %c32_45 = arith.constant 32 : index
    %188 = vector.load %arg18[%c5, %c32_45] : memref<8x64xf32, #tpu.memory_space<vmem>>, vector<1x32xf32>
    tpu.vector_store %arg18[%c5, %c32_45], %187 {strides = array<i32>} : memref<8x64xf32, #tpu.memory_space<vmem>>, vector<1x32xf32>,
    %189 = vector.extract_strided_slice %9 {offsets = [6, 0], sizes = [1, 128], strides = [1, 1]} : vector<8x128xf32> to vector<1x128xf32>
    %cst_46 = arith.constant dense<0.000000e+00> : vector<1x128xf32>
    %190 = tpu.matmul %187, %2, %cst_46 {dimension_numbers = #tpu.dot_dimension_numbers<[1], [0], [0], [1], [0, 0, 1, 1], [], []>} : vector<1x32xf32>, vector<32x128xf32>, vector<1x128xf32> -> vector<1x128xf32>
    %191 = arith.addf %189, %190 : vector<1x128xf32>
    %192 = vector.extract_strided_slice %191 {offsets = [0, 0], sizes = [1, 32], strides = [1, 1]} : vector<1x128xf32> to vector<1x32xf32>
    %193 = arith.negf %192 : vector<1x32xf32>
    %194 = math.exp %193 : vector<1x32xf32>
    %cst_47 = arith.constant 1.000000e+00 : f32
    %195 = vector.broadcast %cst_47 : f32 to vector<1x32xf32>
    %196 = arith.addf %195, %194 : vector<1x32xf32>
    %197 = arith.divf %195, %196 : vector<1x32xf32>
    %198 = vector.extract_strided_slice %191 {offsets = [0, 32], sizes = [1, 32], strides = [1, 1]} : vector<1x128xf32> to vector<1x32xf32>
    %199 = arith.negf %198 : vector<1x32xf32>
    %200 = math.exp %199 : vector<1x32xf32>
    %cst_48 = arith.constant 1.000000e+00 : f32
    %201 = vector.broadcast %cst_48 : f32 to vector<1x32xf32>
    %202 = arith.addf %201, %200 : vector<1x32xf32>
    %203 = arith.divf %201, %202 : vector<1x32xf32>
    %204 = vector.extract_strided_slice %191 {offsets = [0, 64], sizes = [1, 32], strides = [1, 1]} : vector<1x128xf32> to vector<1x32xf32>
    %205 = math.tanh %204 : vector<1x32xf32>
    %206 = vector.extract_strided_slice %191 {offsets = [0, 96], sizes = [1, 32], strides = [1, 1]} : vector<1x128xf32> to vector<1x32xf32>
    %207 = arith.negf %206 : vector<1x32xf32>
    %208 = math.exp %207 : vector<1x32xf32>
    %cst_49 = arith.constant 1.000000e+00 : f32
    %209 = vector.broadcast %cst_49 : f32 to vector<1x32xf32>
    %210 = arith.addf %209, %208 : vector<1x32xf32>
    %211 = arith.divf %209, %210 : vector<1x32xf32>
    %212 = arith.mulf %203, %185 : vector<1x32xf32>
    %213 = arith.mulf %197, %205 : vector<1x32xf32>
    %214 = arith.addf %212, %213 : vector<1x32xf32>
    %215 = math.tanh %214 : vector<1x32xf32>
    %216 = arith.mulf %211, %215 : vector<1x32xf32>
    %c6 = arith.constant 6 : index
    %c32_50 = arith.constant 32 : index
    %217 = vector.load %arg18[%c6, %c32_50] : memref<8x64xf32, #tpu.memory_space<vmem>>, vector<1x32xf32>
    tpu.vector_store %arg18[%c6, %c32_50], %216 {strides = array<i32>} : memref<8x64xf32, #tpu.memory_space<vmem>>, vector<1x32xf32>,
    %218 = vector.extract_strided_slice %9 {offsets = [7, 0], sizes = [1, 128], strides = [1, 1]} : vector<8x128xf32> to vector<1x128xf32>
    %cst_51 = arith.constant dense<0.000000e+00> : vector<1x128xf32>
    %219 = tpu.matmul %216, %2, %cst_51 {dimension_numbers = #tpu.dot_dimension_numbers<[1], [0], [0], [1], [0, 0, 1, 1], [], []>} : vector<1x32xf32>, vector<32x128xf32>, vector<1x128xf32> -> vector<1x128xf32>
    %220 = arith.addf %218, %219 : vector<1x128xf32>
    %221 = vector.extract_strided_slice %220 {offsets = [0, 0], sizes = [1, 32], strides = [1, 1]} : vector<1x128xf32> to vector<1x32xf32>
    %222 = arith.negf %221 : vector<1x32xf32>
    %223 = math.exp %222 : vector<1x32xf32>
    %cst_52 = arith.constant 1.000000e+00 : f32
    %224 = vector.broadcast %cst_52 : f32 to vector<1x32xf32>
    %225 = arith.addf %224, %223 : vector<1x32xf32>
    %226 = arith.divf %224, %225 : vector<1x32xf32>
    %227 = vector.extract_strided_slice %220 {offsets = [0, 32], sizes = [1, 32], strides = [1, 1]} : vector<1x128xf32> to vector<1x32xf32>
    %228 = arith.negf %227 : vector<1x32xf32>
    %229 = math.exp %228 : vector<1x32xf32>
    %cst_53 = arith.constant 1.000000e+00 : f32
    %230 = vector.broadcast %cst_53 : f32 to vector<1x32xf32>
    %231 = arith.addf %230, %229 : vector<1x32xf32>
    %232 = arith.divf %230, %231 : vector<1x32xf32>
    %233 = vector.extract_strided_slice %220 {offsets = [0, 64], sizes = [1, 32], strides = [1, 1]} : vector<1x128xf32> to vector<1x32xf32>
    %234 = math.tanh %233 : vector<1x32xf32>
    %235 = vector.extract_strided_slice %220 {offsets = [0, 96], sizes = [1, 32], strides = [1, 1]} : vector<1x128xf32> to vector<1x32xf32>
    %236 = arith.negf %235 : vector<1x32xf32>
    %237 = math.exp %236 : vector<1x32xf32>
    %cst_54 = arith.constant 1.000000e+00 : f32
    %238 = vector.broadcast %cst_54 : f32 to vector<1x32xf32>
    %239 = arith.addf %238, %237 : vector<1x32xf32>
    %240 = arith.divf %238, %239 : vector<1x32xf32>
    %241 = arith.mulf %232, %214 : vector<1x32xf32>
    %242 = arith.mulf %226, %234 : vector<1x32xf32>
    %243 = arith.addf %241, %242 : vector<1x32xf32>
    %244 = math.tanh %243 : vector<1x32xf32>
    %245 = arith.mulf %240, %244 : vector<1x32xf32>
    %c7 = arith.constant 7 : index
    %c32_55 = arith.constant 32 : index
    %246 = vector.load %arg18[%c7, %c32_55] : memref<8x64xf32, #tpu.memory_space<vmem>>, vector<1x32xf32>
    tpu.vector_store %arg18[%c7, %c32_55], %245 {strides = array<i32>} : memref<8x64xf32, #tpu.memory_space<vmem>>, vector<1x32xf32>,
    %cst_56 = arith.constant 0.000000e+00 : f32
    %247 = vector.broadcast %cst_56 : f32 to vector<1x32xf32>
    %cst_57 = arith.constant 0.000000e+00 : f32
    %248 = vector.broadcast %cst_57 : f32 to vector<1x32xf32>
    %249 = vector.extract_strided_slice %12 {offsets = [7, 0], sizes = [1, 128], strides = [1, 1]} : vector<8x128xf32> to vector<1x128xf32>
    %cst_58 = arith.constant dense<0.000000e+00> : vector<1x128xf32>
    %250 = tpu.matmul %247, %5, %cst_58 {dimension_numbers = #tpu.dot_dimension_numbers<[1], [0], [0], [1], [0, 0, 1, 1], [], []>} : vector<1x32xf32>, vector<32x128xf32>, vector<1x128xf32> -> vector<1x128xf32>
    %251 = arith.addf %249, %250 : vector<1x128xf32>
    %252 = vector.extract_strided_slice %251 {offsets = [0, 0], sizes = [1, 32], strides = [1, 1]} : vector<1x128xf32> to vector<1x32xf32>
    %253 = arith.negf %252 : vector<1x32xf32>
    %254 = math.exp %253 : vector<1x32xf32>
    %cst_59 = arith.constant 1.000000e+00 : f32
    %255 = vector.broadcast %cst_59 : f32 to vector<1x32xf32>
    %256 = arith.addf %255, %254 : vector<1x32xf32>
    %257 = arith.divf %255, %256 : vector<1x32xf32>
    %258 = vector.extract_strided_slice %251 {offsets = [0, 32], sizes = [1, 32], strides = [1, 1]} : vector<1x128xf32> to vector<1x32xf32>
    %259 = arith.negf %258 : vector<1x32xf32>
    %260 = math.exp %259 : vector<1x32xf32>
    %cst_60 = arith.constant 1.000000e+00 : f32
    %261 = vector.broadcast %cst_60 : f32 to vector<1x32xf32>
    %262 = arith.addf %261, %260 : vector<1x32xf32>
    %263 = arith.divf %261, %262 : vector<1x32xf32>
    %264 = vector.extract_strided_slice %251 {offsets = [0, 64], sizes = [1, 32], strides = [1, 1]} : vector<1x128xf32> to vector<1x32xf32>
    %265 = math.tanh %264 : vector<1x32xf32>
    %266 = vector.extract_strided_slice %251 {offsets = [0, 96], sizes = [1, 32], strides = [1, 1]} : vector<1x128xf32> to vector<1x32xf32>
    %267 = arith.negf %266 : vector<1x32xf32>
    %268 = math.exp %267 : vector<1x32xf32>
    %cst_61 = arith.constant 1.000000e+00 : f32
    %269 = vector.broadcast %cst_61 : f32 to vector<1x32xf32>
    %270 = arith.addf %269, %268 : vector<1x32xf32>
    %271 = arith.divf %269, %270 : vector<1x32xf32>
    %272 = arith.mulf %263, %248 : vector<1x32xf32>
    %273 = arith.mulf %257, %265 : vector<1x32xf32>
    %274 = arith.addf %272, %273 : vector<1x32xf32>
    %275 = math.tanh %274 : vector<1x32xf32>
    %276 = arith.mulf %271, %275 : vector<1x32xf32>
    %c7_62 = arith.constant 7 : index
    %c0_63 = arith.constant 0 : index
    %277 = vector.load %arg18[%c7_62, %c0_63] : memref<8x64xf32, #tpu.memory_space<vmem>>, vector<1x32xf32>
    tpu.vector_store %arg18[%c7_62, %c0_63], %276 {strides = array<i32>} : memref<8x64xf32, #tpu.memory_space<vmem>>, vector<1x32xf32>,
    %278 = vector.extract_strided_slice %12 {offsets = [6, 0], sizes = [1, 128], strides = [1, 1]} : vector<8x128xf32> to vector<1x128xf32>
    %cst_64 = arith.constant dense<0.000000e+00> : vector<1x128xf32>
    %279 = tpu.matmul %276, %5, %cst_64 {dimension_numbers = #tpu.dot_dimension_numbers<[1], [0], [0], [1], [0, 0, 1, 1], [], []>} : vector<1x32xf32>, vector<32x128xf32>, vector<1x128xf32> -> vector<1x128xf32>
    %280 = arith.addf %278, %279 : vector<1x128xf32>
    %281 = vector.extract_strided_slice %280 {offsets = [0, 0], sizes = [1, 32], strides = [1, 1]} : vector<1x128xf32> to vector<1x32xf32>
    %282 = arith.negf %281 : vector<1x32xf32>
    %283 = math.exp %282 : vector<1x32xf32>
    %cst_65 = arith.constant 1.000000e+00 : f32
    %284 = vector.broadcast %cst_65 : f32 to vector<1x32xf32>
    %285 = arith.addf %284, %283 : vector<1x32xf32>
    %286 = arith.divf %284, %285 : vector<1x32xf32>
    %287 = vector.extract_strided_slice %280 {offsets = [0, 32], sizes = [1, 32], strides = [1, 1]} : vector<1x128xf32> to vector<1x32xf32>
    %288 = arith.negf %287 : vector<1x32xf32>
    %289 = math.exp %288 : vector<1x32xf32>
    %cst_66 = arith.constant 1.000000e+00 : f32
    %290 = vector.broadcast %cst_66 : f32 to vector<1x32xf32>
    %291 = arith.addf %290, %289 : vector<1x32xf32>
    %292 = arith.divf %290, %291 : vector<1x32xf32>
    %293 = vector.extract_strided_slice %280 {offsets = [0, 64], sizes = [1, 32], strides = [1, 1]} : vector<1x128xf32> to vector<1x32xf32>
    %294 = math.tanh %293 : vector<1x32xf32>
    %295 = vector.extract_strided_slice %280 {offsets = [0, 96], sizes = [1, 32], strides = [1, 1]} : vector<1x128xf32> to vector<1x32xf32>
    %296 = arith.negf %295 : vector<1x32xf32>
    %297 = math.exp %296 : vector<1x32xf32>
    %cst_67 = arith.constant 1.000000e+00 : f32
    %298 = vector.broadcast %cst_67 : f32 to vector<1x32xf32>
    %299 = arith.addf %298, %297 : vector<1x32xf32>
    %300 = arith.divf %298, %299 : vector<1x32xf32>
    %301 = arith.mulf %292, %274 : vector<1x32xf32>
    %302 = arith.mulf %286, %294 : vector<1x32xf32>
    %303 = arith.addf %301, %302 : vector<1x32xf32>
    %304 = math.tanh %303 : vector<1x32xf32>
    %305 = arith.mulf %300, %304 : vector<1x32xf32>
    %c6_68 = arith.constant 6 : index
    %c0_69 = arith.constant 0 : index
    %306 = vector.load %arg18[%c6_68, %c0_69] : memref<8x64xf32, #tpu.memory_space<vmem>>, vector<1x32xf32>
    tpu.vector_store %arg18[%c6_68, %c0_69], %305 {strides = array<i32>} : memref<8x64xf32, #tpu.memory_space<vmem>>, vector<1x32xf32>,
    %307 = vector.extract_strided_slice %12 {offsets = [5, 0], sizes = [1, 128], strides = [1, 1]} : vector<8x128xf32> to vector<1x128xf32>
    %cst_70 = arith.constant dense<0.000000e+00> : vector<1x128xf32>
    %308 = tpu.matmul %305, %5, %cst_70 {dimension_numbers = #tpu.dot_dimension_numbers<[1], [0], [0], [1], [0, 0, 1, 1], [], []>} : vector<1x32xf32>, vector<32x128xf32>, vector<1x128xf32> -> vector<1x128xf32>
    %309 = arith.addf %307, %308 : vector<1x128xf32>
    %310 = vector.extract_strided_slice %309 {offsets = [0, 0], sizes = [1, 32], strides = [1, 1]} : vector<1x128xf32> to vector<1x32xf32>
    %311 = arith.negf %310 : vector<1x32xf32>
    %312 = math.exp %311 : vector<1x32xf32>
    %cst_71 = arith.constant 1.000000e+00 : f32
    %313 = vector.broadcast %cst_71 : f32 to vector<1x32xf32>
    %314 = arith.addf %313, %312 : vector<1x32xf32>
    %315 = arith.divf %313, %314 : vector<1x32xf32>
    %316 = vector.extract_strided_slice %309 {offsets = [0, 32], sizes = [1, 32], strides = [1, 1]} : vector<1x128xf32> to vector<1x32xf32>
    %317 = arith.negf %316 : vector<1x32xf32>
    %318 = math.exp %317 : vector<1x32xf32>
    %cst_72 = arith.constant 1.000000e+00 : f32
    %319 = vector.broadcast %cst_72 : f32 to vector<1x32xf32>
    %320 = arith.addf %319, %318 : vector<1x32xf32>
    %321 = arith.divf %319, %320 : vector<1x32xf32>
    %322 = vector.extract_strided_slice %309 {offsets = [0, 64], sizes = [1, 32], strides = [1, 1]} : vector<1x128xf32> to vector<1x32xf32>
    %323 = math.tanh %322 : vector<1x32xf32>
    %324 = vector.extract_strided_slice %309 {offsets = [0, 96], sizes = [1, 32], strides = [1, 1]} : vector<1x128xf32> to vector<1x32xf32>
    %325 = arith.negf %324 : vector<1x32xf32>
    %326 = math.exp %325 : vector<1x32xf32>
    %cst_73 = arith.constant 1.000000e+00 : f32
    %327 = vector.broadcast %cst_73 : f32 to vector<1x32xf32>
    %328 = arith.addf %327, %326 : vector<1x32xf32>
    %329 = arith.divf %327, %328 : vector<1x32xf32>
    %330 = arith.mulf %321, %303 : vector<1x32xf32>
    %331 = arith.mulf %315, %323 : vector<1x32xf32>
    %332 = arith.addf %330, %331 : vector<1x32xf32>
    %333 = math.tanh %332 : vector<1x32xf32>
    %334 = arith.mulf %329, %333 : vector<1x32xf32>
    %c5_74 = arith.constant 5 : index
    %c0_75 = arith.constant 0 : index
    %335 = vector.load %arg18[%c5_74, %c0_75] : memref<8x64xf32, #tpu.memory_space<vmem>>, vector<1x32xf32>
    tpu.vector_store %arg18[%c5_74, %c0_75], %334 {strides = array<i32>} : memref<8x64xf32, #tpu.memory_space<vmem>>, vector<1x32xf32>,
    %336 = vector.extract_strided_slice %12 {offsets = [4, 0], sizes = [1, 128], strides = [1, 1]} : vector<8x128xf32> to vector<1x128xf32>
    %cst_76 = arith.constant dense<0.000000e+00> : vector<1x128xf32>
    %337 = tpu.matmul %334, %5, %cst_76 {dimension_numbers = #tpu.dot_dimension_numbers<[1], [0], [0], [1], [0, 0, 1, 1], [], []>} : vector<1x32xf32>, vector<32x128xf32>, vector<1x128xf32> -> vector<1x128xf32>
    %338 = arith.addf %336, %337 : vector<1x128xf32>
    %339 = vector.extract_strided_slice %338 {offsets = [0, 0], sizes = [1, 32], strides = [1, 1]} : vector<1x128xf32> to vector<1x32xf32>
    %340 = arith.negf %339 : vector<1x32xf32>
    %341 = math.exp %340 : vector<1x32xf32>
    %cst_77 = arith.constant 1.000000e+00 : f32
    %342 = vector.broadcast %cst_77 : f32 to vector<1x32xf32>
    %343 = arith.addf %342, %341 : vector<1x32xf32>
    %344 = arith.divf %342, %343 : vector<1x32xf32>
    %345 = vector.extract_strided_slice %338 {offsets = [0, 32], sizes = [1, 32], strides = [1, 1]} : vector<1x128xf32> to vector<1x32xf32>
    %346 = arith.negf %345 : vector<1x32xf32>
    %347 = math.exp %346 : vector<1x32xf32>
    %cst_78 = arith.constant 1.000000e+00 : f32
    %348 = vector.broadcast %cst_78 : f32 to vector<1x32xf32>
    %349 = arith.addf %348, %347 : vector<1x32xf32>
    %350 = arith.divf %348, %349 : vector<1x32xf32>
    %351 = vector.extract_strided_slice %338 {offsets = [0, 64], sizes = [1, 32], strides = [1, 1]} : vector<1x128xf32> to vector<1x32xf32>
    %352 = math.tanh %351 : vector<1x32xf32>
    %353 = vector.extract_strided_slice %338 {offsets = [0, 96], sizes = [1, 32], strides = [1, 1]} : vector<1x128xf32> to vector<1x32xf32>
    %354 = arith.negf %353 : vector<1x32xf32>
    %355 = math.exp %354 : vector<1x32xf32>
    %cst_79 = arith.constant 1.000000e+00 : f32
    %356 = vector.broadcast %cst_79 : f32 to vector<1x32xf32>
    %357 = arith.addf %356, %355 : vector<1x32xf32>
    %358 = arith.divf %356, %357 : vector<1x32xf32>
    %359 = arith.mulf %350, %332 : vector<1x32xf32>
    %360 = arith.mulf %344, %352 : vector<1x32xf32>
    %361 = arith.addf %359, %360 : vector<1x32xf32>
    %362 = math.tanh %361 : vector<1x32xf32>
    %363 = arith.mulf %358, %362 : vector<1x32xf32>
    %c4_80 = arith.constant 4 : index
    %c0_81 = arith.constant 0 : index
    %364 = vector.load %arg18[%c4_80, %c0_81] : memref<8x64xf32, #tpu.memory_space<vmem>>, vector<1x32xf32>
    tpu.vector_store %arg18[%c4_80, %c0_81], %363 {strides = array<i32>} : memref<8x64xf32, #tpu.memory_space<vmem>>, vector<1x32xf32>,
    %365 = vector.extract_strided_slice %12 {offsets = [3, 0], sizes = [1, 128], strides = [1, 1]} : vector<8x128xf32> to vector<1x128xf32>
    %cst_82 = arith.constant dense<0.000000e+00> : vector<1x128xf32>
    %366 = tpu.matmul %363, %5, %cst_82 {dimension_numbers = #tpu.dot_dimension_numbers<[1], [0], [0], [1], [0, 0, 1, 1], [], []>} : vector<1x32xf32>, vector<32x128xf32>, vector<1x128xf32> -> vector<1x128xf32>
    %367 = arith.addf %365, %366 : vector<1x128xf32>
    %368 = vector.extract_strided_slice %367 {offsets = [0, 0], sizes = [1, 32], strides = [1, 1]} : vector<1x128xf32> to vector<1x32xf32>
    %369 = arith.negf %368 : vector<1x32xf32>
    %370 = math.exp %369 : vector<1x32xf32>
    %cst_83 = arith.constant 1.000000e+00 : f32
    %371 = vector.broadcast %cst_83 : f32 to vector<1x32xf32>
    %372 = arith.addf %371, %370 : vector<1x32xf32>
    %373 = arith.divf %371, %372 : vector<1x32xf32>
    %374 = vector.extract_strided_slice %367 {offsets = [0, 32], sizes = [1, 32], strides = [1, 1]} : vector<1x128xf32> to vector<1x32xf32>
    %375 = arith.negf %374 : vector<1x32xf32>
    %376 = math.exp %375 : vector<1x32xf32>
    %cst_84 = arith.constant 1.000000e+00 : f32
    %377 = vector.broadcast %cst_84 : f32 to vector<1x32xf32>
    %378 = arith.addf %377, %376 : vector<1x32xf32>
    %379 = arith.divf %377, %378 : vector<1x32xf32>
    %380 = vector.extract_strided_slice %367 {offsets = [0, 64], sizes = [1, 32], strides = [1, 1]} : vector<1x128xf32> to vector<1x32xf32>
    %381 = math.tanh %380 : vector<1x32xf32>
    %382 = vector.extract_strided_slice %367 {offsets = [0, 96], sizes = [1, 32], strides = [1, 1]} : vector<1x128xf32> to vector<1x32xf32>
    %383 = arith.negf %382 : vector<1x32xf32>
    %384 = math.exp %383 : vector<1x32xf32>
    %cst_85 = arith.constant 1.000000e+00 : f32
    %385 = vector.broadcast %cst_85 : f32 to vector<1x32xf32>
    %386 = arith.addf %385, %384 : vector<1x32xf32>
    %387 = arith.divf %385, %386 : vector<1x32xf32>
    %388 = arith.mulf %379, %361 : vector<1x32xf32>
    %389 = arith.mulf %373, %381 : vector<1x32xf32>
    %390 = arith.addf %388, %389 : vector<1x32xf32>
    %391 = math.tanh %390 : vector<1x32xf32>
    %392 = arith.mulf %387, %391 : vector<1x32xf32>
    %c3_86 = arith.constant 3 : index
    %c0_87 = arith.constant 0 : index
    %393 = vector.load %arg18[%c3_86, %c0_87] : memref<8x64xf32, #tpu.memory_space<vmem>>, vector<1x32xf32>
    tpu.vector_store %arg18[%c3_86, %c0_87], %392 {strides = array<i32>} : memref<8x64xf32, #tpu.memory_space<vmem>>, vector<1x32xf32>,
    %394 = vector.extract_strided_slice %12 {offsets = [2, 0], sizes = [1, 128], strides = [1, 1]} : vector<8x128xf32> to vector<1x128xf32>
    %cst_88 = arith.constant dense<0.000000e+00> : vector<1x128xf32>
    %395 = tpu.matmul %392, %5, %cst_88 {dimension_numbers = #tpu.dot_dimension_numbers<[1], [0], [0], [1], [0, 0, 1, 1], [], []>} : vector<1x32xf32>, vector<32x128xf32>, vector<1x128xf32> -> vector<1x128xf32>
    %396 = arith.addf %394, %395 : vector<1x128xf32>
    %397 = vector.extract_strided_slice %396 {offsets = [0, 0], sizes = [1, 32], strides = [1, 1]} : vector<1x128xf32> to vector<1x32xf32>
    %398 = arith.negf %397 : vector<1x32xf32>
    %399 = math.exp %398 : vector<1x32xf32>
    %cst_89 = arith.constant 1.000000e+00 : f32
    %400 = vector.broadcast %cst_89 : f32 to vector<1x32xf32>
    %401 = arith.addf %400, %399 : vector<1x32xf32>
    %402 = arith.divf %400, %401 : vector<1x32xf32>
    %403 = vector.extract_strided_slice %396 {offsets = [0, 32], sizes = [1, 32], strides = [1, 1]} : vector<1x128xf32> to vector<1x32xf32>
    %404 = arith.negf %403 : vector<1x32xf32>
    %405 = math.exp %404 : vector<1x32xf32>
    %cst_90 = arith.constant 1.000000e+00 : f32
    %406 = vector.broadcast %cst_90 : f32 to vector<1x32xf32>
    %407 = arith.addf %406, %405 : vector<1x32xf32>
    %408 = arith.divf %406, %407 : vector<1x32xf32>
    %409 = vector.extract_strided_slice %396 {offsets = [0, 64], sizes = [1, 32], strides = [1, 1]} : vector<1x128xf32> to vector<1x32xf32>
    %410 = math.tanh %409 : vector<1x32xf32>
    %411 = vector.extract_strided_slice %396 {offsets = [0, 96], sizes = [1, 32], strides = [1, 1]} : vector<1x128xf32> to vector<1x32xf32>
    %412 = arith.negf %411 : vector<1x32xf32>
    %413 = math.exp %412 : vector<1x32xf32>
    %cst_91 = arith.constant 1.000000e+00 : f32
    %414 = vector.broadcast %cst_91 : f32 to vector<1x32xf32>
    %415 = arith.addf %414, %413 : vector<1x32xf32>
    %416 = arith.divf %414, %415 : vector<1x32xf32>
    %417 = arith.mulf %408, %390 : vector<1x32xf32>
    %418 = arith.mulf %402, %410 : vector<1x32xf32>
    %419 = arith.addf %417, %418 : vector<1x32xf32>
    %420 = math.tanh %419 : vector<1x32xf32>
    %421 = arith.mulf %416, %420 : vector<1x32xf32>
    %c2_92 = arith.constant 2 : index
    %c0_93 = arith.constant 0 : index
    %422 = vector.load %arg18[%c2_92, %c0_93] : memref<8x64xf32, #tpu.memory_space<vmem>>, vector<1x32xf32>
    tpu.vector_store %arg18[%c2_92, %c0_93], %421 {strides = array<i32>} : memref<8x64xf32, #tpu.memory_space<vmem>>, vector<1x32xf32>,
    %423 = vector.extract_strided_slice %12 {offsets = [1, 0], sizes = [1, 128], strides = [1, 1]} : vector<8x128xf32> to vector<1x128xf32>
    %cst_94 = arith.constant dense<0.000000e+00> : vector<1x128xf32>
    %424 = tpu.matmul %421, %5, %cst_94 {dimension_numbers = #tpu.dot_dimension_numbers<[1], [0], [0], [1], [0, 0, 1, 1], [], []>} : vector<1x32xf32>, vector<32x128xf32>, vector<1x128xf32> -> vector<1x128xf32>
    %425 = arith.addf %423, %424 : vector<1x128xf32>
    %426 = vector.extract_strided_slice %425 {offsets = [0, 0], sizes = [1, 32], strides = [1, 1]} : vector<1x128xf32> to vector<1x32xf32>
    %427 = arith.negf %426 : vector<1x32xf32>
    %428 = math.exp %427 : vector<1x32xf32>
    %cst_95 = arith.constant 1.000000e+00 : f32
    %429 = vector.broadcast %cst_95 : f32 to vector<1x32xf32>
    %430 = arith.addf %429, %428 : vector<1x32xf32>
    %431 = arith.divf %429, %430 : vector<1x32xf32>
    %432 = vector.extract_strided_slice %425 {offsets = [0, 32], sizes = [1, 32], strides = [1, 1]} : vector<1x128xf32> to vector<1x32xf32>
    %433 = arith.negf %432 : vector<1x32xf32>
    %434 = math.exp %433 : vector<1x32xf32>
    %cst_96 = arith.constant 1.000000e+00 : f32
    %435 = vector.broadcast %cst_96 : f32 to vector<1x32xf32>
    %436 = arith.addf %435, %434 : vector<1x32xf32>
    %437 = arith.divf %435, %436 : vector<1x32xf32>
    %438 = vector.extract_strided_slice %425 {offsets = [0, 64], sizes = [1, 32], strides = [1, 1]} : vector<1x128xf32> to vector<1x32xf32>
    %439 = math.tanh %438 : vector<1x32xf32>
    %440 = vector.extract_strided_slice %425 {offsets = [0, 96], sizes = [1, 32], strides = [1, 1]} : vector<1x128xf32> to vector<1x32xf32>
    %441 = arith.negf %440 : vector<1x32xf32>
    %442 = math.exp %441 : vector<1x32xf32>
    %cst_97 = arith.constant 1.000000e+00 : f32
    %443 = vector.broadcast %cst_97 : f32 to vector<1x32xf32>
    %444 = arith.addf %443, %442 : vector<1x32xf32>
    %445 = arith.divf %443, %444 : vector<1x32xf32>
    %446 = arith.mulf %437, %419 : vector<1x32xf32>
    %447 = arith.mulf %431, %439 : vector<1x32xf32>
    %448 = arith.addf %446, %447 : vector<1x32xf32>
    %449 = math.tanh %448 : vector<1x32xf32>
    %450 = arith.mulf %445, %449 : vector<1x32xf32>
    %c1_98 = arith.constant 1 : index
    %c0_99 = arith.constant 0 : index
    %451 = vector.load %arg18[%c1_98, %c0_99] : memref<8x64xf32, #tpu.memory_space<vmem>>, vector<1x32xf32>
    tpu.vector_store %arg18[%c1_98, %c0_99], %450 {strides = array<i32>} : memref<8x64xf32, #tpu.memory_space<vmem>>, vector<1x32xf32>,
    %452 = vector.extract_strided_slice %12 {offsets = [0, 0], sizes = [1, 128], strides = [1, 1]} : vector<8x128xf32> to vector<1x128xf32>
    %cst_100 = arith.constant dense<0.000000e+00> : vector<1x128xf32>
    %453 = tpu.matmul %450, %5, %cst_100 {dimension_numbers = #tpu.dot_dimension_numbers<[1], [0], [0], [1], [0, 0, 1, 1], [], []>} : vector<1x32xf32>, vector<32x128xf32>, vector<1x128xf32> -> vector<1x128xf32>
    %454 = arith.addf %452, %453 : vector<1x128xf32>
    %455 = vector.extract_strided_slice %454 {offsets = [0, 0], sizes = [1, 32], strides = [1, 1]} : vector<1x128xf32> to vector<1x32xf32>
    %456 = arith.negf %455 : vector<1x32xf32>
    %457 = math.exp %456 : vector<1x32xf32>
    %cst_101 = arith.constant 1.000000e+00 : f32
    %458 = vector.broadcast %cst_101 : f32 to vector<1x32xf32>
    %459 = arith.addf %458, %457 : vector<1x32xf32>
    %460 = arith.divf %458, %459 : vector<1x32xf32>
    %461 = vector.extract_strided_slice %454 {offsets = [0, 32], sizes = [1, 32], strides = [1, 1]} : vector<1x128xf32> to vector<1x32xf32>
    %462 = arith.negf %461 : vector<1x32xf32>
    %463 = math.exp %462 : vector<1x32xf32>
    %cst_102 = arith.constant 1.000000e+00 : f32
    %464 = vector.broadcast %cst_102 : f32 to vector<1x32xf32>
    %465 = arith.addf %464, %463 : vector<1x32xf32>
    %466 = arith.divf %464, %465 : vector<1x32xf32>
    %467 = vector.extract_strided_slice %454 {offsets = [0, 64], sizes = [1, 32], strides = [1, 1]} : vector<1x128xf32> to vector<1x32xf32>
    %468 = math.tanh %467 : vector<1x32xf32>
    %469 = vector.extract_strided_slice %454 {offsets = [0, 96], sizes = [1, 32], strides = [1, 1]} : vector<1x128xf32> to vector<1x32xf32>
    %470 = arith.negf %469 : vector<1x32xf32>
    %471 = math.exp %470 : vector<1x32xf32>
    %cst_103 = arith.constant 1.000000e+00 : f32
    %472 = vector.broadcast %cst_103 : f32 to vector<1x32xf32>
    %473 = arith.addf %472, %471 : vector<1x32xf32>
    %474 = arith.divf %472, %473 : vector<1x32xf32>
    %475 = arith.mulf %466, %448 : vector<1x32xf32>
    %476 = arith.mulf %460, %468 : vector<1x32xf32>
    %477 = arith.addf %475, %476 : vector<1x32xf32>
    %478 = math.tanh %477 : vector<1x32xf32>
    %479 = arith.mulf %474, %478 : vector<1x32xf32>
    %c0_104 = arith.constant 0 : index
    %c0_105 = arith.constant 0 : index
    %480 = vector.load %arg18[%c0_104, %c0_105] : memref<8x64xf32, #tpu.memory_space<vmem>>, vector<1x32xf32>
    tpu.vector_store %arg18[%c0_104, %c0_105], %479 {strides = array<i32>} : memref<8x64xf32, #tpu.memory_space<vmem>>, vector<1x32xf32>,
    %c0_106 = arith.constant 0 : index
    %c0_107 = arith.constant 0 : index
    %481 = vector.load %arg18[%c0_106, %c0_107] : memref<8x64xf32, #tpu.memory_space<vmem>>, vector<8x64xf32>
    %c0_108 = arith.constant 0 : index
    %c0_109 = arith.constant 0 : index
    %482 = vector.load %arg7[%c0_108, %c0_109] : memref<64x128xf32, #tpu.memory_space<vmem>>, vector<64x128xf32>
    %c0_110 = arith.constant 0 : index
    %c0_111 = arith.constant 0 : index
    %483 = vector.load %arg8[%c0_110, %c0_111] : memref<32x128xf32, #tpu.memory_space<vmem>>, vector<32x128xf32>
    %c0_112 = arith.constant 0 : index
    %c0_113 = arith.constant 0 : index
    %484 = vector.load %arg9[%c0_112, %c0_113] : memref<1x128xf32, #tpu.memory_space<vmem>>, vector<1x128xf32>
    %c0_114 = arith.constant 0 : index
    %c0_115 = arith.constant 0 : index
    %485 = vector.load %arg10[%c0_114, %c0_115] : memref<64x128xf32, #tpu.memory_space<vmem>>, vector<64x128xf32>
    %c0_116 = arith.constant 0 : index
    %c0_117 = arith.constant 0 : index
    %486 = vector.load %arg11[%c0_116, %c0_117] : memref<32x128xf32, #tpu.memory_space<vmem>>, vector<32x128xf32>
    %c0_118 = arith.constant 0 : index
    %c0_119 = arith.constant 0 : index
    %487 = vector.load %arg12[%c0_118, %c0_119] : memref<1x128xf32, #tpu.memory_space<vmem>>, vector<1x128xf32>
    %cst_120 = arith.constant dense<0.000000e+00> : vector<8x128xf32>
    %488 = tpu.matmul %481, %482, %cst_120 {dimension_numbers = #tpu.dot_dimension_numbers<[1], [0], [0], [1], [0, 0, 1, 1], [], []>} : vector<8x64xf32>, vector<64x128xf32>, vector<8x128xf32> -> vector<8x128xf32>
    %489 = vector.broadcast %484 : vector<1x128xf32> to vector<8x128xf32>
    %490 = arith.addf %488, %489 : vector<8x128xf32>
    %cst_121 = arith.constant dense<0.000000e+00> : vector<8x128xf32>
    %491 = tpu.matmul %481, %485, %cst_121 {dimension_numbers = #tpu.dot_dimension_numbers<[1], [0], [0], [1], [0, 0, 1, 1], [], []>} : vector<8x64xf32>, vector<64x128xf32>, vector<8x128xf32> -> vector<8x128xf32>
    %492 = vector.broadcast %487 : vector<1x128xf32> to vector<8x128xf32>
    %493 = arith.addf %491, %492 : vector<8x128xf32>
    %cst_122 = arith.constant 0.000000e+00 : f32
    %494 = vector.broadcast %cst_122 : f32 to vector<1x32xf32>
    %cst_123 = arith.constant 0.000000e+00 : f32
    %495 = vector.broadcast %cst_123 : f32 to vector<1x32xf32>
    %496 = vector.extract_strided_slice %490 {offsets = [0, 0], sizes = [1, 128], strides = [1, 1]} : vector<8x128xf32> to vector<1x128xf32>
    %cst_124 = arith.constant dense<0.000000e+00> : vector<1x128xf32>
    %497 = tpu.matmul %494, %483, %cst_124 {dimension_numbers = #tpu.dot_dimension_numbers<[1], [0], [0], [1], [0, 0, 1, 1], [], []>} : vector<1x32xf32>, vector<32x128xf32>, vector<1x128xf32> -> vector<1x128xf32>
    %498 = arith.addf %496, %497 : vector<1x128xf32>
    %499 = vector.extract_strided_slice %498 {offsets = [0, 0], sizes = [1, 32], strides = [1, 1]} : vector<1x128xf32> to vector<1x32xf32>
    %500 = arith.negf %499 : vector<1x32xf32>
    %501 = math.exp %500 : vector<1x32xf32>
    %cst_125 = arith.constant 1.000000e+00 : f32
    %502 = vector.broadcast %cst_125 : f32 to vector<1x32xf32>
    %503 = arith.addf %502, %501 : vector<1x32xf32>
    %504 = arith.divf %502, %503 : vector<1x32xf32>
    %505 = vector.extract_strided_slice %498 {offsets = [0, 32], sizes = [1, 32], strides = [1, 1]} : vector<1x128xf32> to vector<1x32xf32>
    %506 = arith.negf %505 : vector<1x32xf32>
    %507 = math.exp %506 : vector<1x32xf32>
    %cst_126 = arith.constant 1.000000e+00 : f32
    %508 = vector.broadcast %cst_126 : f32 to vector<1x32xf32>
    %509 = arith.addf %508, %507 : vector<1x32xf32>
    %510 = arith.divf %508, %509 : vector<1x32xf32>
    %511 = vector.extract_strided_slice %498 {offsets = [0, 64], sizes = [1, 32], strides = [1, 1]} : vector<1x128xf32> to vector<1x32xf32>
    %512 = math.tanh %511 : vector<1x32xf32>
    %513 = vector.extract_strided_slice %498 {offsets = [0, 96], sizes = [1, 32], strides = [1, 1]} : vector<1x128xf32> to vector<1x32xf32>
    %514 = arith.negf %513 : vector<1x32xf32>
    %515 = math.exp %514 : vector<1x32xf32>
    %cst_127 = arith.constant 1.000000e+00 : f32
    %516 = vector.broadcast %cst_127 : f32 to vector<1x32xf32>
    %517 = arith.addf %516, %515 : vector<1x32xf32>
    %518 = arith.divf %516, %517 : vector<1x32xf32>
    %519 = arith.mulf %510, %495 : vector<1x32xf32>
    %520 = arith.mulf %504, %512 : vector<1x32xf32>
    %521 = arith.addf %519, %520 : vector<1x32xf32>
    %522 = math.tanh %521 : vector<1x32xf32>
    %523 = arith.mulf %518, %522 : vector<1x32xf32>
    %c0_128 = arith.constant 0 : index
    %c32_129 = arith.constant 32 : index
    %524 = vector.load %arg19[%c0_128, %c32_129] : memref<8x64xf32, #tpu.memory_space<vmem>>, vector<1x32xf32>
    tpu.vector_store %arg19[%c0_128, %c32_129], %523 {strides = array<i32>} : memref<8x64xf32, #tpu.memory_space<vmem>>, vector<1x32xf32>,
    %525 = vector.extract_strided_slice %490 {offsets = [1, 0], sizes = [1, 128], strides = [1, 1]} : vector<8x128xf32> to vector<1x128xf32>
    %cst_130 = arith.constant dense<0.000000e+00> : vector<1x128xf32>
    %526 = tpu.matmul %523, %483, %cst_130 {dimension_numbers = #tpu.dot_dimension_numbers<[1], [0], [0], [1], [0, 0, 1, 1], [], []>} : vector<1x32xf32>, vector<32x128xf32>, vector<1x128xf32> -> vector<1x128xf32>
    %527 = arith.addf %525, %526 : vector<1x128xf32>
    %528 = vector.extract_strided_slice %527 {offsets = [0, 0], sizes = [1, 32], strides = [1, 1]} : vector<1x128xf32> to vector<1x32xf32>
    %529 = arith.negf %528 : vector<1x32xf32>
    %530 = math.exp %529 : vector<1x32xf32>
    %cst_131 = arith.constant 1.000000e+00 : f32
    %531 = vector.broadcast %cst_131 : f32 to vector<1x32xf32>
    %532 = arith.addf %531, %530 : vector<1x32xf32>
    %533 = arith.divf %531, %532 : vector<1x32xf32>
    %534 = vector.extract_strided_slice %527 {offsets = [0, 32], sizes = [1, 32], strides = [1, 1]} : vector<1x128xf32> to vector<1x32xf32>
    %535 = arith.negf %534 : vector<1x32xf32>
    %536 = math.exp %535 : vector<1x32xf32>
    %cst_132 = arith.constant 1.000000e+00 : f32
    %537 = vector.broadcast %cst_132 : f32 to vector<1x32xf32>
    %538 = arith.addf %537, %536 : vector<1x32xf32>
    %539 = arith.divf %537, %538 : vector<1x32xf32>
    %540 = vector.extract_strided_slice %527 {offsets = [0, 64], sizes = [1, 32], strides = [1, 1]} : vector<1x128xf32> to vector<1x32xf32>
    %541 = math.tanh %540 : vector<1x32xf32>
    %542 = vector.extract_strided_slice %527 {offsets = [0, 96], sizes = [1, 32], strides = [1, 1]} : vector<1x128xf32> to vector<1x32xf32>
    %543 = arith.negf %542 : vector<1x32xf32>
    %544 = math.exp %543 : vector<1x32xf32>
    %cst_133 = arith.constant 1.000000e+00 : f32
    %545 = vector.broadcast %cst_133 : f32 to vector<1x32xf32>
    %546 = arith.addf %545, %544 : vector<1x32xf32>
    %547 = arith.divf %545, %546 : vector<1x32xf32>
    %548 = arith.mulf %539, %521 : vector<1x32xf32>
    %549 = arith.mulf %533, %541 : vector<1x32xf32>
    %550 = arith.addf %548, %549 : vector<1x32xf32>
    %551 = math.tanh %550 : vector<1x32xf32>
    %552 = arith.mulf %547, %551 : vector<1x32xf32>
    %c1_134 = arith.constant 1 : index
    %c32_135 = arith.constant 32 : index
    %553 = vector.load %arg19[%c1_134, %c32_135] : memref<8x64xf32, #tpu.memory_space<vmem>>, vector<1x32xf32>
    tpu.vector_store %arg19[%c1_134, %c32_135], %552 {strides = array<i32>} : memref<8x64xf32, #tpu.memory_space<vmem>>, vector<1x32xf32>,
    %554 = vector.extract_strided_slice %490 {offsets = [2, 0], sizes = [1, 128], strides = [1, 1]} : vector<8x128xf32> to vector<1x128xf32>
    %cst_136 = arith.constant dense<0.000000e+00> : vector<1x128xf32>
    %555 = tpu.matmul %552, %483, %cst_136 {dimension_numbers = #tpu.dot_dimension_numbers<[1], [0], [0], [1], [0, 0, 1, 1], [], []>} : vector<1x32xf32>, vector<32x128xf32>, vector<1x128xf32> -> vector<1x128xf32>
    %556 = arith.addf %554, %555 : vector<1x128xf32>
    %557 = vector.extract_strided_slice %556 {offsets = [0, 0], sizes = [1, 32], strides = [1, 1]} : vector<1x128xf32> to vector<1x32xf32>
    %558 = arith.negf %557 : vector<1x32xf32>
    %559 = math.exp %558 : vector<1x32xf32>
    %cst_137 = arith.constant 1.000000e+00 : f32
    %560 = vector.broadcast %cst_137 : f32 to vector<1x32xf32>
    %561 = arith.addf %560, %559 : vector<1x32xf32>
    %562 = arith.divf %560, %561 : vector<1x32xf32>
    %563 = vector.extract_strided_slice %556 {offsets = [0, 32], sizes = [1, 32], strides = [1, 1]} : vector<1x128xf32> to vector<1x32xf32>
    %564 = arith.negf %563 : vector<1x32xf32>
    %565 = math.exp %564 : vector<1x32xf32>
    %cst_138 = arith.constant 1.000000e+00 : f32
    %566 = vector.broadcast %cst_138 : f32 to vector<1x32xf32>
    %567 = arith.addf %566, %565 : vector<1x32xf32>
    %568 = arith.divf %566, %567 : vector<1x32xf32>
    %569 = vector.extract_strided_slice %556 {offsets = [0, 64], sizes = [1, 32], strides = [1, 1]} : vector<1x128xf32> to vector<1x32xf32>
    %570 = math.tanh %569 : vector<1x32xf32>
    %571 = vector.extract_strided_slice %556 {offsets = [0, 96], sizes = [1, 32], strides = [1, 1]} : vector<1x128xf32> to vector<1x32xf32>
    %572 = arith.negf %571 : vector<1x32xf32>
    %573 = math.exp %572 : vector<1x32xf32>
    %cst_139 = arith.constant 1.000000e+00 : f32
    %574 = vector.broadcast %cst_139 : f32 to vector<1x32xf32>
    %575 = arith.addf %574, %573 : vector<1x32xf32>
    %576 = arith.divf %574, %575 : vector<1x32xf32>
    %577 = arith.mulf %568, %550 : vector<1x32xf32>
    %578 = arith.mulf %562, %570 : vector<1x32xf32>
    %579 = arith.addf %577, %578 : vector<1x32xf32>
    %580 = math.tanh %579 : vector<1x32xf32>
    %581 = arith.mulf %576, %580 : vector<1x32xf32>
    %c2_140 = arith.constant 2 : index
    %c32_141 = arith.constant 32 : index
    %582 = vector.load %arg19[%c2_140, %c32_141] : memref<8x64xf32, #tpu.memory_space<vmem>>, vector<1x32xf32>
    tpu.vector_store %arg19[%c2_140, %c32_141], %581 {strides = array<i32>} : memref<8x64xf32, #tpu.memory_space<vmem>>, vector<1x32xf32>,
    %583 = vector.extract_strided_slice %490 {offsets = [3, 0], sizes = [1, 128], strides = [1, 1]} : vector<8x128xf32> to vector<1x128xf32>
    %cst_142 = arith.constant dense<0.000000e+00> : vector<1x128xf32>
    %584 = tpu.matmul %581, %483, %cst_142 {dimension_numbers = #tpu.dot_dimension_numbers<[1], [0], [0], [1], [0, 0, 1, 1], [], []>} : vector<1x32xf32>, vector<32x128xf32>, vector<1x128xf32> -> vector<1x128xf32>
    %585 = arith.addf %583, %584 : vector<1x128xf32>
    %586 = vector.extract_strided_slice %585 {offsets = [0, 0], sizes = [1, 32], strides = [1, 1]} : vector<1x128xf32> to vector<1x32xf32>
    %587 = arith.negf %586 : vector<1x32xf32>
    %588 = math.exp %587 : vector<1x32xf32>
    %cst_143 = arith.constant 1.000000e+00 : f32
    %589 = vector.broadcast %cst_143 : f32 to vector<1x32xf32>
    %590 = arith.addf %589, %588 : vector<1x32xf32>
    %591 = arith.divf %589, %590 : vector<1x32xf32>
    %592 = vector.extract_strided_slice %585 {offsets = [0, 32], sizes = [1, 32], strides = [1, 1]} : vector<1x128xf32> to vector<1x32xf32>
    %593 = arith.negf %592 : vector<1x32xf32>
    %594 = math.exp %593 : vector<1x32xf32>
    %cst_144 = arith.constant 1.000000e+00 : f32
    %595 = vector.broadcast %cst_144 : f32 to vector<1x32xf32>
    %596 = arith.addf %595, %594 : vector<1x32xf32>
    %597 = arith.divf %595, %596 : vector<1x32xf32>
    %598 = vector.extract_strided_slice %585 {offsets = [0, 64], sizes = [1, 32], strides = [1, 1]} : vector<1x128xf32> to vector<1x32xf32>
    %599 = math.tanh %598 : vector<1x32xf32>
    %600 = vector.extract_strided_slice %585 {offsets = [0, 96], sizes = [1, 32], strides = [1, 1]} : vector<1x128xf32> to vector<1x32xf32>
    %601 = arith.negf %600 : vector<1x32xf32>
    %602 = math.exp %601 : vector<1x32xf32>
    %cst_145 = arith.constant 1.000000e+00 : f32
    %603 = vector.broadcast %cst_145 : f32 to vector<1x32xf32>
    %604 = arith.addf %603, %602 : vector<1x32xf32>
    %605 = arith.divf %603, %604 : vector<1x32xf32>
    %606 = arith.mulf %597, %579 : vector<1x32xf32>
    %607 = arith.mulf %591, %599 : vector<1x32xf32>
    %608 = arith.addf %606, %607 : vector<1x32xf32>
    %609 = math.tanh %608 : vector<1x32xf32>
    %610 = arith.mulf %605, %609 : vector<1x32xf32>
    %c3_146 = arith.constant 3 : index
    %c32_147 = arith.constant 32 : index
    %611 = vector.load %arg19[%c3_146, %c32_147] : memref<8x64xf32, #tpu.memory_space<vmem>>, vector<1x32xf32>
    tpu.vector_store %arg19[%c3_146, %c32_147], %610 {strides = array<i32>} : memref<8x64xf32, #tpu.memory_space<vmem>>, vector<1x32xf32>,
    %612 = vector.extract_strided_slice %490 {offsets = [4, 0], sizes = [1, 128], strides = [1, 1]} : vector<8x128xf32> to vector<1x128xf32>
    %cst_148 = arith.constant dense<0.000000e+00> : vector<1x128xf32>
    %613 = tpu.matmul %610, %483, %cst_148 {dimension_numbers = #tpu.dot_dimension_numbers<[1], [0], [0], [1], [0, 0, 1, 1], [], []>} : vector<1x32xf32>, vector<32x128xf32>, vector<1x128xf32> -> vector<1x128xf32>
    %614 = arith.addf %612, %613 : vector<1x128xf32>
    %615 = vector.extract_strided_slice %614 {offsets = [0, 0], sizes = [1, 32], strides = [1, 1]} : vector<1x128xf32> to vector<1x32xf32>
    %616 = arith.negf %615 : vector<1x32xf32>
    %617 = math.exp %616 : vector<1x32xf32>
    %cst_149 = arith.constant 1.000000e+00 : f32
    %618 = vector.broadcast %cst_149 : f32 to vector<1x32xf32>
    %619 = arith.addf %618, %617 : vector<1x32xf32>
    %620 = arith.divf %618, %619 : vector<1x32xf32>
    %621 = vector.extract_strided_slice %614 {offsets = [0, 32], sizes = [1, 32], strides = [1, 1]} : vector<1x128xf32> to vector<1x32xf32>
    %622 = arith.negf %621 : vector<1x32xf32>
    %623 = math.exp %622 : vector<1x32xf32>
    %cst_150 = arith.constant 1.000000e+00 : f32
    %624 = vector.broadcast %cst_150 : f32 to vector<1x32xf32>
    %625 = arith.addf %624, %623 : vector<1x32xf32>
    %626 = arith.divf %624, %625 : vector<1x32xf32>
    %627 = vector.extract_strided_slice %614 {offsets = [0, 64], sizes = [1, 32], strides = [1, 1]} : vector<1x128xf32> to vector<1x32xf32>
    %628 = math.tanh %627 : vector<1x32xf32>
    %629 = vector.extract_strided_slice %614 {offsets = [0, 96], sizes = [1, 32], strides = [1, 1]} : vector<1x128xf32> to vector<1x32xf32>
    %630 = arith.negf %629 : vector<1x32xf32>
    %631 = math.exp %630 : vector<1x32xf32>
    %cst_151 = arith.constant 1.000000e+00 : f32
    %632 = vector.broadcast %cst_151 : f32 to vector<1x32xf32>
    %633 = arith.addf %632, %631 : vector<1x32xf32>
    %634 = arith.divf %632, %633 : vector<1x32xf32>
    %635 = arith.mulf %626, %608 : vector<1x32xf32>
    %636 = arith.mulf %620, %628 : vector<1x32xf32>
    %637 = arith.addf %635, %636 : vector<1x32xf32>
    %638 = math.tanh %637 : vector<1x32xf32>
    %639 = arith.mulf %634, %638 : vector<1x32xf32>
    %c4_152 = arith.constant 4 : index
    %c32_153 = arith.constant 32 : index
    %640 = vector.load %arg19[%c4_152, %c32_153] : memref<8x64xf32, #tpu.memory_space<vmem>>, vector<1x32xf32>
    tpu.vector_store %arg19[%c4_152, %c32_153], %639 {strides = array<i32>} : memref<8x64xf32, #tpu.memory_space<vmem>>, vector<1x32xf32>,
    %641 = vector.extract_strided_slice %490 {offsets = [5, 0], sizes = [1, 128], strides = [1, 1]} : vector<8x128xf32> to vector<1x128xf32>
    %cst_154 = arith.constant dense<0.000000e+00> : vector<1x128xf32>
    %642 = tpu.matmul %639, %483, %cst_154 {dimension_numbers = #tpu.dot_dimension_numbers<[1], [0], [0], [1], [0, 0, 1, 1], [], []>} : vector<1x32xf32>, vector<32x128xf32>, vector<1x128xf32> -> vector<1x128xf32>
    %643 = arith.addf %641, %642 : vector<1x128xf32>
    %644 = vector.extract_strided_slice %643 {offsets = [0, 0], sizes = [1, 32], strides = [1, 1]} : vector<1x128xf32> to vector<1x32xf32>
    %645 = arith.negf %644 : vector<1x32xf32>
    %646 = math.exp %645 : vector<1x32xf32>
    %cst_155 = arith.constant 1.000000e+00 : f32
    %647 = vector.broadcast %cst_155 : f32 to vector<1x32xf32>
    %648 = arith.addf %647, %646 : vector<1x32xf32>
    %649 = arith.divf %647, %648 : vector<1x32xf32>
    %650 = vector.extract_strided_slice %643 {offsets = [0, 32], sizes = [1, 32], strides = [1, 1]} : vector<1x128xf32> to vector<1x32xf32>
    %651 = arith.negf %650 : vector<1x32xf32>
    %652 = math.exp %651 : vector<1x32xf32>
    %cst_156 = arith.constant 1.000000e+00 : f32
    %653 = vector.broadcast %cst_156 : f32 to vector<1x32xf32>
    %654 = arith.addf %653, %652 : vector<1x32xf32>
    %655 = arith.divf %653, %654 : vector<1x32xf32>
    %656 = vector.extract_strided_slice %643 {offsets = [0, 64], sizes = [1, 32], strides = [1, 1]} : vector<1x128xf32> to vector<1x32xf32>
    %657 = math.tanh %656 : vector<1x32xf32>
    %658 = vector.extract_strided_slice %643 {offsets = [0, 96], sizes = [1, 32], strides = [1, 1]} : vector<1x128xf32> to vector<1x32xf32>
    %659 = arith.negf %658 : vector<1x32xf32>
    %660 = math.exp %659 : vector<1x32xf32>
    %cst_157 = arith.constant 1.000000e+00 : f32
    %661 = vector.broadcast %cst_157 : f32 to vector<1x32xf32>
    %662 = arith.addf %661, %660 : vector<1x32xf32>
    %663 = arith.divf %661, %662 : vector<1x32xf32>
    %664 = arith.mulf %655, %637 : vector<1x32xf32>
    %665 = arith.mulf %649, %657 : vector<1x32xf32>
    %666 = arith.addf %664, %665 : vector<1x32xf32>
    %667 = math.tanh %666 : vector<1x32xf32>
    %668 = arith.mulf %663, %667 : vector<1x32xf32>
    %c5_158 = arith.constant 5 : index
    %c32_159 = arith.constant 32 : index
    %669 = vector.load %arg19[%c5_158, %c32_159] : memref<8x64xf32, #tpu.memory_space<vmem>>, vector<1x32xf32>
    tpu.vector_store %arg19[%c5_158, %c32_159], %668 {strides = array<i32>} : memref<8x64xf32, #tpu.memory_space<vmem>>, vector<1x32xf32>,
    %670 = vector.extract_strided_slice %490 {offsets = [6, 0], sizes = [1, 128], strides = [1, 1]} : vector<8x128xf32> to vector<1x128xf32>
    %cst_160 = arith.constant dense<0.000000e+00> : vector<1x128xf32>
    %671 = tpu.matmul %668, %483, %cst_160 {dimension_numbers = #tpu.dot_dimension_numbers<[1], [0], [0], [1], [0, 0, 1, 1], [], []>} : vector<1x32xf32>, vector<32x128xf32>, vector<1x128xf32> -> vector<1x128xf32>
    %672 = arith.addf %670, %671 : vector<1x128xf32>
    %673 = vector.extract_strided_slice %672 {offsets = [0, 0], sizes = [1, 32], strides = [1, 1]} : vector<1x128xf32> to vector<1x32xf32>
    %674 = arith.negf %673 : vector<1x32xf32>
    %675 = math.exp %674 : vector<1x32xf32>
    %cst_161 = arith.constant 1.000000e+00 : f32
    %676 = vector.broadcast %cst_161 : f32 to vector<1x32xf32>
    %677 = arith.addf %676, %675 : vector<1x32xf32>
    %678 = arith.divf %676, %677 : vector<1x32xf32>
    %679 = vector.extract_strided_slice %672 {offsets = [0, 32], sizes = [1, 32], strides = [1, 1]} : vector<1x128xf32> to vector<1x32xf32>
    %680 = arith.negf %679 : vector<1x32xf32>
    %681 = math.exp %680 : vector<1x32xf32>
    %cst_162 = arith.constant 1.000000e+00 : f32
    %682 = vector.broadcast %cst_162 : f32 to vector<1x32xf32>
    %683 = arith.addf %682, %681 : vector<1x32xf32>
    %684 = arith.divf %682, %683 : vector<1x32xf32>
    %685 = vector.extract_strided_slice %672 {offsets = [0, 64], sizes = [1, 32], strides = [1, 1]} : vector<1x128xf32> to vector<1x32xf32>
    %686 = math.tanh %685 : vector<1x32xf32>
    %687 = vector.extract_strided_slice %672 {offsets = [0, 96], sizes = [1, 32], strides = [1, 1]} : vector<1x128xf32> to vector<1x32xf32>
    %688 = arith.negf %687 : vector<1x32xf32>
    %689 = math.exp %688 : vector<1x32xf32>
    %cst_163 = arith.constant 1.000000e+00 : f32
    %690 = vector.broadcast %cst_163 : f32 to vector<1x32xf32>
    %691 = arith.addf %690, %689 : vector<1x32xf32>
    %692 = arith.divf %690, %691 : vector<1x32xf32>
    %693 = arith.mulf %684, %666 : vector<1x32xf32>
    %694 = arith.mulf %678, %686 : vector<1x32xf32>
    %695 = arith.addf %693, %694 : vector<1x32xf32>
    %696 = math.tanh %695 : vector<1x32xf32>
    %697 = arith.mulf %692, %696 : vector<1x32xf32>
    %c6_164 = arith.constant 6 : index
    %c32_165 = arith.constant 32 : index
    %698 = vector.load %arg19[%c6_164, %c32_165] : memref<8x64xf32, #tpu.memory_space<vmem>>, vector<1x32xf32>
    tpu.vector_store %arg19[%c6_164, %c32_165], %697 {strides = array<i32>} : memref<8x64xf32, #tpu.memory_space<vmem>>, vector<1x32xf32>,
    %699 = vector.extract_strided_slice %490 {offsets = [7, 0], sizes = [1, 128], strides = [1, 1]} : vector<8x128xf32> to vector<1x128xf32>
    %cst_166 = arith.constant dense<0.000000e+00> : vector<1x128xf32>
    %700 = tpu.matmul %697, %483, %cst_166 {dimension_numbers = #tpu.dot_dimension_numbers<[1], [0], [0], [1], [0, 0, 1, 1], [], []>} : vector<1x32xf32>, vector<32x128xf32>, vector<1x128xf32> -> vector<1x128xf32>
    %701 = arith.addf %699, %700 : vector<1x128xf32>
    %702 = vector.extract_strided_slice %701 {offsets = [0, 0], sizes = [1, 32], strides = [1, 1]} : vector<1x128xf32> to vector<1x32xf32>
    %703 = arith.negf %702 : vector<1x32xf32>
    %704 = math.exp %703 : vector<1x32xf32>
    %cst_167 = arith.constant 1.000000e+00 : f32
    %705 = vector.broadcast %cst_167 : f32 to vector<1x32xf32>
    %706 = arith.addf %705, %704 : vector<1x32xf32>
    %707 = arith.divf %705, %706 : vector<1x32xf32>
    %708 = vector.extract_strided_slice %701 {offsets = [0, 32], sizes = [1, 32], strides = [1, 1]} : vector<1x128xf32> to vector<1x32xf32>
    %709 = arith.negf %708 : vector<1x32xf32>
    %710 = math.exp %709 : vector<1x32xf32>
    %cst_168 = arith.constant 1.000000e+00 : f32
    %711 = vector.broadcast %cst_168 : f32 to vector<1x32xf32>
    %712 = arith.addf %711, %710 : vector<1x32xf32>
    %713 = arith.divf %711, %712 : vector<1x32xf32>
    %714 = vector.extract_strided_slice %701 {offsets = [0, 64], sizes = [1, 32], strides = [1, 1]} : vector<1x128xf32> to vector<1x32xf32>
    %715 = math.tanh %714 : vector<1x32xf32>
    %716 = vector.extract_strided_slice %701 {offsets = [0, 96], sizes = [1, 32], strides = [1, 1]} : vector<1x128xf32> to vector<1x32xf32>
    %717 = arith.negf %716 : vector<1x32xf32>
    %718 = math.exp %717 : vector<1x32xf32>
    %cst_169 = arith.constant 1.000000e+00 : f32
    %719 = vector.broadcast %cst_169 : f32 to vector<1x32xf32>
    %720 = arith.addf %719, %718 : vector<1x32xf32>
    %721 = arith.divf %719, %720 : vector<1x32xf32>
    %722 = arith.mulf %713, %695 : vector<1x32xf32>
    %723 = arith.mulf %707, %715 : vector<1x32xf32>
    %724 = arith.addf %722, %723 : vector<1x32xf32>
    %725 = math.tanh %724 : vector<1x32xf32>
    %726 = arith.mulf %721, %725 : vector<1x32xf32>
    %c7_170 = arith.constant 7 : index
    %c32_171 = arith.constant 32 : index
    %727 = vector.load %arg19[%c7_170, %c32_171] : memref<8x64xf32, #tpu.memory_space<vmem>>, vector<1x32xf32>
    tpu.vector_store %arg19[%c7_170, %c32_171], %726 {strides = array<i32>} : memref<8x64xf32, #tpu.memory_space<vmem>>, vector<1x32xf32>,
    %cst_172 = arith.constant 0.000000e+00 : f32
    %728 = vector.broadcast %cst_172 : f32 to vector<1x32xf32>
    %cst_173 = arith.constant 0.000000e+00 : f32
    %729 = vector.broadcast %cst_173 : f32 to vector<1x32xf32>
    %730 = vector.extract_strided_slice %493 {offsets = [7, 0], sizes = [1, 128], strides = [1, 1]} : vector<8x128xf32> to vector<1x128xf32>
    %cst_174 = arith.constant dense<0.000000e+00> : vector<1x128xf32>
    %731 = tpu.matmul %728, %486, %cst_174 {dimension_numbers = #tpu.dot_dimension_numbers<[1], [0], [0], [1], [0, 0, 1, 1], [], []>} : vector<1x32xf32>, vector<32x128xf32>, vector<1x128xf32> -> vector<1x128xf32>
    %732 = arith.addf %730, %731 : vector<1x128xf32>
    %733 = vector.extract_strided_slice %732 {offsets = [0, 0], sizes = [1, 32], strides = [1, 1]} : vector<1x128xf32> to vector<1x32xf32>
    %734 = arith.negf %733 : vector<1x32xf32>
    %735 = math.exp %734 : vector<1x32xf32>
    %cst_175 = arith.constant 1.000000e+00 : f32
    %736 = vector.broadcast %cst_175 : f32 to vector<1x32xf32>
    %737 = arith.addf %736, %735 : vector<1x32xf32>
    %738 = arith.divf %736, %737 : vector<1x32xf32>
    %739 = vector.extract_strided_slice %732 {offsets = [0, 32], sizes = [1, 32], strides = [1, 1]} : vector<1x128xf32> to vector<1x32xf32>
    %740 = arith.negf %739 : vector<1x32xf32>
    %741 = math.exp %740 : vector<1x32xf32>
    %cst_176 = arith.constant 1.000000e+00 : f32
    %742 = vector.broadcast %cst_176 : f32 to vector<1x32xf32>
    %743 = arith.addf %742, %741 : vector<1x32xf32>
    %744 = arith.divf %742, %743 : vector<1x32xf32>
    %745 = vector.extract_strided_slice %732 {offsets = [0, 64], sizes = [1, 32], strides = [1, 1]} : vector<1x128xf32> to vector<1x32xf32>
    %746 = math.tanh %745 : vector<1x32xf32>
    %747 = vector.extract_strided_slice %732 {offsets = [0, 96], sizes = [1, 32], strides = [1, 1]} : vector<1x128xf32> to vector<1x32xf32>
    %748 = arith.negf %747 : vector<1x32xf32>
    %749 = math.exp %748 : vector<1x32xf32>
    %cst_177 = arith.constant 1.000000e+00 : f32
    %750 = vector.broadcast %cst_177 : f32 to vector<1x32xf32>
    %751 = arith.addf %750, %749 : vector<1x32xf32>
    %752 = arith.divf %750, %751 : vector<1x32xf32>
    %753 = arith.mulf %744, %729 : vector<1x32xf32>
    %754 = arith.mulf %738, %746 : vector<1x32xf32>
    %755 = arith.addf %753, %754 : vector<1x32xf32>
    %756 = math.tanh %755 : vector<1x32xf32>
    %757 = arith.mulf %752, %756 : vector<1x32xf32>
    %c7_178 = arith.constant 7 : index
    %c0_179 = arith.constant 0 : index
    %758 = vector.load %arg19[%c7_178, %c0_179] : memref<8x64xf32, #tpu.memory_space<vmem>>, vector<1x32xf32>
    tpu.vector_store %arg19[%c7_178, %c0_179], %757 {strides = array<i32>} : memref<8x64xf32, #tpu.memory_space<vmem>>, vector<1x32xf32>,
    %759 = vector.extract_strided_slice %493 {offsets = [6, 0], sizes = [1, 128], strides = [1, 1]} : vector<8x128xf32> to vector<1x128xf32>
    %cst_180 = arith.constant dense<0.000000e+00> : vector<1x128xf32>
    %760 = tpu.matmul %757, %486, %cst_180 {dimension_numbers = #tpu.dot_dimension_numbers<[1], [0], [0], [1], [0, 0, 1, 1], [], []>} : vector<1x32xf32>, vector<32x128xf32>, vector<1x128xf32> -> vector<1x128xf32>
    %761 = arith.addf %759, %760 : vector<1x128xf32>
    %762 = vector.extract_strided_slice %761 {offsets = [0, 0], sizes = [1, 32], strides = [1, 1]} : vector<1x128xf32> to vector<1x32xf32>
    %763 = arith.negf %762 : vector<1x32xf32>
    %764 = math.exp %763 : vector<1x32xf32>
    %cst_181 = arith.constant 1.000000e+00 : f32
    %765 = vector.broadcast %cst_181 : f32 to vector<1x32xf32>
    %766 = arith.addf %765, %764 : vector<1x32xf32>
    %767 = arith.divf %765, %766 : vector<1x32xf32>
    %768 = vector.extract_strided_slice %761 {offsets = [0, 32], sizes = [1, 32], strides = [1, 1]} : vector<1x128xf32> to vector<1x32xf32>
    %769 = arith.negf %768 : vector<1x32xf32>
    %770 = math.exp %769 : vector<1x32xf32>
    %cst_182 = arith.constant 1.000000e+00 : f32
    %771 = vector.broadcast %cst_182 : f32 to vector<1x32xf32>
    %772 = arith.addf %771, %770 : vector<1x32xf32>
    %773 = arith.divf %771, %772 : vector<1x32xf32>
    %774 = vector.extract_strided_slice %761 {offsets = [0, 64], sizes = [1, 32], strides = [1, 1]} : vector<1x128xf32> to vector<1x32xf32>
    %775 = math.tanh %774 : vector<1x32xf32>
    %776 = vector.extract_strided_slice %761 {offsets = [0, 96], sizes = [1, 32], strides = [1, 1]} : vector<1x128xf32> to vector<1x32xf32>
    %777 = arith.negf %776 : vector<1x32xf32>
    %778 = math.exp %777 : vector<1x32xf32>
    %cst_183 = arith.constant 1.000000e+00 : f32
    %779 = vector.broadcast %cst_183 : f32 to vector<1x32xf32>
    %780 = arith.addf %779, %778 : vector<1x32xf32>
    %781 = arith.divf %779, %780 : vector<1x32xf32>
    %782 = arith.mulf %773, %755 : vector<1x32xf32>
    %783 = arith.mulf %767, %775 : vector<1x32xf32>
    %784 = arith.addf %782, %783 : vector<1x32xf32>
    %785 = math.tanh %784 : vector<1x32xf32>
    %786 = arith.mulf %781, %785 : vector<1x32xf32>
    %c6_184 = arith.constant 6 : index
    %c0_185 = arith.constant 0 : index
    %787 = vector.load %arg19[%c6_184, %c0_185] : memref<8x64xf32, #tpu.memory_space<vmem>>, vector<1x32xf32>
    tpu.vector_store %arg19[%c6_184, %c0_185], %786 {strides = array<i32>} : memref<8x64xf32, #tpu.memory_space<vmem>>, vector<1x32xf32>,
    %788 = vector.extract_strided_slice %493 {offsets = [5, 0], sizes = [1, 128], strides = [1, 1]} : vector<8x128xf32> to vector<1x128xf32>
    %cst_186 = arith.constant dense<0.000000e+00> : vector<1x128xf32>
    %789 = tpu.matmul %786, %486, %cst_186 {dimension_numbers = #tpu.dot_dimension_numbers<[1], [0], [0], [1], [0, 0, 1, 1], [], []>} : vector<1x32xf32>, vector<32x128xf32>, vector<1x128xf32> -> vector<1x128xf32>
    %790 = arith.addf %788, %789 : vector<1x128xf32>
    %791 = vector.extract_strided_slice %790 {offsets = [0, 0], sizes = [1, 32], strides = [1, 1]} : vector<1x128xf32> to vector<1x32xf32>
    %792 = arith.negf %791 : vector<1x32xf32>
    %793 = math.exp %792 : vector<1x32xf32>
    %cst_187 = arith.constant 1.000000e+00 : f32
    %794 = vector.broadcast %cst_187 : f32 to vector<1x32xf32>
    %795 = arith.addf %794, %793 : vector<1x32xf32>
    %796 = arith.divf %794, %795 : vector<1x32xf32>
    %797 = vector.extract_strided_slice %790 {offsets = [0, 32], sizes = [1, 32], strides = [1, 1]} : vector<1x128xf32> to vector<1x32xf32>
    %798 = arith.negf %797 : vector<1x32xf32>
    %799 = math.exp %798 : vector<1x32xf32>
    %cst_188 = arith.constant 1.000000e+00 : f32
    %800 = vector.broadcast %cst_188 : f32 to vector<1x32xf32>
    %801 = arith.addf %800, %799 : vector<1x32xf32>
    %802 = arith.divf %800, %801 : vector<1x32xf32>
    %803 = vector.extract_strided_slice %790 {offsets = [0, 64], sizes = [1, 32], strides = [1, 1]} : vector<1x128xf32> to vector<1x32xf32>
    %804 = math.tanh %803 : vector<1x32xf32>
    %805 = vector.extract_strided_slice %790 {offsets = [0, 96], sizes = [1, 32], strides = [1, 1]} : vector<1x128xf32> to vector<1x32xf32>
    %806 = arith.negf %805 : vector<1x32xf32>
    %807 = math.exp %806 : vector<1x32xf32>
    %cst_189 = arith.constant 1.000000e+00 : f32
    %808 = vector.broadcast %cst_189 : f32 to vector<1x32xf32>
    %809 = arith.addf %808, %807 : vector<1x32xf32>
    %810 = arith.divf %808, %809 : vector<1x32xf32>
    %811 = arith.mulf %802, %784 : vector<1x32xf32>
    %812 = arith.mulf %796, %804 : vector<1x32xf32>
    %813 = arith.addf %811, %812 : vector<1x32xf32>
    %814 = math.tanh %813 : vector<1x32xf32>
    %815 = arith.mulf %810, %814 : vector<1x32xf32>
    %c5_190 = arith.constant 5 : index
    %c0_191 = arith.constant 0 : index
    %816 = vector.load %arg19[%c5_190, %c0_191] : memref<8x64xf32, #tpu.memory_space<vmem>>, vector<1x32xf32>
    tpu.vector_store %arg19[%c5_190, %c0_191], %815 {strides = array<i32>} : memref<8x64xf32, #tpu.memory_space<vmem>>, vector<1x32xf32>,
    %817 = vector.extract_strided_slice %493 {offsets = [4, 0], sizes = [1, 128], strides = [1, 1]} : vector<8x128xf32> to vector<1x128xf32>
    %cst_192 = arith.constant dense<0.000000e+00> : vector<1x128xf32>
    %818 = tpu.matmul %815, %486, %cst_192 {dimension_numbers = #tpu.dot_dimension_numbers<[1], [0], [0], [1], [0, 0, 1, 1], [], []>} : vector<1x32xf32>, vector<32x128xf32>, vector<1x128xf32> -> vector<1x128xf32>
    %819 = arith.addf %817, %818 : vector<1x128xf32>
    %820 = vector.extract_strided_slice %819 {offsets = [0, 0], sizes = [1, 32], strides = [1, 1]} : vector<1x128xf32> to vector<1x32xf32>
    %821 = arith.negf %820 : vector<1x32xf32>
    %822 = math.exp %821 : vector<1x32xf32>
    %cst_193 = arith.constant 1.000000e+00 : f32
    %823 = vector.broadcast %cst_193 : f32 to vector<1x32xf32>
    %824 = arith.addf %823, %822 : vector<1x32xf32>
    %825 = arith.divf %823, %824 : vector<1x32xf32>
    %826 = vector.extract_strided_slice %819 {offsets = [0, 32], sizes = [1, 32], strides = [1, 1]} : vector<1x128xf32> to vector<1x32xf32>
    %827 = arith.negf %826 : vector<1x32xf32>
    %828 = math.exp %827 : vector<1x32xf32>
    %cst_194 = arith.constant 1.000000e+00 : f32
    %829 = vector.broadcast %cst_194 : f32 to vector<1x32xf32>
    %830 = arith.addf %829, %828 : vector<1x32xf32>
    %831 = arith.divf %829, %830 : vector<1x32xf32>
    %832 = vector.extract_strided_slice %819 {offsets = [0, 64], sizes = [1, 32], strides = [1, 1]} : vector<1x128xf32> to vector<1x32xf32>
    %833 = math.tanh %832 : vector<1x32xf32>
    %834 = vector.extract_strided_slice %819 {offsets = [0, 96], sizes = [1, 32], strides = [1, 1]} : vector<1x128xf32> to vector<1x32xf32>
    %835 = arith.negf %834 : vector<1x32xf32>
    %836 = math.exp %835 : vector<1x32xf32>
    %cst_195 = arith.constant 1.000000e+00 : f32
    %837 = vector.broadcast %cst_195 : f32 to vector<1x32xf32>
    %838 = arith.addf %837, %836 : vector<1x32xf32>
    %839 = arith.divf %837, %838 : vector<1x32xf32>
    %840 = arith.mulf %831, %813 : vector<1x32xf32>
    %841 = arith.mulf %825, %833 : vector<1x32xf32>
    %842 = arith.addf %840, %841 : vector<1x32xf32>
    %843 = math.tanh %842 : vector<1x32xf32>
    %844 = arith.mulf %839, %843 : vector<1x32xf32>
    %c4_196 = arith.constant 4 : index
    %c0_197 = arith.constant 0 : index
    %845 = vector.load %arg19[%c4_196, %c0_197] : memref<8x64xf32, #tpu.memory_space<vmem>>, vector<1x32xf32>
    tpu.vector_store %arg19[%c4_196, %c0_197], %844 {strides = array<i32>} : memref<8x64xf32, #tpu.memory_space<vmem>>, vector<1x32xf32>,
    %846 = vector.extract_strided_slice %493 {offsets = [3, 0], sizes = [1, 128], strides = [1, 1]} : vector<8x128xf32> to vector<1x128xf32>
    %cst_198 = arith.constant dense<0.000000e+00> : vector<1x128xf32>
    %847 = tpu.matmul %844, %486, %cst_198 {dimension_numbers = #tpu.dot_dimension_numbers<[1], [0], [0], [1], [0, 0, 1, 1], [], []>} : vector<1x32xf32>, vector<32x128xf32>, vector<1x128xf32> -> vector<1x128xf32>
    %848 = arith.addf %846, %847 : vector<1x128xf32>
    %849 = vector.extract_strided_slice %848 {offsets = [0, 0], sizes = [1, 32], strides = [1, 1]} : vector<1x128xf32> to vector<1x32xf32>
    %850 = arith.negf %849 : vector<1x32xf32>
    %851 = math.exp %850 : vector<1x32xf32>
    %cst_199 = arith.constant 1.000000e+00 : f32
    %852 = vector.broadcast %cst_199 : f32 to vector<1x32xf32>
    %853 = arith.addf %852, %851 : vector<1x32xf32>
    %854 = arith.divf %852, %853 : vector<1x32xf32>
    %855 = vector.extract_strided_slice %848 {offsets = [0, 32], sizes = [1, 32], strides = [1, 1]} : vector<1x128xf32> to vector<1x32xf32>
    %856 = arith.negf %855 : vector<1x32xf32>
    %857 = math.exp %856 : vector<1x32xf32>
    %cst_200 = arith.constant 1.000000e+00 : f32
    %858 = vector.broadcast %cst_200 : f32 to vector<1x32xf32>
    %859 = arith.addf %858, %857 : vector<1x32xf32>
    %860 = arith.divf %858, %859 : vector<1x32xf32>
    %861 = vector.extract_strided_slice %848 {offsets = [0, 64], sizes = [1, 32], strides = [1, 1]} : vector<1x128xf32> to vector<1x32xf32>
    %862 = math.tanh %861 : vector<1x32xf32>
    %863 = vector.extract_strided_slice %848 {offsets = [0, 96], sizes = [1, 32], strides = [1, 1]} : vector<1x128xf32> to vector<1x32xf32>
    %864 = arith.negf %863 : vector<1x32xf32>
    %865 = math.exp %864 : vector<1x32xf32>
    %cst_201 = arith.constant 1.000000e+00 : f32
    %866 = vector.broadcast %cst_201 : f32 to vector<1x32xf32>
    %867 = arith.addf %866, %865 : vector<1x32xf32>
    %868 = arith.divf %866, %867 : vector<1x32xf32>
    %869 = arith.mulf %860, %842 : vector<1x32xf32>
    %870 = arith.mulf %854, %862 : vector<1x32xf32>
    %871 = arith.addf %869, %870 : vector<1x32xf32>
    %872 = math.tanh %871 : vector<1x32xf32>
    %873 = arith.mulf %868, %872 : vector<1x32xf32>
    %c3_202 = arith.constant 3 : index
    %c0_203 = arith.constant 0 : index
    %874 = vector.load %arg19[%c3_202, %c0_203] : memref<8x64xf32, #tpu.memory_space<vmem>>, vector<1x32xf32>
    tpu.vector_store %arg19[%c3_202, %c0_203], %873 {strides = array<i32>} : memref<8x64xf32, #tpu.memory_space<vmem>>, vector<1x32xf32>,
    %875 = vector.extract_strided_slice %493 {offsets = [2, 0], sizes = [1, 128], strides = [1, 1]} : vector<8x128xf32> to vector<1x128xf32>
    %cst_204 = arith.constant dense<0.000000e+00> : vector<1x128xf32>
    %876 = tpu.matmul %873, %486, %cst_204 {dimension_numbers = #tpu.dot_dimension_numbers<[1], [0], [0], [1], [0, 0, 1, 1], [], []>} : vector<1x32xf32>, vector<32x128xf32>, vector<1x128xf32> -> vector<1x128xf32>
    %877 = arith.addf %875, %876 : vector<1x128xf32>
    %878 = vector.extract_strided_slice %877 {offsets = [0, 0], sizes = [1, 32], strides = [1, 1]} : vector<1x128xf32> to vector<1x32xf32>
    %879 = arith.negf %878 : vector<1x32xf32>
    %880 = math.exp %879 : vector<1x32xf32>
    %cst_205 = arith.constant 1.000000e+00 : f32
    %881 = vector.broadcast %cst_205 : f32 to vector<1x32xf32>
    %882 = arith.addf %881, %880 : vector<1x32xf32>
    %883 = arith.divf %881, %882 : vector<1x32xf32>
    %884 = vector.extract_strided_slice %877 {offsets = [0, 32], sizes = [1, 32], strides = [1, 1]} : vector<1x128xf32> to vector<1x32xf32>
    %885 = arith.negf %884 : vector<1x32xf32>
    %886 = math.exp %885 : vector<1x32xf32>
    %cst_206 = arith.constant 1.000000e+00 : f32
    %887 = vector.broadcast %cst_206 : f32 to vector<1x32xf32>
    %888 = arith.addf %887, %886 : vector<1x32xf32>
    %889 = arith.divf %887, %888 : vector<1x32xf32>
    %890 = vector.extract_strided_slice %877 {offsets = [0, 64], sizes = [1, 32], strides = [1, 1]} : vector<1x128xf32> to vector<1x32xf32>
    %891 = math.tanh %890 : vector<1x32xf32>
    %892 = vector.extract_strided_slice %877 {offsets = [0, 96], sizes = [1, 32], strides = [1, 1]} : vector<1x128xf32> to vector<1x32xf32>
    %893 = arith.negf %892 : vector<1x32xf32>
    %894 = math.exp %893 : vector<1x32xf32>
    %cst_207 = arith.constant 1.000000e+00 : f32
    %895 = vector.broadcast %cst_207 : f32 to vector<1x32xf32>
    %896 = arith.addf %895, %894 : vector<1x32xf32>
    %897 = arith.divf %895, %896 : vector<1x32xf32>
    %898 = arith.mulf %889, %871 : vector<1x32xf32>
    %899 = arith.mulf %883, %891 : vector<1x32xf32>
    %900 = arith.addf %898, %899 : vector<1x32xf32>
    %901 = math.tanh %900 : vector<1x32xf32>
    %902 = arith.mulf %897, %901 : vector<1x32xf32>
    %c2_208 = arith.constant 2 : index
    %c0_209 = arith.constant 0 : index
    %903 = vector.load %arg19[%c2_208, %c0_209] : memref<8x64xf32, #tpu.memory_space<vmem>>, vector<1x32xf32>
    tpu.vector_store %arg19[%c2_208, %c0_209], %902 {strides = array<i32>} : memref<8x64xf32, #tpu.memory_space<vmem>>, vector<1x32xf32>,
    %904 = vector.extract_strided_slice %493 {offsets = [1, 0], sizes = [1, 128], strides = [1, 1]} : vector<8x128xf32> to vector<1x128xf32>
    %cst_210 = arith.constant dense<0.000000e+00> : vector<1x128xf32>
    %905 = tpu.matmul %902, %486, %cst_210 {dimension_numbers = #tpu.dot_dimension_numbers<[1], [0], [0], [1], [0, 0, 1, 1], [], []>} : vector<1x32xf32>, vector<32x128xf32>, vector<1x128xf32> -> vector<1x128xf32>
    %906 = arith.addf %904, %905 : vector<1x128xf32>
    %907 = vector.extract_strided_slice %906 {offsets = [0, 0], sizes = [1, 32], strides = [1, 1]} : vector<1x128xf32> to vector<1x32xf32>
    %908 = arith.negf %907 : vector<1x32xf32>
    %909 = math.exp %908 : vector<1x32xf32>
    %cst_211 = arith.constant 1.000000e+00 : f32
    %910 = vector.broadcast %cst_211 : f32 to vector<1x32xf32>
    %911 = arith.addf %910, %909 : vector<1x32xf32>
    %912 = arith.divf %910, %911 : vector<1x32xf32>
    %913 = vector.extract_strided_slice %906 {offsets = [0, 32], sizes = [1, 32], strides = [1, 1]} : vector<1x128xf32> to vector<1x32xf32>
    %914 = arith.negf %913 : vector<1x32xf32>
    %915 = math.exp %914 : vector<1x32xf32>
    %cst_212 = arith.constant 1.000000e+00 : f32
    %916 = vector.broadcast %cst_212 : f32 to vector<1x32xf32>
    %917 = arith.addf %916, %915 : vector<1x32xf32>
    %918 = arith.divf %916, %917 : vector<1x32xf32>
    %919 = vector.extract_strided_slice %906 {offsets = [0, 64], sizes = [1, 32], strides = [1, 1]} : vector<1x128xf32> to vector<1x32xf32>
    %920 = math.tanh %919 : vector<1x32xf32>
    %921 = vector.extract_strided_slice %906 {offsets = [0, 96], sizes = [1, 32], strides = [1, 1]} : vector<1x128xf32> to vector<1x32xf32>
    %922 = arith.negf %921 : vector<1x32xf32>
    %923 = math.exp %922 : vector<1x32xf32>
    %cst_213 = arith.constant 1.000000e+00 : f32
    %924 = vector.broadcast %cst_213 : f32 to vector<1x32xf32>
    %925 = arith.addf %924, %923 : vector<1x32xf32>
    %926 = arith.divf %924, %925 : vector<1x32xf32>
    %927 = arith.mulf %918, %900 : vector<1x32xf32>
    %928 = arith.mulf %912, %920 : vector<1x32xf32>
    %929 = arith.addf %927, %928 : vector<1x32xf32>
    %930 = math.tanh %929 : vector<1x32xf32>
    %931 = arith.mulf %926, %930 : vector<1x32xf32>
    %c1_214 = arith.constant 1 : index
    %c0_215 = arith.constant 0 : index
    %932 = vector.load %arg19[%c1_214, %c0_215] : memref<8x64xf32, #tpu.memory_space<vmem>>, vector<1x32xf32>
    tpu.vector_store %arg19[%c1_214, %c0_215], %931 {strides = array<i32>} : memref<8x64xf32, #tpu.memory_space<vmem>>, vector<1x32xf32>,
    %933 = vector.extract_strided_slice %493 {offsets = [0, 0], sizes = [1, 128], strides = [1, 1]} : vector<8x128xf32> to vector<1x128xf32>
    %cst_216 = arith.constant dense<0.000000e+00> : vector<1x128xf32>
    %934 = tpu.matmul %931, %486, %cst_216 {dimension_numbers = #tpu.dot_dimension_numbers<[1], [0], [0], [1], [0, 0, 1, 1], [], []>} : vector<1x32xf32>, vector<32x128xf32>, vector<1x128xf32> -> vector<1x128xf32>
    %935 = arith.addf %933, %934 : vector<1x128xf32>
    %936 = vector.extract_strided_slice %935 {offsets = [0, 0], sizes = [1, 32], strides = [1, 1]} : vector<1x128xf32> to vector<1x32xf32>
    %937 = arith.negf %936 : vector<1x32xf32>
    %938 = math.exp %937 : vector<1x32xf32>
    %cst_217 = arith.constant 1.000000e+00 : f32
    %939 = vector.broadcast %cst_217 : f32 to vector<1x32xf32>
    %940 = arith.addf %939, %938 : vector<1x32xf32>
    %941 = arith.divf %939, %940 : vector<1x32xf32>
    %942 = vector.extract_strided_slice %935 {offsets = [0, 32], sizes = [1, 32], strides = [1, 1]} : vector<1x128xf32> to vector<1x32xf32>
    %943 = arith.negf %942 : vector<1x32xf32>
    %944 = math.exp %943 : vector<1x32xf32>
    %cst_218 = arith.constant 1.000000e+00 : f32
    %945 = vector.broadcast %cst_218 : f32 to vector<1x32xf32>
    %946 = arith.addf %945, %944 : vector<1x32xf32>
    %947 = arith.divf %945, %946 : vector<1x32xf32>
    %948 = vector.extract_strided_slice %935 {offsets = [0, 64], sizes = [1, 32], strides = [1, 1]} : vector<1x128xf32> to vector<1x32xf32>
    %949 = math.tanh %948 : vector<1x32xf32>
    %950 = vector.extract_strided_slice %935 {offsets = [0, 96], sizes = [1, 32], strides = [1, 1]} : vector<1x128xf32> to vector<1x32xf32>
    %951 = arith.negf %950 : vector<1x32xf32>
    %952 = math.exp %951 : vector<1x32xf32>
    %cst_219 = arith.constant 1.000000e+00 : f32
    %953 = vector.broadcast %cst_219 : f32 to vector<1x32xf32>
    %954 = arith.addf %953, %952 : vector<1x32xf32>
    %955 = arith.divf %953, %954 : vector<1x32xf32>
    %956 = arith.mulf %947, %929 : vector<1x32xf32>
    %957 = arith.mulf %941, %949 : vector<1x32xf32>
    %958 = arith.addf %956, %957 : vector<1x32xf32>
    %959 = math.tanh %958 : vector<1x32xf32>
    %960 = arith.mulf %955, %959 : vector<1x32xf32>
    %c0_220 = arith.constant 0 : index
    %c0_221 = arith.constant 0 : index
    %961 = vector.load %arg19[%c0_220, %c0_221] : memref<8x64xf32, #tpu.memory_space<vmem>>, vector<1x32xf32>
    tpu.vector_store %arg19[%c0_220, %c0_221], %960 {strides = array<i32>} : memref<8x64xf32, #tpu.memory_space<vmem>>, vector<1x32xf32>,
    %c0_222 = arith.constant 0 : index
    %c0_223 = arith.constant 0 : index
    %962 = vector.load %arg19[%c0_222, %c0_223] : memref<8x64xf32, #tpu.memory_space<vmem>>, vector<8x64xf32>
    %c0_224 = arith.constant 0 : index
    %c0_225 = arith.constant 0 : index
    %963 = vector.load %arg13[%c0_224, %c0_225] : memref<64x256xf32, #tpu.memory_space<vmem>>, vector<64x256xf32>
    %cst_226 = arith.constant dense<0.000000e+00> : vector<8x256xf32>
    %964 = tpu.matmul %962, %963, %cst_226 {dimension_numbers = #tpu.dot_dimension_numbers<[1], [0], [0], [1], [0, 0, 1, 1], [], []>} : vector<8x64xf32>, vector<64x256xf32>, vector<8x256xf32> -> vector<8x256xf32>
    %965 = vector.extract_strided_slice %964 {offsets = [0, 0], sizes = [8, 64], strides = [1, 1]} : vector<8x256xf32> to vector<8x64xf32>
    %966 = vector.extract_strided_slice %964 {offsets = [0, 64], sizes = [8, 64], strides = [1, 1]} : vector<8x256xf32> to vector<8x64xf32>
    %967 = vector.extract_strided_slice %964 {offsets = [0, 128], sizes = [8, 64], strides = [1, 1]} : vector<8x256xf32> to vector<8x64xf32>
    %968 = vector.extract_strided_slice %964 {offsets = [0, 192], sizes = [8, 64], strides = [1, 1]} : vector<8x256xf32> to vector<8x64xf32>
    %c0_227 = arith.constant 0 : index
    %969 = memref.load %arg16[%c0_227] : memref<2xf32, #tpu.memory_space<smem>>
    %c1_228 = arith.constant 1 : index
    %970 = memref.load %arg16[%c1_228] : memref<2xf32, #tpu.memory_space<smem>>
    %971 = vector.extract_strided_slice %965 {offsets = [0, 0], sizes = [1, 64], strides = [1, 1]} : vector<8x64xf32> to vector<1x64xf32>
    %972 = vector.broadcast %971 : vector<1x64xf32> to vector<8x64xf32>
    %973 = arith.addf %972, %966 : vector<8x64xf32>
    %974 = vector.broadcast %969 : f32 to vector<8x64xf32>
    %975 = arith.addf %973, %974 : vector<8x64xf32>
    %976 = math.tanh %975 : vector<8x64xf32>
    %977 = vector.extract_strided_slice %965 {offsets = [1, 0], sizes = [1, 64], strides = [1, 1]} : vector<8x64xf32> to vector<1x64xf32>
    %978 = vector.broadcast %977 : vector<1x64xf32> to vector<8x64xf32>
    %979 = arith.addf %978, %966 : vector<8x64xf32>
    %980 = vector.broadcast %969 : f32 to vector<8x64xf32>
    %981 = arith.addf %979, %980 : vector<8x64xf32>
    %982 = math.tanh %981 : vector<8x64xf32>
    %983 = vector.extract_strided_slice %965 {offsets = [2, 0], sizes = [1, 64], strides = [1, 1]} : vector<8x64xf32> to vector<1x64xf32>
    %984 = vector.broadcast %983 : vector<1x64xf32> to vector<8x64xf32>
    %985 = arith.addf %984, %966 : vector<8x64xf32>
    %986 = vector.broadcast %969 : f32 to vector<8x64xf32>
    %987 = arith.addf %985, %986 : vector<8x64xf32>
    %988 = math.tanh %987 : vector<8x64xf32>
    %989 = vector.extract_strided_slice %965 {offsets = [3, 0], sizes = [1, 64], strides = [1, 1]} : vector<8x64xf32> to vector<1x64xf32>
    %990 = vector.broadcast %989 : vector<1x64xf32> to vector<8x64xf32>
    %991 = arith.addf %990, %966 : vector<8x64xf32>
    %992 = vector.broadcast %969 : f32 to vector<8x64xf32>
    %993 = arith.addf %991, %992 : vector<8x64xf32>
    %994 = math.tanh %993 : vector<8x64xf32>
    %995 = vector.extract_strided_slice %965 {offsets = [4, 0], sizes = [1, 64], strides = [1, 1]} : vector<8x64xf32> to vector<1x64xf32>
    %996 = vector.broadcast %995 : vector<1x64xf32> to vector<8x64xf32>
    %997 = arith.addf %996, %966 : vector<8x64xf32>
    %998 = vector.broadcast %969 : f32 to vector<8x64xf32>
    %999 = arith.addf %997, %998 : vector<8x64xf32>
    %1000 = math.tanh %999 : vector<8x64xf32>
    %1001 = vector.extract_strided_slice %965 {offsets = [5, 0], sizes = [1, 64], strides = [1, 1]} : vector<8x64xf32> to vector<1x64xf32>
    %1002 = vector.broadcast %1001 : vector<1x64xf32> to vector<8x64xf32>
    %1003 = arith.addf %1002, %966 : vector<8x64xf32>
    %1004 = vector.broadcast %969 : f32 to vector<8x64xf32>
    %1005 = arith.addf %1003, %1004 : vector<8x64xf32>
    %1006 = math.tanh %1005 : vector<8x64xf32>
    %1007 = vector.extract_strided_slice %965 {offsets = [6, 0], sizes = [1, 64], strides = [1, 1]} : vector<8x64xf32> to vector<1x64xf32>
    %1008 = vector.broadcast %1007 : vector<1x64xf32> to vector<8x64xf32>
    %1009 = arith.addf %1008, %966 : vector<8x64xf32>
    %1010 = vector.broadcast %969 : f32 to vector<8x64xf32>
    %1011 = arith.addf %1009, %1010 : vector<8x64xf32>
    %1012 = math.tanh %1011 : vector<8x64xf32>
    %1013 = vector.extract_strided_slice %965 {offsets = [7, 0], sizes = [1, 64], strides = [1, 1]} : vector<8x64xf32> to vector<1x64xf32>
    %1014 = vector.broadcast %1013 : vector<1x64xf32> to vector<8x64xf32>
    %1015 = arith.addf %1014, %966 : vector<8x64xf32>
    %1016 = vector.broadcast %969 : f32 to vector<8x64xf32>
    %1017 = arith.addf %1015, %1016 : vector<8x64xf32>
    %1018 = math.tanh %1017 : vector<8x64xf32>
    %1019 = tpu.concatenate %976, %982, %988, %994, %1000, %1006, %1012, %1018 in 0 : vector<8x64xf32>, vector<8x64xf32>, vector<8x64xf32>, vector<8x64xf32>, vector<8x64xf32>, vector<8x64xf32>, vector<8x64xf32>, vector<8x64xf32> -> vector<64x64xf32>
    %1020 = vector.extract_strided_slice %968 {offsets = [0, 0], sizes = [1, 64], strides = [1, 1]} : vector<8x64xf32> to vector<1x64xf32>
    %1021 = vector.broadcast %1020 : vector<1x64xf32> to vector<8x64xf32>
    %1022 = arith.addf %1021, %967 : vector<8x64xf32>
    %1023 = vector.broadcast %970 : f32 to vector<8x64xf32>
    %1024 = arith.addf %1022, %1023 : vector<8x64xf32>
    %1025 = math.tanh %1024 : vector<8x64xf32>
    %1026 = vector.extract_strided_slice %968 {offsets = [1, 0], sizes = [1, 64], strides = [1, 1]} : vector<8x64xf32> to vector<1x64xf32>
    %1027 = vector.broadcast %1026 : vector<1x64xf32> to vector<8x64xf32>
    %1028 = arith.addf %1027, %967 : vector<8x64xf32>
    %1029 = vector.broadcast %970 : f32 to vector<8x64xf32>
    %1030 = arith.addf %1028, %1029 : vector<8x64xf32>
    %1031 = math.tanh %1030 : vector<8x64xf32>
    %1032 = vector.extract_strided_slice %968 {offsets = [2, 0], sizes = [1, 64], strides = [1, 1]} : vector<8x64xf32> to vector<1x64xf32>
    %1033 = vector.broadcast %1032 : vector<1x64xf32> to vector<8x64xf32>
    %1034 = arith.addf %1033, %967 : vector<8x64xf32>
    %1035 = vector.broadcast %970 : f32 to vector<8x64xf32>
    %1036 = arith.addf %1034, %1035 : vector<8x64xf32>
    %1037 = math.tanh %1036 : vector<8x64xf32>
    %1038 = vector.extract_strided_slice %968 {offsets = [3, 0], sizes = [1, 64], strides = [1, 1]} : vector<8x64xf32> to vector<1x64xf32>
    %1039 = vector.broadcast %1038 : vector<1x64xf32> to vector<8x64xf32>
    %1040 = arith.addf %1039, %967 : vector<8x64xf32>
    %1041 = vector.broadcast %970 : f32 to vector<8x64xf32>
    %1042 = arith.addf %1040, %1041 : vector<8x64xf32>
    %1043 = math.tanh %1042 : vector<8x64xf32>
    %1044 = vector.extract_strided_slice %968 {offsets = [4, 0], sizes = [1, 64], strides = [1, 1]} : vector<8x64xf32> to vector<1x64xf32>
    %1045 = vector.broadcast %1044 : vector<1x64xf32> to vector<8x64xf32>
    %1046 = arith.addf %1045, %967 : vector<8x64xf32>
    %1047 = vector.broadcast %970 : f32 to vector<8x64xf32>
    %1048 = arith.addf %1046, %1047 : vector<8x64xf32>
    %1049 = math.tanh %1048 : vector<8x64xf32>
    %1050 = vector.extract_strided_slice %968 {offsets = [5, 0], sizes = [1, 64], strides = [1, 1]} : vector<8x64xf32> to vector<1x64xf32>
    %1051 = vector.broadcast %1050 : vector<1x64xf32> to vector<8x64xf32>
    %1052 = arith.addf %1051, %967 : vector<8x64xf32>
    %1053 = vector.broadcast %970 : f32 to vector<8x64xf32>
    %1054 = arith.addf %1052, %1053 : vector<8x64xf32>
    %1055 = math.tanh %1054 : vector<8x64xf32>
    %1056 = vector.extract_strided_slice %968 {offsets = [6, 0], sizes = [1, 64], strides = [1, 1]} : vector<8x64xf32> to vector<1x64xf32>
    %1057 = vector.broadcast %1056 : vector<1x64xf32> to vector<8x64xf32>
    %1058 = arith.addf %1057, %967 : vector<8x64xf32>
    %1059 = vector.broadcast %970 : f32 to vector<8x64xf32>
    %1060 = arith.addf %1058, %1059 : vector<8x64xf32>
    %1061 = math.tanh %1060 : vector<8x64xf32>
    %1062 = vector.extract_strided_slice %968 {offsets = [7, 0], sizes = [1, 64], strides = [1, 1]} : vector<8x64xf32> to vector<1x64xf32>
    %1063 = vector.broadcast %1062 : vector<1x64xf32> to vector<8x64xf32>
    %1064 = arith.addf %1063, %967 : vector<8x64xf32>
    %1065 = vector.broadcast %970 : f32 to vector<8x64xf32>
    %1066 = arith.addf %1064, %1065 : vector<8x64xf32>
    %1067 = math.tanh %1066 : vector<8x64xf32>
    %1068 = tpu.concatenate %1025, %1031, %1037, %1043, %1049, %1055, %1061, %1067 in 0 : vector<8x64xf32>, vector<8x64xf32>, vector<8x64xf32>, vector<8x64xf32>, vector<8x64xf32>, vector<8x64xf32>, vector<8x64xf32>, vector<8x64xf32> -> vector<64x64xf32>
    %c0_229 = arith.constant 0 : index
    %c0_230 = arith.constant 0 : index
    %1069 = vector.load %arg14[%c0_229, %c0_230] : memref<128x128xf32, #tpu.memory_space<vmem>>, vector<128x128xf32>
    %1070 = vector.extract_strided_slice %1069 {offsets = [0, 0], sizes = [64, 128], strides = [1, 1]} : vector<128x128xf32> to vector<64x128xf32>
    %cst_231 = arith.constant dense<0.000000e+00> : vector<64x128xf32>
    %1071 = tpu.matmul %1019, %1070, %cst_231 {dimension_numbers = #tpu.dot_dimension_numbers<[1], [0], [0], [1], [0, 0, 1, 1], [], []>} : vector<64x64xf32>, vector<64x128xf32>, vector<64x128xf32> -> vector<64x128xf32>
    %1072 = vector.extract_strided_slice %1069 {offsets = [64, 0], sizes = [64, 128], strides = [1, 1]} : vector<128x128xf32> to vector<64x128xf32>
    %cst_232 = arith.constant dense<0.000000e+00> : vector<64x128xf32>
    %1073 = tpu.matmul %1068, %1072, %cst_232 {dimension_numbers = #tpu.dot_dimension_numbers<[1], [0], [0], [1], [0, 0, 1, 1], [], []>} : vector<64x64xf32>, vector<64x128xf32>, vector<64x128xf32> -> vector<64x128xf32>
    %1074 = arith.addf %1071, %1073 : vector<64x128xf32>
    %c0_233 = arith.constant 0 : index
    %c0_234 = arith.constant 0 : index
    %1075 = vector.load %arg15[%c0_233, %c0_234] : memref<1x128xf32, #tpu.memory_space<vmem>>, vector<1x128xf32>
    %1076 = vector.broadcast %1075 : vector<1x128xf32> to vector<64x128xf32>
    %1077 = arith.addf %1074, %1076 : vector<64x128xf32>
    %c0_235 = arith.constant 0 : index
    %c0_236 = arith.constant 0 : index
    %1078 = vector.load %arg17[%c0_235, %c0_236] : memref<64x128xf32, #tpu.memory_space<vmem>>, vector<64x128xf32>
    tpu.vector_store %arg17[%c0_235, %c0_236], %1077 {strides = array<i32>} : memref<64x128xf32, #tpu.memory_space<vmem>>, vector<64x128xf32>,
    return
  }
}

</mosaic_0001>

<llo_original>
// kernel: squeeze.7
$region0: #{squeeze.7}
  %s0 = inlined_call_operand.vmem [shape: f32[64], index: 0, kind: input, shape index: {}]
  %s1 = inlined_call_operand.hbm [shape: f32[8,8], index: 1, kind: output, shape index: {}]
  $region1: #{squeeze.7} parent=0
    #allocation0 [shape = 'u8[4096]{0}', space=vmem, size = 0x1000, scoped, tag = 'operand span for operand 1']
    #allocation1 [shape = 's32[1]{0}', space=sflag, size = 0x4, scoped, tag = 'scoped memory for squeeze.7']
    #allocation2 [shape = 'u8[4096]{0}', space=vmem, size = 0x1000, scoped, tag = 'scoped mem for input reshape']
    %2 = vsyncpa [#allocation1], 0
    %s4 = sshll.u32 1, 1
    %s5 = ssub.s32 %s4, 1
    %v6 = vld [vmem:[%s0] sm:%s5]
    %7 = vst [vmem:[#allocation2] sm:%s5] %v6
    %v8 = vld [vmem:[#allocation2] sm:$0x1]
    %vm9 = vcmask 64512
    %10 = vst.msk [vmem:[#allocation0] sm:$0x1] %vm9, %v8
    %v11 = vld [vmem:[#allocation2] sm:$0x1]
    %12 = vrot.lane.b32.xlu0 %v11, 120
    %v13 = vpop.permute.xlu0 %12
    %vm14 = vcmask 64512
    %s15 = scalar_lea.vmem [#allocation0], 1
    %16 = vst.msk [vmem:[%s15] sm:$0x1] %vm14, %v13
    %v17 = vld [vmem:[#allocation2] sm:$0x1]
    %18 = vrot.lane.b32.xlu0 %v17, 112
    %v19 = vpop.permute.xlu0 %18
    %vm20 = vcmask 64512
    %s21 = scalar_lea.vmem [#allocation0], 2
    %22 = vst.msk [vmem:[%s21] sm:$0x1] %vm20, %v19
    %v23 = vld [vmem:[#allocation2] sm:$0x1]
    %24 = vrot.lane.b32.xlu0 %v23, 104
    %v25 = vpop.permute.xlu0 %24
    %vm26 = vcmask 64512
    %s27 = scalar_lea.vmem [#allocation0], 3
    %28 = vst.msk [vmem:[%s27] sm:$0x1] %vm26, %v25
    %v29 = vld [vmem:[#allocation2] sm:$0x1]
    %30 = vrot.lane.b32.xlu0 %v29, 96
    %v31 = vpop.permute.xlu0 %30
    %vm32 = vcmask 64512
    %s33 = scalar_lea.vmem [#allocation0], 4
    %34 = vst.msk [vmem:[%s33] sm:$0x1] %vm32, %v31
    %v35 = vld [vmem:[#allocation2] sm:$0x1]
    %36 = vrot.lane.b32.xlu0 %v35, 88
    %v37 = vpop.permute.xlu0 %36
    %vm38 = vcmask 64512
    %s39 = scalar_lea.vmem [#allocation0], 5
    %40 = vst.msk [vmem:[%s39] sm:$0x1] %vm38, %v37
    %v41 = vld [vmem:[#allocation2] sm:$0x1]
    %42 = vrot.lane.b32.xlu0 %v41, 80
    %v43 = vpop.permute.xlu0 %42
    %vm44 = vcmask 64512
    %s45 = scalar_lea.vmem [#allocation0], 6
    %46 = vst.msk [vmem:[%s45] sm:$0x1] %vm44, %v43
    %v47 = vld [vmem:[#allocation2] sm:$0x1]
    %48 = vrot.lane.b32.xlu0 %v47, 72
    %v49 = vpop.permute.xlu0 %48
    %vm50 = vcmask 64512
    %s51 = scalar_lea.vmem [#allocation0], 7
    %52 = vst.msk [vmem:[%s51] sm:$0x1] %vm50, %v49
    %s54 = ssub.s32 128, 128
    %55 = vsyncadd [#allocation1], %s54
    %s57 = sshll.u32 [#allocation0], 4
    %s58 = int_to_ptr.vmem [resolvable:$true] %s57
    %60 = dma.vmem_to_hbm [thread:$0]  %s58, 128, %s1, [#allocation1]
    %61 = dma.done [#allocation1], 128
    %62 = vsyncpa [#allocation1], 1

// kernel: forward.1
$region0: #{forward.1}
  #allocation0 [shape = 'u32[]', space=smem, size = 0x4, offset = 0x4, fixed_abs, tag = 'smem constant byte address 0x4 - core index']
  #allocation1 [shape = 'u32[144,128]{1,0:T(1,128)}', space=vmem, size = 0x12000, scoped, tag = 'internal scratch']
  #allocation2 [shape = 'f32[8,64]{1,0:T(8,128)}', space=vmem, size = 0x1000, scoped, tag = 'scratch operand']
  #allocation3 [shape = 'f32[8,64]{1,0:T(8,128)}', space=vmem, size = 0x1000, scoped, tag = 'scratch operand']
  %s0 = inlined_call_operand.vmem [shape: f32[8,48], index: 0, kind: input, shape index: {}]
  %s1 = inlined_call_operand.vmem [shape: f32[48,128], index: 1, kind: input, shape index: {}]
  %s2 = inlined_call_operand.vmem [shape: f32[32,128], index: 2, kind: input, shape index: {}]
  %s3 = inlined_call_operand.vmem [shape: f32[1,128], index: 3, kind: input, shape index: {}]
  %s4 = inlined_call_operand.vmem [shape: f32[48,128], index: 4, kind: input, shape index: {}]
  %s5 = inlined_call_operand.vmem [shape: f32[32,128], index: 5, kind: input, shape index: {}]
  %s6 = inlined_call_operand.vmem [shape: f32[1,128], index: 6, kind: input, shape index: {}]
  %s7 = inlined_call_operand.vmem [shape: f32[64,128], index: 7, kind: input, shape index: {}]
  %s8 = inlined_call_operand.vmem [shape: f32[32,128], index: 8, kind: input, shape index: {}]
  %s9 = inlined_call_operand.vmem [shape: f32[1,128], index: 9, kind: input, shape index: {}]
  %s10 = inlined_call_operand.vmem [shape: f32[64,128], index: 10, kind: input, shape index: {}]
  %s11 = inlined_call_operand.vmem [shape: f32[32,128], index: 11, kind: input, shape index: {}]
  %s12 = inlined_call_operand.vmem [shape: f32[1,128], index: 12, kind: input, shape index: {}]
  %s13 = inlined_call_operand.vmem [shape: f32[64,256], index: 13, kind: input, shape index: {}]
  %s14 = inlined_call_operand.vmem [shape: f32[128,128], index: 14, kind: input, shape index: {}]
  %s15 = inlined_call_operand.vmem [shape: f32[1,128], index: 15, kind: input, shape index: {}]
  %s16 = inlined_call_operand.vmem [shape: f32[2], index: 16, kind: input, shape index: {}]
  %s17 = inlined_call_operand.vmem [shape: f32[64,128], index: 17, kind: output, shape index: {}]
  %s18 = sld [smem:[#allocation0]]
  $region82: #{forward.1} parent=0
    _
  %s20 = ssub.s32 1, %s18
  %s21 = scalar_select 0, %s20, %s18
  $region1: #{forward.1} parent=0
    #allocation4 [shape = 'u8[512]{0}', space=smem, size = 0x200, scoped, tag = 'input window, operand 16, single buffered']
    #allocation5 [shape = 's32[1]{0}', space=sflag, size = 0x4, scoped, tag = 'scoped memory for forward.1']
    %22 = vsyncpa [#allocation5], 0
    // Predicated region
    $region2: #{forward.1} parent=1 // pred_check
      _
    $region3: #{forward.1} parent=1 // pred_check_branch
      %24 = sbr.rel (0) target = $region5
    $region4: #{forward.1} parent=1 // pred_region
      _
    $region5: #{forward.1} parent=1 // pred_fallthru
      _
    // Predicated region
    $region6: #{forward.1} parent=1 // pred_check
      _
    $region7: #{forward.1} parent=1 // pred_check_branch
      %26 = sbr.rel (0) target = $region9
    $region8: #{forward.1} parent=1 // pred_region
      _
    $region9: #{forward.1} parent=1 // pred_fallthru
      _
    // Predicated region
    $region10: #{forward.1} parent=1 // pred_check
      _
    $region11: #{forward.1} parent=1 // pred_check_branch
      %28 = sbr.rel (0) target = $region13
    $region12: #{forward.1} parent=1 // pred_region
      _
    $region13: #{forward.1} parent=1 // pred_fallthru
      _
    // Predicated region
    $region14: #{forward.1} parent=1 // pred_check
      _
    $region15: #{forward.1} parent=1 // pred_check_branch
      %30 = sbr.rel (0) target = $region17
    $region16: #{forward.1} parent=1 // pred_region
      _
    $region17: #{forward.1} parent=1 // pred_fallthru
      _
    // Predicated region
    $region18: #{forward.1} parent=1 // pred_check
      _
    $region19: #{forward.1} parent=1 // pred_check_branch
      %32 = sbr.rel (0) target = $region21
    $region20: #{forward.1} parent=1 // pred_region
      _
    $region21: #{forward.1} parent=1 // pred_fallthru
      _
    // Predicated region
    $region22: #{forward.1} parent=1 // pred_check
      _
    $region23: #{forward.1} parent=1 // pred_check_branch
      %34 = sbr.rel (0) target = $region25
    $region24: #{forward.1} parent=1 // pred_region
      _
    $region25: #{forward.1} parent=1 // pred_fallthru
      _
    // Predicated region
    $region26: #{forward.1} parent=1 // pred_check
      _
    $region27: #{forward.1} parent=1 // pred_check_branch
      %36 = sbr.rel (0) target = $region29
    $region28: #{forward.1} parent=1 // pred_region
      _
    $region29: #{forward.1} parent=1 // pred_fallthru
      _
    // Predicated region
    $region30: #{forward.1} parent=1 // pred_check
      _
    $region31: #{forward.1} parent=1 // pred_check_branch
      %38 = sbr.rel (0) target = $region33
    $region32: #{forward.1} parent=1 // pred_region
      _
    $region33: #{forward.1} parent=1 // pred_fallthru
      _
    // Predicated region
    $region34: #{forward.1} parent=1 // pred_check
      _
    $region35: #{forward.1} parent=1 // pred_check_branch
      %40 = sbr.rel (0) target = $region37
    $region36: #{forward.1} parent=1 // pred_region
      _
    $region37: #{forward.1} parent=1 // pred_fallthru
      _
    // Predicated region
    $region38: #{forward.1} parent=1 // pred_check
      _
    $region39: #{forward.1} parent=1 // pred_check_branch
      %42 = sbr.rel (0) target = $region41
    $region40: #{forward.1} parent=1 // pred_region
      _
    $region41: #{forward.1} parent=1 // pred_fallthru
      _
    // Predicated region
    $region42: #{forward.1} parent=1 // pred_check
      _
    $region43: #{forward.1} parent=1 // pred_check_branch
      %44 = sbr.rel (0) target = $region45
    $region44: #{forward.1} parent=1 // pred_region
      _
    $region45: #{forward.1} parent=1 // pred_fallthru
      _
    // Predicated region
    $region46: #{forward.1} parent=1 // pred_check
      _
    $region47: #{forward.1} parent=1 // pred_check_branch
      %46 = sbr.rel (0) target = $region49
    $region48: #{forward.1} parent=1 // pred_region
      _
    $region49: #{forward.1} parent=1 // pred_fallthru
      _
    // Predicated region
    $region50: #{forward.1} parent=1 // pred_check
      _
    $region51: #{forward.1} parent=1 // pred_check_branch
      %48 = sbr.rel (0) target = $region53
    $region52: #{forward.1} parent=1 // pred_region
      _
    $region53: #{forward.1} parent=1 // pred_fallthru
      _
    // Predicated region
    $region54: #{forward.1} parent=1 // pred_check
      _
    $region55: #{forward.1} parent=1 // pred_check_branch
      %50 = sbr.rel (0) target = $region57
    $region56: #{forward.1} parent=1 // pred_region
      _
    $region57: #{forward.1} parent=1 // pred_fallthru
      _
    // Predicated region
    $region58: #{forward.1} parent=1 // pred_check
      _
    $region59: #{forward.1} parent=1 // pred_check_branch
      %52 = sbr.rel (0) target = $region61
    $region60: #{forward.1} parent=1 // pred_region
      _
    $region61: #{forward.1} parent=1 // pred_fallthru
      _
    // Predicated region
    $region62: #{forward.1} parent=1 // pred_check
      _
    $region63: #{forward.1} parent=1 // pred_check_branch
      %54 = sbr.rel (0) target = $region65
    $region64: #{forward.1} parent=1 // pred_region
      _
    $region65: #{forward.1} parent=1 // pred_fallthru
      _
    // Predicated region
    $region66: #{forward.1} parent=1 // pred_check
      _
    $region67: #{forward.1} parent=1 // pred_check_branch
      %56 = sbr.rel (0) target = $region69
    $region68: #{forward.1} parent=1 // pred_region
      %s58 = ssub.s32 16, 16
      %59 = vsyncadd [#allocation5], %s58
      %s61 = sshll.u32 %s16, 4
      %s62 = int_to_ptr.vmem [resolvable:$true] %s61
      %64 = dma.vmem_to_smem %s62, 16, [#allocation4], [#allocation5]
    $region69: #{forward.1} parent=1 // pred_fallthru
      _
    // Predicated region
    $region70: #{forward.1} parent=1 // pred_check
      _
    $region71: #{forward.1} parent=1 // pred_check_branch
      %66 = sbr.rel (0) target = $region73
    $region72: #{forward.1} parent=1 // pred_region
      %67 = dma.done [#allocation5], 16
    $region73: #{forward.1} parent=1 // pred_fallthru
      _
    %68 = sfence
    %v69 = vld [vmem:[%s0] sm:$0xff]
    %v70 = vld [vmem:[%s1] sm:$0xff]
    %v71 = vld [vmem:[%s1 + $0x8] sm:$0xff]
    %v72 = vld [vmem:[%s1 + $0x10] sm:$0xff]
    %v73 = vld [vmem:[%s1 + $0x18] sm:$0xff]
    %v74 = vld [vmem:[%s1 + $0x20] sm:$0xff]
    %v75 = vld [vmem:[%s1 + $0x28] sm:$0xff]
    %v76 = vld [vmem:[%s2] sm:$0xff]
    %v77 = vld [vmem:[%s2 + $0x8] sm:$0xff]
    %v78 = vld [vmem:[%s2 + $0x10] sm:$0xff]
    %v79 = vld [vmem:[%s2 + $0x18] sm:$0xff]
    %v80 = vld [vmem:[%s3] sm:$0x1]
    %v81 = vld [vmem:[%s4] sm:$0xff]
    %v82 = vld [vmem:[%s4 + $0x8] sm:$0xff]
    %v83 = vld [vmem:[%s4 + $0x10] sm:$0xff]
    %v84 = vld [vmem:[%s4 + $0x18] sm:$0xff]
    %v85 = vld [vmem:[%s4 + $0x20] sm:$0xff]
    %v86 = vld [vmem:[%s4 + $0x28] sm:$0xff]
    %v87 = vld [vmem:[%s5] sm:$0xff]
    %v88 = vld [vmem:[%s5 + $0x8] sm:$0xff]
    %v89 = vld [vmem:[%s5 + $0x10] sm:$0xff]
    %v90 = vld [vmem:[%s5 + $0x18] sm:$0xff]
    %v91 = vld [vmem:[%s6] sm:$0x1]
    %v93 = vlaneseq
    %v94 = vshrl.u32 %v93, 7
    %v95 = vsub.s32 0, %v94
    %v96 = vrot.slane %v80, %v95
    %vm98 = vcmask 392192
    %v100 = vsel %vm98, %v69, 0
    %102 = vmatprep.subr.mxu0 0.0
    %103 = vmatpush1.msra.mxu0 0.0
    %104 = vmatprep.subr.mxu0 0.0
    %105 = vmatpush1.msra.mxu0 0.0
    %106 = vmatprep.subr.mxu0 0.0
    %107 = vmatpush1.msra.mxu0 0.0
    %108 = vmatprep.subr.mxu0 0.0
    %109 = vmatpush1.msra.mxu0 0.0
    %110 = vmatprep.subr.mxu0 0.0
    %111 = vmatpush1.msra.mxu0 0.0
    %112 = vmatprep.subr.mxu0 0.0
    %113 = vmatpush1.msra.mxu0 0.0
    %114 = vmatprep.subr.mxu0 0.0
    %115 = vmatpush1.msra.mxu0 0.0
    %116 = vmatprep.subr.mxu0 0.0
    %117 = vmatpush1.msra.mxu0 0.0
    %118 = vmatprep.subr.mxu0 0.0
    %119 = vmatpush1.msra.mxu0 0.0
    %120 = vmatprep.subr.mxu0 0.0
    %121 = vmatpush1.msra.mxu0 0.0
    %122 = vmatprep.subr.mxu0 0.0
    %123 = vmatpush1.msra.mxu0 %v75
    %124 = vmatprep.subr.mxu0 0.0
    %125 = vmatpush1.msra.mxu0 %v74
    %126 = vmatprep.subr.mxu0 0.0
    %127 = vmatpush1.msra.mxu0 %v73
    %128 = vmatprep.subr.mxu0 0.0
    %129 = vmatpush1.msra.mxu0 %v72
    %130 = vmatprep.subr.mxu0 0.0
    %131 = vmatpush1.msra.mxu0 %v71
    %132 = vmatprep.subr.mxu0 0.0
    %133 = vmatpush1.msra.mxu0 %v70
    %134 = vmatprep.subr.mxu0 0.0
    %135 = vmatpush2.msra.mxu0 0.0
    %136 = vmatprep.subr.mxu0 0.0
    %137 = vmatpush2.msra.mxu0 0.0
    %138 = vmatprep.subr.mxu0 0.0
    %139 = vmatpush2.msra.mxu0 0.0
    %140 = vmatprep.subr.mxu0 0.0
    %141 = vmatpush2.msra.mxu0 0.0
    %142 = vmatprep.subr.mxu0 0.0
    %143 = vmatpush2.msra.mxu0 0.0
    %144 = vmatprep.subr.mxu0 0.0
    %145 = vmatpush2.msra.mxu0 0.0
    %146 = vmatprep.subr.mxu0 0.0
    %147 = vmatpush2.msra.mxu0 0.0
    %148 = vmatprep.subr.mxu0 0.0
    %149 = vmatpush2.msra.mxu0 0.0
    %150 = vmatprep.subr.mxu0 0.0
    %151 = vmatpush2.msra.mxu0 0.0
    %152 = vmatprep.subr.mxu0 0.0
    %153 = vmatpush2.msra.mxu0 0.0
    %154 = vmatprep.subr.mxu0 0.0
    %155 = vmatpush2.msra.mxu0 0.0
    %156 = vmatprep.subr.mxu0 0.0
    %157 = vmatpush2.msra.mxu0 0.0
    %158 = vmatprep.subr.mxu0 0.0
    %159 = vmatpush2.msra.mxu0 0.0
    %160 = vmatprep.subr.mxu0 0.0
    %161 = vmatpush2.msra.mxu0 0.0
    %162 = vmatprep.subr.mxu0 0.0
    %163 = vmatpush2.msra.mxu0 0.0
    %164 = vmatprep.subr.mxu0 0.0
    %165 = vmatpush2.msra.mxu0 0.0
    %166 = vmatprep.mubr.f32.mxu0 0.0
    %167 = vmatmul.mubr.f32.gmra.mxu0 %v100
    %v168 = vpop.f32.mrf.mxu0
    %v169 = vadd.f32 %v96, %v168
    %v170 = vpop.f32.mrf.mxu0
    %171 = vdwg.mxu0
    %v173 = vlaneseq
    %v174 = vshrl.u32 %v173, 7
    %v175 = vsub.s32 0, %v174
    %v176 = vrot.slane %v91, %v175
    %178 = vmatprep.subr.mxu0 0.0
    %179 = vmatpush1.msra.mxu0 0.0
    %180 = vmatprep.subr.mxu0 0.0
    %181 = vmatpush1.msra.mxu0 0.0
    %182 = vmatprep.subr.mxu0 0.0
    %183 = vmatpush1.msra.mxu0 0.0
    %184 = vmatprep.subr.mxu0 0.0
    %185 = vmatpush1.msra.mxu0 0.0
    %186 = vmatprep.subr.mxu0 0.0
    %187 = vmatpush1.msra.mxu0 0.0
    %188 = vmatprep.subr.mxu0 0.0
    %189 = vmatpush1.msra.mxu0 0.0
    %190 = vmatprep.subr.mxu0 0.0
    %191 = vmatpush1.msra.mxu0 0.0
    %192 = vmatprep.subr.mxu0 0.0
    %193 = vmatpush1.msra.mxu0 0.0
    %194 = vmatprep.subr.mxu0 0.0
    %195 = vmatpush1.msra.mxu0 0.0
    %196 = vmatprep.subr.mxu0 0.0
    %197 = vmatpush1.msra.mxu0 0.0
    %198 = vmatprep.subr.mxu0 0.0
    %199 = vmatpush1.msra.mxu0 %v86
    %200 = vmatprep.subr.mxu0 0.0
    %201 = vmatpush1.msra.mxu0 %v85
    %202 = vmatprep.subr.mxu0 0.0
    %203 = vmatpush1.msra.mxu0 %v84
    %204 = vmatprep.subr.mxu0 0.0
    %205 = vmatpush1.msra.mxu0 %v83
    %206 = vmatprep.subr.mxu0 0.0
    %207 = vmatpush1.msra.mxu0 %v82
    %208 = vmatprep.subr.mxu0 0.0
    %209 = vmatpush1.msra.mxu0 %v81
    %210 = vmatprep.subr.mxu0 0.0
    %211 = vmatpush2.msra.mxu0 0.0
    %212 = vmatprep.subr.mxu0 0.0
    %213 = vmatpush2.msra.mxu0 0.0
    %214 = vmatprep.subr.mxu0 0.0
    %215 = vmatpush2.msra.mxu0 0.0
    %216 = vmatprep.subr.mxu0 0.0
    %217 = vmatpush2.msra.mxu0 0.0
    %218 = vmatprep.subr.mxu0 0.0
    %219 = vmatpush2.msra.mxu0 0.0
    %220 = vmatprep.subr.mxu0 0.0
    %221 = vmatpush2.msra.mxu0 0.0
    %222 = vmatprep.subr.mxu0 0.0
    %223 = vmatpush2.msra.mxu0 0.0
    %224 = vmatprep.subr.mxu0 0.0
    %225 = vmatpush2.msra.mxu0 0.0
    %226 = vmatprep.subr.mxu0 0.0
    %227 = vmatpush2.msra.mxu0 0.0
    %228 = vmatprep.subr.mxu0 0.0
    %229 = vmatpush2.msra.mxu0 0.0
    %230 = vmatprep.subr.mxu0 0.0
    %231 = vmatpush2.msra.mxu0 0.0
    %232 = vmatprep.subr.mxu0 0.0
    %233 = vmatpush2.msra.mxu0 0.0
    %234 = vmatprep.subr.mxu0 0.0
    %235 = vmatpush2.msra.mxu0 0.0
    %236 = vmatprep.subr.mxu0 0.0
    %237 = vmatpush2.msra.mxu0 0.0
    %238 = vmatprep.subr.mxu0 0.0
    %239 = vmatpush2.msra.mxu0 0.0
    %240 = vmatprep.subr.mxu0 0.0
    %241 = vmatpush2.msra.mxu0 0.0
    %242 = vmatprep.mubr.f32.mxu0 0.0
    %243 = vmatmul.mubr.f32.gmra.mxu0 %v100
    %v244 = vpop.f32.mrf.mxu0
    %v245 = vadd.f32 %v176, %v244
    %v246 = vpop.f32.mrf.mxu0
    %247 = vdwg.mxu0
    %vm248 = vcmask 261120
    %v250 = vsel %vm248, 0.0, 0
    %252 = vmatprep.subr.mxu0 0.0
    %253 = vmatpush1.msra.mxu0 0.0
    %254 = vmatprep.subr.mxu0 0.0
    %255 = vmatpush1.msra.mxu0 0.0
    %256 = vmatprep.subr.mxu0 0.0
    %257 = vmatpush1.msra.mxu0 0.0
    %258 = vmatprep.subr.mxu0 0.0
    %259 = vmatpush1.msra.mxu0 0.0
    %260 = vmatprep.subr.mxu0 0.0
    %261 = vmatpush1.msra.mxu0 0.0
    %262 = vmatprep.subr.mxu0 0.0
    %263 = vmatpush1.msra.mxu0 0.0
    %264 = vmatprep.subr.mxu0 0.0
    %265 = vmatpush1.msra.mxu0 0.0
    %266 = vmatprep.subr.mxu0 0.0
    %267 = vmatpush1.msra.mxu0 0.0
    %268 = vmatprep.subr.mxu0 0.0
    %269 = vmatpush1.msra.mxu0 0.0
    %270 = vmatprep.subr.mxu0 0.0
    %271 = vmatpush1.msra.mxu0 0.0
    %272 = vmatprep.subr.mxu0 0.0
    %273 = vmatpush1.msra.mxu0 0.0
    %274 = vmatprep.subr.mxu0 0.0
    %275 = vmatpush1.msra.mxu0 0.0
    %276 = vmatprep.subr.mxu0 0.0
    %277 = vmatpush1.msra.mxu0 %v79
    %278 = vmatprep.subr.mxu0 0.0
    %279 = vmatpush1.msra.mxu0 %v78
    %280 = vmatprep.subr.mxu0 0.0
    %281 = vmatpush1.msra.mxu0 %v77
    %282 = vmatprep.subr.mxu0 0.0
    %283 = vmatpush1.msra.mxu0 %v76
    %284 = vmatprep.subr.mxu0 0.0
    %285 = vmatpush2.msra.mxu0 0.0
    %286 = vmatprep.subr.mxu0 0.0
    %287 = vmatpush2.msra.mxu0 0.0
    %288 = vmatprep.subr.mxu0 0.0
    %289 = vmatpush2.msra.mxu0 0.0
    %290 = vmatprep.subr.mxu0 0.0
    %291 = vmatpush2.msra.mxu0 0.0
    %292 = vmatprep.subr.mxu0 0.0
    %293 = vmatpush2.msra.mxu0 0.0
    %294 = vmatprep.subr.mxu0 0.0
    %295 = vmatpush2.msra.mxu0 0.0
    %296 = vmatprep.subr.mxu0 0.0
    %297 = vmatpush2.msra.mxu0 0.0
    %298 = vmatprep.subr.mxu0 0.0
    %299 = vmatpush2.msra.mxu0 0.0
    %300 = vmatprep.subr.mxu0 0.0
    %301 = vmatpush2.msra.mxu0 0.0
    %302 = vmatprep.subr.mxu0 0.0
    %303 = vmatpush2.msra.mxu0 0.0
    %304 = vmatprep.subr.mxu0 0.0
    %305 = vmatpush2.msra.mxu0 0.0
    %306 = vmatprep.subr.mxu0 0.0
    %307 = vmatpush2.msra.mxu0 0.0
    %308 = vmatprep.subr.mxu0 0.0
    %309 = vmatpush2.msra.mxu0 0.0
    %310 = vmatprep.subr.mxu0 0.0
    %311 = vmatpush2.msra.mxu0 0.0
    %312 = vmatprep.subr.mxu0 0.0
    %313 = vmatpush2.msra.mxu0 0.0
    %314 = vmatprep.subr.mxu0 0.0
    %315 = vmatpush2.msra.mxu0 0.0
    %316 = vmatprep.mubr.f32.mxu0 0.0
    %317 = vmatmul.mubr.f32.gmra.mxu0 %v250
    %v318 = vpop.f32.mrf.mxu0
    %v319 = vadd.f32 0.0, %v318
    %v320 = vpop.f32.mrf.mxu0
    %321 = vdwg.mxu0
    %v322 = vadd.f32 %v169, %v319
    %v323 = vxor.u32 %v322, 2147483648
    %v324 = vmul.f32 %v323, 1.442695
    %v325 = vpow.pop %v324
    %v326 = vadd.f32 %v325, 1.0
    %v327 = vrcp.pop %v326
    %v328 = vmul.f32 1.0, %v327
    %v329 = vtanh.pop %v322
    %v330 = vmul.f32 %v328, 0.0
    %332 = vrot.lane.b32.xlu0 %v329, 64
    %v333 = vpop.permute.xlu0 %332
    %v335 = vmul.f32 %v328, %v333
    %337 = vrot.lane.b32.xlu0 %v335, 32
    %v338 = vpop.permute.xlu0 %337
    %v340 = vadd.f32 %v330, %v338
    %v341 = vtanh.pop %v340
    %343 = vrot.lane.b32.xlu0 %v341, 64
    %v344 = vpop.permute.xlu0 %343
    %v346 = vmul.f32 %v328, %v344
    %348 = vrot.lane.b32.xlu0 %v346, 64
    %v349 = vpop.permute.xlu0 %348
    %vm351 = vcmask 516352
    %352 = vst.msk [vmem:[#allocation2] sm:$0x1] %vm351, %v349
    %353 = vrot.lane.b32.xlu0 %v346, 32
    %v354 = vpop.permute.xlu0 %353
    %v355 = vsel %vm248, %v354, 0
    %357 = vmatprep.subr.mxu0 0.0
    %358 = vmatpush1.msra.mxu0 0.0
    %359 = vmatprep.subr.mxu0 0.0
    %360 = vmatpush1.msra.mxu0 0.0
    %361 = vmatprep.subr.mxu0 0.0
    %362 = vmatpush1.msra.mxu0 0.0
    %363 = vmatprep.subr.mxu0 0.0
    %364 = vmatpush1.msra.mxu0 0.0
    %365 = vmatprep.subr.mxu0 0.0
    %366 = vmatpush1.msra.mxu0 0.0
    %367 = vmatprep.subr.mxu0 0.0
    %368 = vmatpush1.msra.mxu0 0.0
    %369 = vmatprep.subr.mxu0 0.0
    %370 = vmatpush1.msra.mxu0 0.0
    %371 = vmatprep.subr.mxu0 0.0
    %372 = vmatpush1.msra.mxu0 0.0
    %373 = vmatprep.subr.mxu0 0.0
    %374 = vmatpush1.msra.mxu0 0.0
    %375 = vmatprep.subr.mxu0 0.0
    %376 = vmatpush1.msra.mxu0 0.0
    %377 = vmatprep.subr.mxu0 0.0
    %378 = vmatpush1.msra.mxu0 0.0
    %379 = vmatprep.subr.mxu0 0.0
    %380 = vmatpush1.msra.mxu0 0.0
    %381 = vmatprep.subr.mxu0 0.0
    %382 = vmatpush1.msra.mxu0 %v79
    %383 = vmatprep.subr.mxu0 0.0
    %384 = vmatpush1.msra.mxu0 %v78
    %385 = vmatprep.subr.mxu0 0.0
    %386 = vmatpush1.msra.mxu0 %v77
    %387 = vmatprep.subr.mxu0 0.0
    %388 = vmatpush1.msra.mxu0 %v76
    %389 = vmatprep.subr.mxu0 0.0
    %390 = vmatpush2.msra.mxu0 0.0
    %391 = vmatprep.subr.mxu0 0.0
    %392 = vmatpush2.msra.mxu0 0.0
    %393 = vmatprep.subr.mxu0 0.0
    %394 = vmatpush2.msra.mxu0 0.0
    %395 = vmatprep.subr.mxu0 0.0
    %396 = vmatpush2.msra.mxu0 0.0
    %397 = vmatprep.subr.mxu0 0.0
    %398 = vmatpush2.msra.mxu0 0.0
    %399 = vmatprep.subr.mxu0 0.0
    %400 = vmatpush2.msra.mxu0 0.0
    %401 = vmatprep.subr.mxu0 0.0
    %402 = vmatpush2.msra.mxu0 0.0
    %403 = vmatprep.subr.mxu0 0.0
    %404 = vmatpush2.msra.mxu0 0.0
    %405 = vmatprep.subr.mxu0 0.0
    %406 = vmatpush2.msra.mxu0 0.0
    %407 = vmatprep.subr.mxu0 0.0
    %408 = vmatpush2.msra.mxu0 0.0
    %409 = vmatprep.subr.mxu0 0.0
    %410 = vmatpush2.msra.mxu0 0.0
    %411 = vmatprep.subr.mxu0 0.0
    %412 = vmatpush2.msra.mxu0 0.0
    %413 = vmatprep.subr.mxu0 0.0
    %414 = vmatpush2.msra.mxu0 0.0
    %415 = vmatprep.subr.mxu0 0.0
    %416 = vmatpush2.msra.mxu0 0.0
    %417 = vmatprep.subr.mxu0 0.0
    %418 = vmatpush2.msra.mxu0 0.0
    %419 = vmatprep.subr.mxu0 0.0
    %420 = vmatpush2.msra.mxu0 0.0
    %421 = vmatprep.mubr.f32.mxu0 0.0
    %422 = vmatmul.mubr.f32.gmra.mxu0 %v355
    %v423 = vpop.f32.mrf.mxu0
    %v424 = vadd.f32 0.0, %v423
    %v425 = vpop.f32.mrf.mxu0
    %426 = vdwg.mxu0
    %v428 = vrot.slane %v424, 7
    %v430 = vadd.f32 %v169, %v428
    %v431 = vxor.u32 %v430, 2147483648
    %v432 = vmul.f32 %v431, 1.442695
    %v433 = vpow.pop %v432
    %v434 = vadd.f32 %v433, 1.0
    %v435 = vrcp.pop %v434
    %v436 = vmul.f32 1.0, %v435
    %v437 = vtanh.pop %v430
    %v439 = vrot.slane %v340, 7
    %v441 = vmul.f32 %v436, %v439
    %443 = vrot.lane.b32.xlu0 %v437, 64
    %v444 = vpop.permute.xlu0 %443
    %v446 = vmul.f32 %v436, %v444
    %448 = vrot.lane.b32.xlu0 %v446, 32
    %v449 = vpop.permute.xlu0 %448
    %v451 = vadd.f32 %v441, %v449
    %v452 = vtanh.pop %v451
    %454 = vrot.lane.b32.xlu0 %v452, 64
    %v455 = vpop.permute.xlu0 %454
    %v457 = vmul.f32 %v436, %v455
    %459 = vrot.lane.b32.xlu0 %v457, 64
    %v460 = vpop.permute.xlu0 %459
    %vm462 = vcmask 517377
    %463 = vst.msk [vmem:[#allocation2] sm:$0x2] %vm462, %v460
    %v464 = vrot.slane %v457, 1
    %465 = vrot.lane.b32.xlu0 %v464, 32
    %v466 = vpop.permute.xlu0 %465
    %v467 = vsel %vm248, %v466, 0
    %469 = vmatprep.subr.mxu0 0.0
    %470 = vmatpush1.msra.mxu0 0.0
    %471 = vmatprep.subr.mxu0 0.0
    %472 = vmatpush1.msra.mxu0 0.0
    %473 = vmatprep.subr.mxu0 0.0
    %474 = vmatpush1.msra.mxu0 0.0
    %475 = vmatprep.subr.mxu0 0.0
    %476 = vmatpush1.msra.mxu0 0.0
    %477 = vmatprep.subr.mxu0 0.0
    %478 = vmatpush1.msra.mxu0 0.0
    %479 = vmatprep.subr.mxu0 0.0
    %480 = vmatpush1.msra.mxu0 0.0
    %481 = vmatprep.subr.mxu0 0.0
    %482 = vmatpush1.msra.mxu0 0.0
    %483 = vmatprep.subr.mxu0 0.0
    %484 = vmatpush1.msra.mxu0 0.0
    %485 = vmatprep.subr.mxu0 0.0
    %486 = vmatpush1.msra.mxu0 0.0
    %487 = vmatprep.subr.mxu0 0.0
    %488 = vmatpush1.msra.mxu0 0.0
    %489 = vmatprep.subr.mxu0 0.0
    %490 = vmatpush1.msra.mxu0 0.0
    %491 = vmatprep.subr.mxu0 0.0
    %492 = vmatpush1.msra.mxu0 0.0
    %493 = vmatprep.subr.mxu0 0.0
    %494 = vmatpush1.msra.mxu0 %v79
    %495 = vmatprep.subr.mxu0 0.0
    %496 = vmatpush1.msra.mxu0 %v78
    %497 = vmatprep.subr.mxu0 0.0
    %498 = vmatpush1.msra.mxu0 %v77
    %499 = vmatprep.subr.mxu0 0.0
    %500 = vmatpush1.msra.mxu0 %v76
    %501 = vmatprep.subr.mxu0 0.0
    %502 = vmatpush2.msra.mxu0 0.0
    %503 = vmatprep.subr.mxu0 0.0
    %504 = vmatpush2.msra.mxu0 0.0
    %505 = vmatprep.subr.mxu0 0.0
    %506 = vmatpush2.msra.mxu0 0.0
    %507 = vmatprep.subr.mxu0 0.0
    %508 = vmatpush2.msra.mxu0 0.0
    %509 = vmatprep.subr.mxu0 0.0
    %510 = vmatpush2.msra.mxu0 0.0
    %511 = vmatprep.subr.mxu0 0.0
    %512 = vmatpush2.msra.mxu0 0.0
    %513 = vmatprep.subr.mxu0 0.0
    %514 = vmatpush2.msra.mxu0 0.0
    %515 = vmatprep.subr.mxu0 0.0
    %516 = vmatpush2.msra.mxu0 0.0
    %517 = vmatprep.subr.mxu0 0.0
    %518 = vmatpush2.msra.mxu0 0.0
    %519 = vmatprep.subr.mxu0 0.0
    %520 = vmatpush2.msra.mxu0 0.0
    %521 = vmatprep.subr.mxu0 0.0
    %522 = vmatpush2.msra.mxu0 0.0
    %523 = vmatprep.subr.mxu0 0.0
    %524 = vmatpush2.msra.mxu0 0.0
    %525 = vmatprep.subr.mxu0 0.0
    %526 = vmatpush2.msra.mxu0 0.0
    %527 = vmatprep.subr.mxu0 0.0
    %528 = vmatpush2.msra.mxu0 0.0
    %529 = vmatprep.subr.mxu0 0.0
    %530 = vmatpush2.msra.mxu0 0.0
    %531 = vmatprep.subr.mxu0 0.0
    %532 = vmatpush2.msra.mxu0 0.0
    %533 = vmatprep.mubr.f32.mxu0 0.0
    %534 = vmatmul.mubr.f32.gmra.mxu0 %v467
    %v535 = vpop.f32.mrf.mxu0
    %v536 = vadd.f32 0.0, %v535
    %v537 = vpop.f32.mrf.mxu0
    %538 = vdwg.mxu0
    %v540 = vrot.slane %v536, 6
    %v542 = vadd.f32 %v169, %v540
    %v543 = vxor.u32 %v542, 2147483648
    %v544 = vmul.f32 %v543, 1.442695
    %v545 = vpow.pop %v544
    %v546 = vadd.f32 %v545, 1.0
    %v547 = vrcp.pop %v546
    %v548 = vmul.f32 1.0, %v547
    %v549 = vtanh.pop %v542
    %v551 = vrot.slane %v451, 7
    %v553 = vmul.f32 %v548, %v551
    %555 = vrot.lane.b32.xlu0 %v549, 64
    %v556 = vpop.permute.xlu0 %555
    %v558 = vmul.f32 %v548, %v556
    %560 = vrot.lane.b32.xlu0 %v558, 32
    %v561 = vpop.permute.xlu0 %560
    %v563 = vadd.f32 %v553, %v561
    %v564 = vtanh.pop %v563
    %566 = vrot.lane.b32.xlu0 %v564, 64
    %v567 = vpop.permute.xlu0 %566
    %v569 = vmul.f32 %v548, %v567
    %571 = vrot.lane.b32.xlu0 %v569, 64
    %v572 = vpop.permute.xlu0 %571
    %vm574 = vcmask 518402
    %575 = vst.msk [vmem:[#allocation2] sm:$0x4] %vm574, %v572
    %v576 = vrot.slane %v569, 2
    %577 = vrot.lane.b32.xlu0 %v576, 32
    %v578 = vpop.permute.xlu0 %577
    %v579 = vsel %vm248, %v578, 0
    %581 = vmatprep.subr.mxu0 0.0
    %582 = vmatpush1.msra.mxu0 0.0
    %583 = vmatprep.subr.mxu0 0.0
    %584 = vmatpush1.msra.mxu0 0.0
    %585 = vmatprep.subr.mxu0 0.0
    %586 = vmatpush1.msra.mxu0 0.0
    %587 = vmatprep.subr.mxu0 0.0
    %588 = vmatpush1.msra.mxu0 0.0
    %589 = vmatprep.subr.mxu0 0.0
    %590 = vmatpush1.msra.mxu0 0.0
    %591 = vmatprep.subr.mxu0 0.0
    %592 = vmatpush1.msra.mxu0 0.0
    %593 = vmatprep.subr.mxu0 0.0
    %594 = vmatpush1.msra.mxu0 0.0
    %595 = vmatprep.subr.mxu0 0.0
    %596 = vmatpush1.msra.mxu0 0.0
    %597 = vmatprep.subr.mxu0 0.0
    %598 = vmatpush1.msra.mxu0 0.0
    %599 = vmatprep.subr.mxu0 0.0
    %600 = vmatpush1.msra.mxu0 0.0
    %601 = vmatprep.subr.mxu0 0.0
    %602 = vmatpush1.msra.mxu0 0.0
    %603 = vmatprep.subr.mxu0 0.0
    %604 = vmatpush1.msra.mxu0 0.0
    %605 = vmatprep.subr.mxu0 0.0
    %606 = vmatpush1.msra.mxu0 %v79
    %607 = vmatprep.subr.mxu0 0.0
    %608 = vmatpush1.msra.mxu0 %v78
    %609 = vmatprep.subr.mxu0 0.0
    %610 = vmatpush1.msra.mxu0 %v77
    %611 = vmatprep.subr.mxu0 0.0
    %612 = vmatpush1.msra.mxu0 %v76
    %613 = vmatprep.subr.mxu0 0.0
    %614 = vmatpush2.msra.mxu0 0.0
    %615 = vmatprep.subr.mxu0 0.0
    %616 = vmatpush2.msra.mxu0 0.0
    %617 = vmatprep.subr.mxu0 0.0
    %618 = vmatpush2.msra.mxu0 0.0
    %619 = vmatprep.subr.mxu0 0.0
    %620 = vmatpush2.msra.mxu0 0.0
    %621 = vmatprep.subr.mxu0 0.0
    %622 = vmatpush2.msra.mxu0 0.0
    %623 = vmatprep.subr.mxu0 0.0
    %624 = vmatpush2.msra.mxu0 0.0
    %625 = vmatprep.subr.mxu0 0.0
    %626 = vmatpush2.msra.mxu0 0.0
    %627 = vmatprep.subr.mxu0 0.0
    %628 = vmatpush2.msra.mxu0 0.0
    %629 = vmatprep.subr.mxu0 0.0
    %630 = vmatpush2.msra.mxu0 0.0
    %631 = vmatprep.subr.mxu0 0.0
    %632 = vmatpush2.msra.mxu0 0.0
    %633 = vmatprep.subr.mxu0 0.0
    %634 = vmatpush2.msra.mxu0 0.0
    %635 = vmatprep.subr.mxu0 0.0
    %636 = vmatpush2.msra.mxu0 0.0
    %637 = vmatprep.subr.mxu0 0.0
    %638 = vmatpush2.msra.mxu0 0.0
    %639 = vmatprep.subr.mxu0 0.0
    %640 = vmatpush2.msra.mxu0 0.0
    %641 = vmatprep.subr.mxu0 0.0
    %642 = vmatpush2.msra.mxu0 0.0
    %643 = vmatprep.subr.mxu0 0.0
    %644 = vmatpush2.msra.mxu0 0.0
    %645 = vmatprep.mubr.f32.mxu0 0.0
    %646 = vmatmul.mubr.f32.gmra.mxu0 %v579
    %v647 = vpop.f32.mrf.mxu0
    %v648 = vadd.f32 0.0, %v647
    %v649 = vpop.f32.mrf.mxu0
    %650 = vdwg.mxu0
    %v652 = vrot.slane %v648, 5
    %v654 = vadd.f32 %v169, %v652
    %v655 = vxor.u32 %v654, 2147483648
    %v656 = vmul.f32 %v655, 1.442695
    %v657 = vpow.pop %v656
    %v658 = vadd.f32 %v657, 1.0
    %v659 = vrcp.pop %v658
    %v660 = vmul.f32 1.0, %v659
    %v661 = vtanh.pop %v654
    %v663 = vrot.slane %v563, 7
    %v665 = vmul.f32 %v660, %v663
    %667 = vrot.lane.b32.xlu0 %v661, 64
    %v668 = vpop.permute.xlu0 %667
    %v670 = vmul.f32 %v660, %v668
    %672 = vrot.lane.b32.xlu0 %v670, 32
    %v673 = vpop.permute.xlu0 %672
    %v675 = vadd.f32 %v665, %v673
    %v676 = vtanh.pop %v675
    %678 = vrot.lane.b32.xlu0 %v676, 64
    %v679 = vpop.permute.xlu0 %678
    %v681 = vmul.f32 %v660, %v679
    %683 = vrot.lane.b32.xlu0 %v681, 64
    %v684 = vpop.permute.xlu0 %683
    %vm686 = vcmask 519427
    %687 = vst.msk [vmem:[#allocation2] sm:$0x8] %vm686, %v684
    %v688 = vrot.slane %v681, 3
    %689 = vrot.lane.b32.xlu0 %v688, 32
    %v690 = vpop.permute.xlu0 %689
    %v691 = vsel %vm248, %v690, 0
    %693 = vmatprep.subr.mxu0 0.0
    %694 = vmatpush1.msra.mxu0 0.0
    %695 = vmatprep.subr.mxu0 0.0
    %696 = vmatpush1.msra.mxu0 0.0
    %697 = vmatprep.subr.mxu0 0.0
    %698 = vmatpush1.msra.mxu0 0.0
    %699 = vmatprep.subr.mxu0 0.0
    %700 = vmatpush1.msra.mxu0 0.0
    %701 = vmatprep.subr.mxu0 0.0
    %702 = vmatpush1.msra.mxu0 0.0
    %703 = vmatprep.subr.mxu0 0.0
    %704 = vmatpush1.msra.mxu0 0.0
    %705 = vmatprep.subr.mxu0 0.0
    %706 = vmatpush1.msra.mxu0 0.0
    %707 = vmatprep.subr.mxu0 0.0
    %708 = vmatpush1.msra.mxu0 0.0
    %709 = vmatprep.subr.mxu0 0.0
    %710 = vmatpush1.msra.mxu0 0.0
    %711 = vmatprep.subr.mxu0 0.0
    %712 = vmatpush1.msra.mxu0 0.0
    %713 = vmatprep.subr.mxu0 0.0
    %714 = vmatpush1.msra.mxu0 0.0
    %715 = vmatprep.subr.mxu0 0.0
    %716 = vmatpush1.msra.mxu0 0.0
    %717 = vmatprep.subr.mxu0 0.0
    %718 = vmatpush1.msra.mxu0 %v79
    %719 = vmatprep.subr.mxu0 0.0
    %720 = vmatpush1.msra.mxu0 %v78
    %721 = vmatprep.subr.mxu0 0.0
    %722 = vmatpush1.msra.mxu0 %v77
    %723 = vmatprep.subr.mxu0 0.0
    %724 = vmatpush1.msra.mxu0 %v76
    %725 = vmatprep.subr.mxu0 0.0
    %726 = vmatpush2.msra.mxu0 0.0
    %727 = vmatprep.subr.mxu0 0.0
    %728 = vmatpush2.msra.mxu0 0.0
    %729 = vmatprep.subr.mxu0 0.0
    %730 = vmatpush2.msra.mxu0 0.0
    %731 = vmatprep.subr.mxu0 0.0
    %732 = vmatpush2.msra.mxu0 0.0
    %733 = vmatprep.subr.mxu0 0.0
    %734 = vmatpush2.msra.mxu0 0.0
    %735 = vmatprep.subr.mxu0 0.0
    %736 = vmatpush2.msra.mxu0 0.0
    %737 = vmatprep.subr.mxu0 0.0
    %738 = vmatpush2.msra.mxu0 0.0
    %739 = vmatprep.subr.mxu0 0.0
    %740 = vmatpush2.msra.mxu0 0.0
    %741 = vmatprep.subr.mxu0 0.0
    %742 = vmatpush2.msra.mxu0 0.0
    %743 = vmatprep.subr.mxu0 0.0
    %744 = vmatpush2.msra.mxu0 0.0
    %745 = vmatprep.subr.mxu0 0.0
    %746 = vmatpush2.msra.mxu0 0.0
    %747 = vmatprep.subr.mxu0 0.0
    %748 = vmatpush2.msra.mxu0 0.0
    %749 = vmatprep.subr.mxu0 0.0
    %750 = vmatpush2.msra.mxu0 0.0
    %751 = vmatprep.subr.mxu0 0.0
    %752 = vmatpush2.msra.mxu0 0.0
    %753 = vmatprep.subr.mxu0 0.0
    %754 = vmatpush2.msra.mxu0 0.0
    %755 = vmatprep.subr.mxu0 0.0
    %756 = vmatpush2.msra.mxu0 0.0
    %757 = vmatprep.mubr.f32.mxu0 0.0
    %758 = vmatmul.mubr.f32.gmra.mxu0 %v691
    %v759 = vpop.f32.mrf.mxu0
    %v760 = vadd.f32 0.0, %v759
    %v761 = vpop.f32.mrf.mxu0
    %762 = vdwg.mxu0
    %v764 = vrot.slane %v760, 4
    %v766 = vadd.f32 %v169, %v764
    %v767 = vxor.u32 %v766, 2147483648
    %v768 = vmul.f32 %v767, 1.442695
    %v769 = vpow.pop %v768
    %v770 = vadd.f32 %v769, 1.0
    %v771 = vrcp.pop %v770
    %v772 = vmul.f32 1.0, %v771
    %v773 = vtanh.pop %v766
    %v775 = vrot.slane %v675, 7
    %v777 = vmul.f32 %v772, %v775
    %779 = vrot.lane.b32.xlu0 %v773, 64
    %v780 = vpop.permute.xlu0 %779
    %v782 = vmul.f32 %v772, %v780
    %784 = vrot.lane.b32.xlu0 %v782, 32
    %v785 = vpop.permute.xlu0 %784
    %v787 = vadd.f32 %v777, %v785
    %v788 = vtanh.pop %v787
    %790 = vrot.lane.b32.xlu0 %v788, 64
    %v791 = vpop.permute.xlu0 %790
    %v793 = vmul.f32 %v772, %v791
    %795 = vrot.lane.b32.xlu0 %v793, 64
    %v796 = vpop.permute.xlu0 %795
    %vm798 = vcmask 520452
    %799 = vst.msk [vmem:[#allocation2] sm:$0x10] %vm798, %v796
    %v800 = vrot.slane %v793, 4
    %801 = vrot.lane.b32.xlu0 %v800, 32
    %v802 = vpop.permute.xlu0 %801
    %v803 = vsel %vm248, %v802, 0
    %805 = vmatprep.subr.mxu0 0.0
    %806 = vmatpush1.msra.mxu0 0.0
    %807 = vmatprep.subr.mxu0 0.0
    %808 = vmatpush1.msra.mxu0 0.0
    %809 = vmatprep.subr.mxu0 0.0
    %810 = vmatpush1.msra.mxu0 0.0
    %811 = vmatprep.subr.mxu0 0.0
    %812 = vmatpush1.msra.mxu0 0.0
    %813 = vmatprep.subr.mxu0 0.0
    %814 = vmatpush1.msra.mxu0 0.0
    %815 = vmatprep.subr.mxu0 0.0
    %816 = vmatpush1.msra.mxu0 0.0
    %817 = vmatprep.subr.mxu0 0.0
    %818 = vmatpush1.msra.mxu0 0.0
    %819 = vmatprep.subr.mxu0 0.0
    %820 = vmatpush1.msra.mxu0 0.0
    %821 = vmatprep.subr.mxu0 0.0
    %822 = vmatpush1.msra.mxu0 0.0
    %823 = vmatprep.subr.mxu0 0.0
    %824 = vmatpush1.msra.mxu0 0.0
    %825 = vmatprep.subr.mxu0 0.0
    %826 = vmatpush1.msra.mxu0 0.0
    %827 = vmatprep.subr.mxu0 0.0
    %828 = vmatpush1.msra.mxu0 0.0
    %829 = vmatprep.subr.mxu0 0.0
    %830 = vmatpush1.msra.mxu0 %v79
    %831 = vmatprep.subr.mxu0 0.0
    %832 = vmatpush1.msra.mxu0 %v78
    %833 = vmatprep.subr.mxu0 0.0
    %834 = vmatpush1.msra.mxu0 %v77
    %835 = vmatprep.subr.mxu0 0.0
    %836 = vmatpush1.msra.mxu0 %v76
    %837 = vmatprep.subr.mxu0 0.0
    %838 = vmatpush2.msra.mxu0 0.0
    %839 = vmatprep.subr.mxu0 0.0
    %840 = vmatpush2.msra.mxu0 0.0
    %841 = vmatprep.subr.mxu0 0.0
    %842 = vmatpush2.msra.mxu0 0.0
    %843 = vmatprep.subr.mxu0 0.0
    %844 = vmatpush2.msra.mxu0 0.0
    %845 = vmatprep.subr.mxu0 0.0
    %846 = vmatpush2.msra.mxu0 0.0
    %847 = vmatprep.subr.mxu0 0.0
    %848 = vmatpush2.msra.mxu0 0.0
    %849 = vmatprep.subr.mxu0 0.0
    %850 = vmatpush2.msra.mxu0 0.0
    %851 = vmatprep.subr.mxu0 0.0
    %852 = vmatpush2.msra.mxu0 0.0
    %853 = vmatprep.subr.mxu0 0.0
    %854 = vmatpush2.msra.mxu0 0.0
    %855 = vmatprep.subr.mxu0 0.0
    %856 = vmatpush2.msra.mxu0 0.0
    %857 = vmatprep.subr.mxu0 0.0
    %858 = vmatpush2.msra.mxu0 0.0
    %859 = vmatprep.subr.mxu0 0.0
    %860 = vmatpush2.msra.mxu0 0.0
    %861 = vmatprep.subr.mxu0 0.0
    %862 = vmatpush2.msra.mxu0 0.0
    %863 = vmatprep.subr.mxu0 0.0
    %864 = vmatpush2.msra.mxu0 0.0
    %865 = vmatprep.subr.mxu0 0.0
    %866 = vmatpush2.msra.mxu0 0.0
    %867 = vmatprep.subr.mxu0 0.0
    %868 = vmatpush2.msra.mxu0 0.0
    %869 = vmatprep.mubr.f32.mxu0 0.0
    %870 = vmatmul.mubr.f32.gmra.mxu0 %v803
    %v871 = vpop.f32.mrf.mxu0
    %v872 = vadd.f32 0.0, %v871
    %v873 = vpop.f32.mrf.mxu0
    %874 = vdwg.mxu0
    %v876 = vrot.slane %v872, 3
    %v878 = vadd.f32 %v169, %v876
    %v879 = vxor.u32 %v878, 2147483648
    %v880 = vmul.f32 %v879, 1.442695
    %v881 = vpow.pop %v880
    %v882 = vadd.f32 %v881, 1.0
    %v883 = vrcp.pop %v882
    %v884 = vmul.f32 1.0, %v883
    %v885 = vtanh.pop %v878
    %v887 = vrot.slane %v787, 7
    %v889 = vmul.f32 %v884, %v887
    %891 = vrot.lane.b32.xlu0 %v885, 64
    %v892 = vpop.permute.xlu0 %891
    %v894 = vmul.f32 %v884, %v892
    %896 = vrot.lane.b32.xlu0 %v894, 32
    %v897 = vpop.permute.xlu0 %896
    %v899 = vadd.f32 %v889, %v897
    %v900 = vtanh.pop %v899
    %902 = vrot.lane.b32.xlu0 %v900, 64
    %v903 = vpop.permute.xlu0 %902
    %v905 = vmul.f32 %v884, %v903
    %907 = vrot.lane.b32.xlu0 %v905, 64
    %v908 = vpop.permute.xlu0 %907
    %vm910 = vcmask 521477
    %911 = vst.msk [vmem:[#allocation2] sm:$0x20] %vm910, %v908
    %v912 = vrot.slane %v905, 5
    %913 = vrot.lane.b32.xlu0 %v912, 32
    %v914 = vpop.permute.xlu0 %913
    %v915 = vsel %vm248, %v914, 0
    %917 = vmatprep.subr.mxu0 0.0
    %918 = vmatpush1.msra.mxu0 0.0
    %919 = vmatprep.subr.mxu0 0.0
    %920 = vmatpush1.msra.mxu0 0.0
    %921 = vmatprep.subr.mxu0 0.0
    %922 = vmatpush1.msra.mxu0 0.0
    %923 = vmatprep.subr.mxu0 0.0
    %924 = vmatpush1.msra.mxu0 0.0
    %925 = vmatprep.subr.mxu0 0.0
    %926 = vmatpush1.msra.mxu0 0.0
    %927 = vmatprep.subr.mxu0 0.0
    %928 = vmatpush1.msra.mxu0 0.0
    %929 = vmatprep.subr.mxu0 0.0
    %930 = vmatpush1.msra.mxu0 0.0
    %931 = vmatprep.subr.mxu0 0.0
    %932 = vmatpush1.msra.mxu0 0.0
    %933 = vmatprep.subr.mxu0 0.0
    %934 = vmatpush1.msra.mxu0 0.0
    %935 = vmatprep.subr.mxu0 0.0
    %936 = vmatpush1.msra.mxu0 0.0
    %937 = vmatprep.subr.mxu0 0.0
    %938 = vmatpush1.msra.mxu0 0.0
    %939 = vmatprep.subr.mxu0 0.0
    %940 = vmatpush1.msra.mxu0 0.0
    %941 = vmatprep.subr.mxu0 0.0
    %942 = vmatpush1.msra.mxu0 %v79
    %943 = vmatprep.subr.mxu0 0.0
    %944 = vmatpush1.msra.mxu0 %v78
    %945 = vmatprep.subr.mxu0 0.0
    %946 = vmatpush1.msra.mxu0 %v77
    %947 = vmatprep.subr.mxu0 0.0
    %948 = vmatpush1.msra.mxu0 %v76
    %949 = vmatprep.subr.mxu0 0.0
    %950 = vmatpush2.msra.mxu0 0.0
    %951 = vmatprep.subr.mxu0 0.0
    %952 = vmatpush2.msra.mxu0 0.0
    %953 = vmatprep.subr.mxu0 0.0
    %954 = vmatpush2.msra.mxu0 0.0
    %955 = vmatprep.subr.mxu0 0.0
    %956 = vmatpush2.msra.mxu0 0.0
    %957 = vmatprep.subr.mxu0 0.0
    %958 = vmatpush2.msra.mxu0 0.0
    %959 = vmatprep.subr.mxu0 0.0
    %960 = vmatpush2.msra.mxu0 0.0
    %961 = vmatprep.subr.mxu0 0.0
    %962 = vmatpush2.msra.mxu0 0.0
    %963 = vmatprep.subr.mxu0 0.0
    %964 = vmatpush2.msra.mxu0 0.0
    %965 = vmatprep.subr.mxu0 0.0
    %966 = vmatpush2.msra.mxu0 0.0
    %967 = vmatprep.subr.mxu0 0.0
    %968 = vmatpush2.msra.mxu0 0.0
    %969 = vmatprep.subr.mxu0 0.0
    %970 = vmatpush2.msra.mxu0 0.0
    %971 = vmatprep.subr.mxu0 0.0
    %972 = vmatpush2.msra.mxu0 0.0
    %973 = vmatprep.subr.mxu0 0.0
    %974 = vmatpush2.msra.mxu0 0.0
    %975 = vmatprep.subr.mxu0 0.0
    %976 = vmatpush2.msra.mxu0 0.0
    %977 = vmatprep.subr.mxu0 0.0
    %978 = vmatpush2.msra.mxu0 0.0
    %979 = vmatprep.subr.mxu0 0.0
    %980 = vmatpush2.msra.mxu0 0.0
    %981 = vmatprep.mubr.f32.mxu0 0.0
    %982 = vmatmul.mubr.f32.gmra.mxu0 %v915
    %v983 = vpop.f32.mrf.mxu0
    %v984 = vadd.f32 0.0, %v983
    %v985 = vpop.f32.mrf.mxu0
    %986 = vdwg.mxu0
    %v988 = vrot.slane %v984, 2
    %v990 = vadd.f32 %v169, %v988
    %v991 = vxor.u32 %v990, 2147483648
    %v992 = vmul.f32 %v991, 1.442695
    %v993 = vpow.pop %v992
    %v994 = vadd.f32 %v993, 1.0
    %v995 = vrcp.pop %v994
    %v996 = vmul.f32 1.0, %v995
    %v997 = vtanh.pop %v990
    %v999 = vrot.slane %v899, 7
    %v1001 = vmul.f32 %v996, %v999
    %1003 = vrot.lane.b32.xlu0 %v997, 64
    %v1004 = vpop.permute.xlu0 %1003
    %v1006 = vmul.f32 %v996, %v1004
    %1008 = vrot.lane.b32.xlu0 %v1006, 32
    %v1009 = vpop.permute.xlu0 %1008
    %v1011 = vadd.f32 %v1001, %v1009
    %v1012 = vtanh.pop %v1011
    %1014 = vrot.lane.b32.xlu0 %v1012, 64
    %v1015 = vpop.permute.xlu0 %1014
    %v1017 = vmul.f32 %v996, %v1015
    %1019 = vrot.lane.b32.xlu0 %v1017, 64
    %v1020 = vpop.permute.xlu0 %1019
    %vm1022 = vcmask 522502
    %1023 = vst.msk [vmem:[#allocation2] sm:$0x40] %vm1022, %v1020
    %v1024 = vrot.slane %v1017, 6
    %1025 = vrot.lane.b32.xlu0 %v1024, 32
    %v1026 = vpop.permute.xlu0 %1025
    %v1027 = vsel %vm248, %v1026, 0
    %1029 = vmatprep.subr.mxu0 0.0
    %1030 = vmatpush1.msra.mxu0 0.0
    %1031 = vmatprep.subr.mxu0 0.0
    %1032 = vmatpush1.msra.mxu0 0.0
    %1033 = vmatprep.subr.mxu0 0.0
    %1034 = vmatpush1.msra.mxu0 0.0
    %1035 = vmatprep.subr.mxu0 0.0
    %1036 = vmatpush1.msra.mxu0 0.0
    %1037 = vmatprep.subr.mxu0 0.0
    %1038 = vmatpush1.msra.mxu0 0.0
    %1039 = vmatprep.subr.mxu0 0.0
    %1040 = vmatpush1.msra.mxu0 0.0
    %1041 = vmatprep.subr.mxu0 0.0
    %1042 = vmatpush1.msra.mxu0 0.0
    %1043 = vmatprep.subr.mxu0 0.0
    %1044 = vmatpush1.msra.mxu0 0.0
    %1045 = vmatprep.subr.mxu0 0.0
    %1046 = vmatpush1.msra.mxu0 0.0
    %1047 = vmatprep.subr.mxu0 0.0
    %1048 = vmatpush1.msra.mxu0 0.0
    %1049 = vmatprep.subr.mxu0 0.0
    %1050 = vmatpush1.msra.mxu0 0.0
    %1051 = vmatprep.subr.mxu0 0.0
    %1052 = vmatpush1.msra.mxu0 0.0
    %1053 = vmatprep.subr.mxu0 0.0
    %1054 = vmatpush1.msra.mxu0 %v79
    %1055 = vmatprep.subr.mxu0 0.0
    %1056 = vmatpush1.msra.mxu0 %v78
    %1057 = vmatprep.subr.mxu0 0.0
    %1058 = vmatpush1.msra.mxu0 %v77
    %1059 = vmatprep.subr.mxu0 0.0
    %1060 = vmatpush1.msra.mxu0 %v76
    %1061 = vmatprep.subr.mxu0 0.0
    %1062 = vmatpush2.msra.mxu0 0.0
    %1063 = vmatprep.subr.mxu0 0.0
    %1064 = vmatpush2.msra.mxu0 0.0
    %1065 = vmatprep.subr.mxu0 0.0
    %1066 = vmatpush2.msra.mxu0 0.0
    %1067 = vmatprep.subr.mxu0 0.0
    %1068 = vmatpush2.msra.mxu0 0.0
    %1069 = vmatprep.subr.mxu0 0.0
    %1070 = vmatpush2.msra.mxu0 0.0
    %1071 = vmatprep.subr.mxu0 0.0
    %1072 = vmatpush2.msra.mxu0 0.0
    %1073 = vmatprep.subr.mxu0 0.0
    %1074 = vmatpush2.msra.mxu0 0.0
    %1075 = vmatprep.subr.mxu0 0.0
    %1076 = vmatpush2.msra.mxu0 0.0
    %1077 = vmatprep.subr.mxu0 0.0
    %1078 = vmatpush2.msra.mxu0 0.0
    %1079 = vmatprep.subr.mxu0 0.0
    %1080 = vmatpush2.msra.mxu0 0.0
    %1081 = vmatprep.subr.mxu0 0.0
    %1082 = vmatpush2.msra.mxu0 0.0
    %1083 = vmatprep.subr.mxu0 0.0
    %1084 = vmatpush2.msra.mxu0 0.0
    %1085 = vmatprep.subr.mxu0 0.0
    %1086 = vmatpush2.msra.mxu0 0.0
    %1087 = vmatprep.subr.mxu0 0.0
    %1088 = vmatpush2.msra.mxu0 0.0
    %1089 = vmatprep.subr.mxu0 0.0
    %1090 = vmatpush2.msra.mxu0 0.0
    %1091 = vmatprep.subr.mxu0 0.0
    %1092 = vmatpush2.msra.mxu0 0.0
    %1093 = vmatprep.mubr.f32.mxu0 0.0
    %1094 = vmatmul.mubr.f32.gmra.mxu0 %v1027
    %v1095 = vpop.f32.mrf.mxu0
    %v1096 = vadd.f32 0.0, %v1095
    %v1097 = vpop.f32.mrf.mxu0
    %1098 = vdwg.mxu0
    %v1100 = vrot.slane %v1096, 1
    %v1102 = vadd.f32 %v169, %v1100
    %v1103 = vxor.u32 %v1102, 2147483648
    %v1104 = vmul.f32 %v1103, 1.442695
    %v1105 = vpow.pop %v1104
    %v1106 = vadd.f32 %v1105, 1.0
    %v1107 = vrcp.pop %v1106
    %v1108 = vmul.f32 1.0, %v1107
    %v1109 = vtanh.pop %v1102
    %v1111 = vrot.slane %v1011, 7
    %v1113 = vmul.f32 %v1108, %v1111
    %1115 = vrot.lane.b32.xlu0 %v1109, 64
    %v1116 = vpop.permute.xlu0 %1115
    %v1118 = vmul.f32 %v1108, %v1116
    %1120 = vrot.lane.b32.xlu0 %v1118, 32
    %v1121 = vpop.permute.xlu0 %1120
    %v1123 = vadd.f32 %v1113, %v1121
    %v1124 = vtanh.pop %v1123
    %1126 = vrot.lane.b32.xlu0 %v1124, 64
    %v1127 = vpop.permute.xlu0 %1126
    %v1129 = vmul.f32 %v1108, %v1127
    %1131 = vrot.lane.b32.xlu0 %v1129, 64
    %v1132 = vpop.permute.xlu0 %1131
    %vm1134 = vcmask 523527
    %1135 = vst.msk [vmem:[#allocation2] sm:$0x80] %vm1134, %v1132
    %1136 = vmatprep.subr.mxu0 0.0
    %1137 = vmatpush1.msra.mxu0 0.0
    %1138 = vmatprep.subr.mxu0 0.0
    %1139 = vmatpush1.msra.mxu0 0.0
    %1140 = vmatprep.subr.mxu0 0.0
    %1141 = vmatpush1.msra.mxu0 0.0
    %1142 = vmatprep.subr.mxu0 0.0
    %1143 = vmatpush1.msra.mxu0 0.0
    %1144 = vmatprep.subr.mxu0 0.0
    %1145 = vmatpush1.msra.mxu0 0.0
    %1146 = vmatprep.subr.mxu0 0.0
    %1147 = vmatpush1.msra.mxu0 0.0
    %1148 = vmatprep.subr.mxu0 0.0
    %1149 = vmatpush1.msra.mxu0 0.0
    %1150 = vmatprep.subr.mxu0 0.0
    %1151 = vmatpush1.msra.mxu0 0.0
    %1152 = vmatprep.subr.mxu0 0.0
    %1153 = vmatpush1.msra.mxu0 0.0
    %1154 = vmatprep.subr.mxu0 0.0
    %1155 = vmatpush1.msra.mxu0 0.0
    %1156 = vmatprep.subr.mxu0 0.0
    %1157 = vmatpush1.msra.mxu0 0.0
    %1158 = vmatprep.subr.mxu0 0.0
    %1159 = vmatpush1.msra.mxu0 0.0
    %1160 = vmatprep.subr.mxu0 0.0
    %1161 = vmatpush1.msra.mxu0 %v90
    %1162 = vmatprep.subr.mxu0 0.0
    %1163 = vmatpush1.msra.mxu0 %v89
    %1164 = vmatprep.subr.mxu0 0.0
    %1165 = vmatpush1.msra.mxu0 %v88
    %1166 = vmatprep.subr.mxu0 0.0
    %1167 = vmatpush1.msra.mxu0 %v87
    %1168 = vmatprep.subr.mxu0 0.0
    %1169 = vmatpush2.msra.mxu0 0.0
    %1170 = vmatprep.subr.mxu0 0.0
    %1171 = vmatpush2.msra.mxu0 0.0
    %1172 = vmatprep.subr.mxu0 0.0
    %1173 = vmatpush2.msra.mxu0 0.0
    %1174 = vmatprep.subr.mxu0 0.0
    %1175 = vmatpush2.msra.mxu0 0.0
    %1176 = vmatprep.subr.mxu0 0.0
    %1177 = vmatpush2.msra.mxu0 0.0
    %1178 = vmatprep.subr.mxu0 0.0
    %1179 = vmatpush2.msra.mxu0 0.0
    %1180 = vmatprep.subr.mxu0 0.0
    %1181 = vmatpush2.msra.mxu0 0.0
    %1182 = vmatprep.subr.mxu0 0.0
    %1183 = vmatpush2.msra.mxu0 0.0
    %1184 = vmatprep.subr.mxu0 0.0
    %1185 = vmatpush2.msra.mxu0 0.0
    %1186 = vmatprep.subr.mxu0 0.0
    %1187 = vmatpush2.msra.mxu0 0.0
    %1188 = vmatprep.subr.mxu0 0.0
    %1189 = vmatpush2.msra.mxu0 0.0
    %1190 = vmatprep.subr.mxu0 0.0
    %1191 = vmatpush2.msra.mxu0 0.0
    %1192 = vmatprep.subr.mxu0 0.0
    %1193 = vmatpush2.msra.mxu0 0.0
    %1194 = vmatprep.subr.mxu0 0.0
    %1195 = vmatpush2.msra.mxu0 0.0
    %1196 = vmatprep.subr.mxu0 0.0
    %1197 = vmatpush2.msra.mxu0 0.0
    %1198 = vmatprep.subr.mxu0 0.0
    %1199 = vmatpush2.msra.mxu0 0.0
    %1200 = vmatprep.mubr.f32.mxu0 0.0
    %1201 = vmatmul.mubr.f32.gmra.mxu0 %v250
    %v1202 = vpop.f32.mrf.mxu0
    %v1203 = vadd.f32 0.0, %v1202
    %v1204 = vpop.f32.mrf.mxu0
    %1205 = vdwg.mxu0
    %v1207 = vrot.slane %v1203, 1
    %v1209 = vadd.f32 %v245, %v1207
    %v1210 = vxor.u32 %v1209, 2147483648
    %v1211 = vmul.f32 %v1210, 1.442695
    %v1212 = vpow.pop %v1211
    %v1213 = vadd.f32 %v1212, 1.0
    %v1214 = vrcp.pop %v1213
    %v1215 = vmul.f32 1.0, %v1214
    %v1216 = vtanh.pop %v1209
    %v1217 = vmul.f32 %v1215, 0.0
    %1219 = vrot.lane.b32.xlu0 %v1216, 64
    %v1220 = vpop.permute.xlu0 %1219
    %v1222 = vmul.f32 %v1215, %v1220
    %1224 = vrot.lane.b32.xlu0 %v1222, 32
    %v1225 = vpop.permute.xlu0 %1224
    %v1227 = vadd.f32 %v1217, %v1225
    %v1228 = vtanh.pop %v1227
    %1230 = vrot.lane.b32.xlu0 %v1228, 64
    %v1231 = vpop.permute.xlu0 %1230
    %v1233 = vmul.f32 %v1215, %v1231
    %1235 = vrot.lane.b32.xlu0 %v1233, 32
    %v1236 = vpop.permute.xlu0 %1235
    %vm1238 = vcmask 261127
    %1239 = vst.msk [vmem:[#allocation2] sm:$0x80] %vm1238, %v1236
    %v1240 = vrot.slane %v1233, 7
    %1241 = vrot.lane.b32.xlu0 %v1240, 32
    %v1242 = vpop.permute.xlu0 %1241
    %v1243 = vsel %vm248, %v1242, 0
    %1245 = vmatprep.subr.mxu0 0.0
    %1246 = vmatpush1.msra.mxu0 0.0
    %1247 = vmatprep.subr.mxu0 0.0
    %1248 = vmatpush1.msra.mxu0 0.0
    %1249 = vmatprep.subr.mxu0 0.0
    %1250 = vmatpush1.msra.mxu0 0.0
    %1251 = vmatprep.subr.mxu0 0.0
    %1252 = vmatpush1.msra.mxu0 0.0
    %1253 = vmatprep.subr.mxu0 0.0
    %1254 = vmatpush1.msra.mxu0 0.0
    %1255 = vmatprep.subr.mxu0 0.0
    %1256 = vmatpush1.msra.mxu0 0.0
    %1257 = vmatprep.subr.mxu0 0.0
    %1258 = vmatpush1.msra.mxu0 0.0
    %1259 = vmatprep.subr.mxu0 0.0
    %1260 = vmatpush1.msra.mxu0 0.0
    %1261 = vmatprep.subr.mxu0 0.0
    %1262 = vmatpush1.msra.mxu0 0.0
    %1263 = vmatprep.subr.mxu0 0.0
    %1264 = vmatpush1.msra.mxu0 0.0
    %1265 = vmatprep.subr.mxu0 0.0
    %1266 = vmatpush1.msra.mxu0 0.0
    %1267 = vmatprep.subr.mxu0 0.0
    %1268 = vmatpush1.msra.mxu0 0.0
    %1269 = vmatprep.subr.mxu0 0.0
    %1270 = vmatpush1.msra.mxu0 %v90
    %1271 = vmatprep.subr.mxu0 0.0
    %1272 = vmatpush1.msra.mxu0 %v89
    %1273 = vmatprep.subr.mxu0 0.0
    %1274 = vmatpush1.msra.mxu0 %v88
    %1275 = vmatprep.subr.mxu0 0.0
    %1276 = vmatpush1.msra.mxu0 %v87
    %1277 = vmatprep.subr.mxu0 0.0
    %1278 = vmatpush2.msra.mxu0 0.0
    %1279 = vmatprep.subr.mxu0 0.0
    %1280 = vmatpush2.msra.mxu0 0.0
    %1281 = vmatprep.subr.mxu0 0.0
    %1282 = vmatpush2.msra.mxu0 0.0
    %1283 = vmatprep.subr.mxu0 0.0
    %1284 = vmatpush2.msra.mxu0 0.0
    %1285 = vmatprep.subr.mxu0 0.0
    %1286 = vmatpush2.msra.mxu0 0.0
    %1287 = vmatprep.subr.mxu0 0.0
    %1288 = vmatpush2.msra.mxu0 0.0
    %1289 = vmatprep.subr.mxu0 0.0
    %1290 = vmatpush2.msra.mxu0 0.0
    %1291 = vmatprep.subr.mxu0 0.0
    %1292 = vmatpush2.msra.mxu0 0.0
    %1293 = vmatprep.subr.mxu0 0.0
    %1294 = vmatpush2.msra.mxu0 0.0
    %1295 = vmatprep.subr.mxu0 0.0
    %1296 = vmatpush2.msra.mxu0 0.0
    %1297 = vmatprep.subr.mxu0 0.0
    %1298 = vmatpush2.msra.mxu0 0.0
    %1299 = vmatprep.subr.mxu0 0.0
    %1300 = vmatpush2.msra.mxu0 0.0
    %1301 = vmatprep.subr.mxu0 0.0
    %1302 = vmatpush2.msra.mxu0 0.0
    %1303 = vmatprep.subr.mxu0 0.0
    %1304 = vmatpush2.msra.mxu0 0.0
    %1305 = vmatprep.subr.mxu0 0.0
    %1306 = vmatpush2.msra.mxu0 0.0
    %1307 = vmatprep.subr.mxu0 0.0
    %1308 = vmatpush2.msra.mxu0 0.0
    %1309 = vmatprep.mubr.f32.mxu0 0.0
    %1310 = vmatmul.mubr.f32.gmra.mxu0 %v1243
    %v1311 = vpop.f32.mrf.mxu0
    %v1312 = vadd.f32 0.0, %v1311
    %v1313 = vpop.f32.mrf.mxu0
    %1314 = vdwg.mxu0
    %v1316 = vrot.slane %v1312, 2
    %v1318 = vadd.f32 %v245, %v1316
    %v1319 = vxor.u32 %v1318, 2147483648
    %v1320 = vmul.f32 %v1319, 1.442695
    %v1321 = vpow.pop %v1320
    %v1322 = vadd.f32 %v1321, 1.0
    %v1323 = vrcp.pop %v1322
    %v1324 = vmul.f32 1.0, %v1323
    %v1325 = vtanh.pop %v1318
    %v1327 = vrot.slane %v1227, 1
    %v1329 = vmul.f32 %v1324, %v1327
    %1331 = vrot.lane.b32.xlu0 %v1325, 64
    %v1332 = vpop.permute.xlu0 %1331
    %v1334 = vmul.f32 %v1324, %v1332
    %1336 = vrot.lane.b32.xlu0 %v1334, 32
    %v1337 = vpop.permute.xlu0 %1336
    %v1339 = vadd.f32 %v1329, %v1337
    %v1340 = vtanh.pop %v1339
    %1342 = vrot.lane.b32.xlu0 %v1340, 64
    %v1343 = vpop.permute.xlu0 %1342
    %v1345 = vmul.f32 %v1324, %v1343
    %1347 = vrot.lane.b32.xlu0 %v1345, 32
    %v1348 = vpop.permute.xlu0 %1347
    %vm1350 = vcmask 260102
    %1351 = vst.msk [vmem:[#allocation2] sm:$0x40] %vm1350, %v1348
    %v1352 = vrot.slane %v1345, 6
    %1353 = vrot.lane.b32.xlu0 %v1352, 32
    %v1354 = vpop.permute.xlu0 %1353
    %v1355 = vsel %vm248, %v1354, 0
    %1357 = vmatprep.subr.mxu0 0.0
    %1358 = vmatpush1.msra.mxu0 0.0
    %1359 = vmatprep.subr.mxu0 0.0
    %1360 = vmatpush1.msra.mxu0 0.0
    %1361 = vmatprep.subr.mxu0 0.0
    %1362 = vmatpush1.msra.mxu0 0.0
    %1363 = vmatprep.subr.mxu0 0.0
    %1364 = vmatpush1.msra.mxu0 0.0
    %1365 = vmatprep.subr.mxu0 0.0
    %1366 = vmatpush1.msra.mxu0 0.0
    %1367 = vmatprep.subr.mxu0 0.0
    %1368 = vmatpush1.msra.mxu0 0.0
    %1369 = vmatprep.subr.mxu0 0.0
    %1370 = vmatpush1.msra.mxu0 0.0
    %1371 = vmatprep.subr.mxu0 0.0
    %1372 = vmatpush1.msra.mxu0 0.0
    %1373 = vmatprep.subr.mxu0 0.0
    %1374 = vmatpush1.msra.mxu0 0.0
    %1375 = vmatprep.subr.mxu0 0.0
    %1376 = vmatpush1.msra.mxu0 0.0
    %1377 = vmatprep.subr.mxu0 0.0
    %1378 = vmatpush1.msra.mxu0 0.0
    %1379 = vmatprep.subr.mxu0 0.0
    %1380 = vmatpush1.msra.mxu0 0.0
    %1381 = vmatprep.subr.mxu0 0.0
    %1382 = vmatpush1.msra.mxu0 %v90
    %1383 = vmatprep.subr.mxu0 0.0
    %1384 = vmatpush1.msra.mxu0 %v89
    %1385 = vmatprep.subr.mxu0 0.0
    %1386 = vmatpush1.msra.mxu0 %v88
    %1387 = vmatprep.subr.mxu0 0.0
    %1388 = vmatpush1.msra.mxu0 %v87
    %1389 = vmatprep.subr.mxu0 0.0
    %1390 = vmatpush2.msra.mxu0 0.0
    %1391 = vmatprep.subr.mxu0 0.0
    %1392 = vmatpush2.msra.mxu0 0.0
    %1393 = vmatprep.subr.mxu0 0.0
    %1394 = vmatpush2.msra.mxu0 0.0
    %1395 = vmatprep.subr.mxu0 0.0
    %1396 = vmatpush2.msra.mxu0 0.0
    %1397 = vmatprep.subr.mxu0 0.0
    %1398 = vmatpush2.msra.mxu0 0.0
    %1399 = vmatprep.subr.mxu0 0.0
    %1400 = vmatpush2.msra.mxu0 0.0
    %1401 = vmatprep.subr.mxu0 0.0
    %1402 = vmatpush2.msra.mxu0 0.0
    %1403 = vmatprep.subr.mxu0 0.0
    %1404 = vmatpush2.msra.mxu0 0.0
    %1405 = vmatprep.subr.mxu0 0.0
    %1406 = vmatpush2.msra.mxu0 0.0
    %1407 = vmatprep.subr.mxu0 0.0
    %1408 = vmatpush2.msra.mxu0 0.0
    %1409 = vmatprep.subr.mxu0 0.0
    %1410 = vmatpush2.msra.mxu0 0.0
    %1411 = vmatprep.subr.mxu0 0.0
    %1412 = vmatpush2.msra.mxu0 0.0
    %1413 = vmatprep.subr.mxu0 0.0
    %1414 = vmatpush2.msra.mxu0 0.0
    %1415 = vmatprep.subr.mxu0 0.0
    %1416 = vmatpush2.msra.mxu0 0.0
    %1417 = vmatprep.subr.mxu0 0.0
    %1418 = vmatpush2.msra.mxu0 0.0
    %1419 = vmatprep.subr.mxu0 0.0
    %1420 = vmatpush2.msra.mxu0 0.0
    %1421 = vmatprep.mubr.f32.mxu0 0.0
    %1422 = vmatmul.mubr.f32.gmra.mxu0 %v1355
    %v1423 = vpop.f32.mrf.mxu0
    %v1424 = vadd.f32 0.0, %v1423
    %v1425 = vpop.f32.mrf.mxu0
    %1426 = vdwg.mxu0
    %v1428 = vrot.slane %v1424, 3
    %v1430 = vadd.f32 %v245, %v1428
    %v1431 = vxor.u32 %v1430, 2147483648
    %v1432 = vmul.f32 %v1431, 1.442695
    %v1433 = vpow.pop %v1432
    %v1434 = vadd.f32 %v1433, 1.0
    %v1435 = vrcp.pop %v1434
    %v1436 = vmul.f32 1.0, %v1435
    %v1437 = vtanh.pop %v1430
    %v1439 = vrot.slane %v1339, 1
    %v1441 = vmul.f32 %v1436, %v1439
    %1443 = vrot.lane.b32.xlu0 %v1437, 64
    %v1444 = vpop.permute.xlu0 %1443
    %v1446 = vmul.f32 %v1436, %v1444
    %1448 = vrot.lane.b32.xlu0 %v1446, 32
    %v1449 = vpop.permute.xlu0 %1448
    %v1451 = vadd.f32 %v1441, %v1449
    %v1452 = vtanh.pop %v1451
    %1454 = vrot.lane.b32.xlu0 %v1452, 64
    %v1455 = vpop.permute.xlu0 %1454
    %v1457 = vmul.f32 %v1436, %v1455
    %1459 = vrot.lane.b32.xlu0 %v1457, 32
    %v1460 = vpop.permute.xlu0 %1459
    %vm1462 = vcmask 259077
    %1463 = vst.msk [vmem:[#allocation2] sm:$0x20] %vm1462, %v1460
    %v1464 = vrot.slane %v1457, 5
    %1465 = vrot.lane.b32.xlu0 %v1464, 32
    %v1466 = vpop.permute.xlu0 %1465
    %v1467 = vsel %vm248, %v1466, 0
    %1469 = vmatprep.subr.mxu0 0.0
    %1470 = vmatpush1.msra.mxu0 0.0
    %1471 = vmatprep.subr.mxu0 0.0
    %1472 = vmatpush1.msra.mxu0 0.0
    %1473 = vmatprep.subr.mxu0 0.0
    %1474 = vmatpush1.msra.mxu0 0.0
    %1475 = vmatprep.subr.mxu0 0.0
    %1476 = vmatpush1.msra.mxu0 0.0
    %1477 = vmatprep.subr.mxu0 0.0
    %1478 = vmatpush1.msra.mxu0 0.0
    %1479 = vmatprep.subr.mxu0 0.0
    %1480 = vmatpush1.msra.mxu0 0.0
    %1481 = vmatprep.subr.mxu0 0.0
    %1482 = vmatpush1.msra.mxu0 0.0
    %1483 = vmatprep.subr.mxu0 0.0
    %1484 = vmatpush1.msra.mxu0 0.0
    %1485 = vmatprep.subr.mxu0 0.0
    %1486 = vmatpush1.msra.mxu0 0.0
    %1487 = vmatprep.subr.mxu0 0.0
    %1488 = vmatpush1.msra.mxu0 0.0
    %1489 = vmatprep.subr.mxu0 0.0
    %1490 = vmatpush1.msra.mxu0 0.0
    %1491 = vmatprep.subr.mxu0 0.0
    %1492 = vmatpush1.msra.mxu0 0.0
    %1493 = vmatprep.subr.mxu0 0.0
    %1494 = vmatpush1.msra.mxu0 %v90
    %1495 = vmatprep.subr.mxu0 0.0
    %1496 = vmatpush1.msra.mxu0 %v89
    %1497 = vmatprep.subr.mxu0 0.0
    %1498 = vmatpush1.msra.mxu0 %v88
    %1499 = vmatprep.subr.mxu0 0.0
    %1500 = vmatpush1.msra.mxu0 %v87
    %1501 = vmatprep.subr.mxu0 0.0
    %1502 = vmatpush2.msra.mxu0 0.0
    %1503 = vmatprep.subr.mxu0 0.0
    %1504 = vmatpush2.msra.mxu0 0.0
    %1505 = vmatprep.subr.mxu0 0.0
    %1506 = vmatpush2.msra.mxu0 0.0
    %1507 = vmatprep.subr.mxu0 0.0
    %1508 = vmatpush2.msra.mxu0 0.0
    %1509 = vmatprep.subr.mxu0 0.0
    %1510 = vmatpush2.msra.mxu0 0.0
    %1511 = vmatprep.subr.mxu0 0.0
    %1512 = vmatpush2.msra.mxu0 0.0
    %1513 = vmatprep.subr.mxu0 0.0
    %1514 = vmatpush2.msra.mxu0 0.0
    %1515 = vmatprep.subr.mxu0 0.0
    %1516 = vmatpush2.msra.mxu0 0.0
    %1517 = vmatprep.subr.mxu0 0.0
    %1518 = vmatpush2.msra.mxu0 0.0
    %1519 = vmatprep.subr.mxu0 0.0
    %1520 = vmatpush2.msra.mxu0 0.0
    %1521 = vmatprep.subr.mxu0 0.0
    %1522 = vmatpush2.msra.mxu0 0.0
    %1523 = vmatprep.subr.mxu0 0.0
    %1524 = vmatpush2.msra.mxu0 0.0
    %1525 = vmatprep.subr.mxu0 0.0
    %1526 = vmatpush2.msra.mxu0 0.0
    %1527 = vmatprep.subr.mxu0 0.0
    %1528 = vmatpush2.msra.mxu0 0.0
    %1529 = vmatprep.subr.mxu0 0.0
    %1530 = vmatpush2.msra.mxu0 0.0
    %1531 = vmatprep.subr.mxu0 0.0
    %1532 = vmatpush2.msra.mxu0 0.0
    %1533 = vmatprep.mubr.f32.mxu0 0.0
    %1534 = vmatmul.mubr.f32.gmra.mxu0 %v1467
    %v1535 = vpop.f32.mrf.mxu0
    %v1536 = vadd.f32 0.0, %v1535
    %v1537 = vpop.f32.mrf.mxu0
    %1538 = vdwg.mxu0
    %v1540 = vrot.slane %v1536, 4
    %v1542 = vadd.f32 %v245, %v1540
    %v1543 = vxor.u32 %v1542, 2147483648
    %v1544 = vmul.f32 %v1543, 1.442695
    %v1545 = vpow.pop %v1544
    %v1546 = vadd.f32 %v1545, 1.0
    %v1547 = vrcp.pop %v1546
    %v1548 = vmul.f32 1.0, %v1547
    %v1549 = vtanh.pop %v1542
    %v1551 = vrot.slane %v1451, 1
    %v1553 = vmul.f32 %v1548, %v1551
    %1555 = vrot.lane.b32.xlu0 %v1549, 64
    %v1556 = vpop.permute.xlu0 %1555
    %v1558 = vmul.f32 %v1548, %v1556
    %1560 = vrot.lane.b32.xlu0 %v1558, 32
    %v1561 = vpop.permute.xlu0 %1560
    %v1563 = vadd.f32 %v1553, %v1561
    %v1564 = vtanh.pop %v1563
    %1566 = vrot.lane.b32.xlu0 %v1564, 64
    %v1567 = vpop.permute.xlu0 %1566
    %v1569 = vmul.f32 %v1548, %v1567
    %1571 = vrot.lane.b32.xlu0 %v1569, 32
    %v1572 = vpop.permute.xlu0 %1571
    %vm1574 = vcmask 258052
    %1575 = vst.msk [vmem:[#allocation2] sm:$0x10] %vm1574, %v1572
    %v1576 = vrot.slane %v1569, 4
    %1577 = vrot.lane.b32.xlu0 %v1576, 32
    %v1578 = vpop.permute.xlu0 %1577
    %v1579 = vsel %vm248, %v1578, 0
    %1581 = vmatprep.subr.mxu0 0.0
    %1582 = vmatpush1.msra.mxu0 0.0
    %1583 = vmatprep.subr.mxu0 0.0
    %1584 = vmatpush1.msra.mxu0 0.0
    %1585 = vmatprep.subr.mxu0 0.0
    %1586 = vmatpush1.msra.mxu0 0.0
    %1587 = vmatprep.subr.mxu0 0.0
    %1588 = vmatpush1.msra.mxu0 0.0
    %1589 = vmatprep.subr.mxu0 0.0
    %1590 = vmatpush1.msra.mxu0 0.0
    %1591 = vmatprep.subr.mxu0 0.0
    %1592 = vmatpush1.msra.mxu0 0.0
    %1593 = vmatprep.subr.mxu0 0.0
    %1594 = vmatpush1.msra.mxu0 0.0
    %1595 = vmatprep.subr.mxu0 0.0
    %1596 = vmatpush1.msra.mxu0 0.0
    %1597 = vmatprep.subr.mxu0 0.0
    %1598 = vmatpush1.msra.mxu0 0.0
    %1599 = vmatprep.subr.mxu0 0.0
    %1600 = vmatpush1.msra.mxu0 0.0
    %1601 = vmatprep.subr.mxu0 0.0
    %1602 = vmatpush1.msra.mxu0 0.0
    %1603 = vmatprep.subr.mxu0 0.0
    %1604 = vmatpush1.msra.mxu0 0.0
    %1605 = vmatprep.subr.mxu0 0.0
    %1606 = vmatpush1.msra.mxu0 %v90
    %1607 = vmatprep.subr.mxu0 0.0
    %1608 = vmatpush1.msra.mxu0 %v89
    %1609 = vmatprep.subr.mxu0 0.0
    %1610 = vmatpush1.msra.mxu0 %v88
    %1611 = vmatprep.subr.mxu0 0.0
    %1612 = vmatpush1.msra.mxu0 %v87
    %1613 = vmatprep.subr.mxu0 0.0
    %1614 = vmatpush2.msra.mxu0 0.0
    %1615 = vmatprep.subr.mxu0 0.0
    %1616 = vmatpush2.msra.mxu0 0.0
    %1617 = vmatprep.subr.mxu0 0.0
    %1618 = vmatpush2.msra.mxu0 0.0
    %1619 = vmatprep.subr.mxu0 0.0
    %1620 = vmatpush2.msra.mxu0 0.0
    %1621 = vmatprep.subr.mxu0 0.0
    %1622 = vmatpush2.msra.mxu0 0.0
    %1623 = vmatprep.subr.mxu0 0.0
    %1624 = vmatpush2.msra.mxu0 0.0
    %1625 = vmatprep.subr.mxu0 0.0
    %1626 = vmatpush2.msra.mxu0 0.0
    %1627 = vmatprep.subr.mxu0 0.0
    %1628 = vmatpush2.msra.mxu0 0.0
    %1629 = vmatprep.subr.mxu0 0.0
    %1630 = vmatpush2.msra.mxu0 0.0
    %1631 = vmatprep.subr.mxu0 0.0
    %1632 = vmatpush2.msra.mxu0 0.0
    %1633 = vmatprep.subr.mxu0 0.0
    %1634 = vmatpush2.msra.mxu0 0.0
    %1635 = vmatprep.subr.mxu0 0.0
    %1636 = vmatpush2.msra.mxu0 0.0
    %1637 = vmatprep.subr.mxu0 0.0
    %1638 = vmatpush2.msra.mxu0 0.0
    %1639 = vmatprep.subr.mxu0 0.0
    %1640 = vmatpush2.msra.mxu0 0.0
    %1641 = vmatprep.subr.mxu0 0.0
    %1642 = vmatpush2.msra.mxu0 0.0
    %1643 = vmatprep.subr.mxu0 0.0
    %1644 = vmatpush2.msra.mxu0 0.0
    %1645 = vmatprep.mubr.f32.mxu0 0.0
    %1646 = vmatmul.mubr.f32.gmra.mxu0 %v1579
    %v1647 = vpop.f32.mrf.mxu0
    %v1648 = vadd.f32 0.0, %v1647
    %v1649 = vpop.f32.mrf.mxu0
    %1650 = vdwg.mxu0
    %v1652 = vrot.slane %v1648, 5
    %v1654 = vadd.f32 %v245, %v1652
    %v1655 = vxor.u32 %v1654, 2147483648
    %v1656 = vmul.f32 %v1655, 1.442695
    %v1657 = vpow.pop %v1656
    %v1658 = vadd.f32 %v1657, 1.0
    %v1659 = vrcp.pop %v1658
    %v1660 = vmul.f32 1.0, %v1659
    %v1661 = vtanh.pop %v1654
    %v1663 = vrot.slane %v1563, 1
    %v1665 = vmul.f32 %v1660, %v1663
    %1667 = vrot.lane.b32.xlu0 %v1661, 64
    %v1668 = vpop.permute.xlu0 %1667
    %v1670 = vmul.f32 %v1660, %v1668
    %1672 = vrot.lane.b32.xlu0 %v1670, 32
    %v1673 = vpop.permute.xlu0 %1672
    %v1675 = vadd.f32 %v1665, %v1673
    %v1676 = vtanh.pop %v1675
    %1678 = vrot.lane.b32.xlu0 %v1676, 64
    %v1679 = vpop.permute.xlu0 %1678
    %v1681 = vmul.f32 %v1660, %v1679
    %1683 = vrot.lane.b32.xlu0 %v1681, 32
    %v1684 = vpop.permute.xlu0 %1683
    %vm1686 = vcmask 257027
    %1687 = vst.msk [vmem:[#allocation2] sm:$0x8] %vm1686, %v1684
    %v1688 = vrot.slane %v1681, 3
    %1689 = vrot.lane.b32.xlu0 %v1688, 32
    %v1690 = vpop.permute.xlu0 %1689
    %v1691 = vsel %vm248, %v1690, 0
    %1693 = vmatprep.subr.mxu0 0.0
    %1694 = vmatpush1.msra.mxu0 0.0
    %1695 = vmatprep.subr.mxu0 0.0
    %1696 = vmatpush1.msra.mxu0 0.0
    %1697 = vmatprep.subr.mxu0 0.0
    %1698 = vmatpush1.msra.mxu0 0.0
    %1699 = vmatprep.subr.mxu0 0.0
    %1700 = vmatpush1.msra.mxu0 0.0
    %1701 = vmatprep.subr.mxu0 0.0
    %1702 = vmatpush1.msra.mxu0 0.0
    %1703 = vmatprep.subr.mxu0 0.0
    %1704 = vmatpush1.msra.mxu0 0.0
    %1705 = vmatprep.subr.mxu0 0.0
    %1706 = vmatpush1.msra.mxu0 0.0
    %1707 = vmatprep.subr.mxu0 0.0
    %1708 = vmatpush1.msra.mxu0 0.0
    %1709 = vmatprep.subr.mxu0 0.0
    %1710 = vmatpush1.msra.mxu0 0.0
    %1711 = vmatprep.subr.mxu0 0.0
    %1712 = vmatpush1.msra.mxu0 0.0
    %1713 = vmatprep.subr.mxu0 0.0
    %1714 = vmatpush1.msra.mxu0 0.0
    %1715 = vmatprep.subr.mxu0 0.0
    %1716 = vmatpush1.msra.mxu0 0.0
    %1717 = vmatprep.subr.mxu0 0.0
    %1718 = vmatpush1.msra.mxu0 %v90
    %1719 = vmatprep.subr.mxu0 0.0
    %1720 = vmatpush1.msra.mxu0 %v89
    %1721 = vmatprep.subr.mxu0 0.0
    %1722 = vmatpush1.msra.mxu0 %v88
    %1723 = vmatprep.subr.mxu0 0.0
    %1724 = vmatpush1.msra.mxu0 %v87
    %1725 = vmatprep.subr.mxu0 0.0
    %1726 = vmatpush2.msra.mxu0 0.0
    %1727 = vmatprep.subr.mxu0 0.0
    %1728 = vmatpush2.msra.mxu0 0.0
    %1729 = vmatprep.subr.mxu0 0.0
    %1730 = vmatpush2.msra.mxu0 0.0
    %1731 = vmatprep.subr.mxu0 0.0
    %1732 = vmatpush2.msra.mxu0 0.0
    %1733 = vmatprep.subr.mxu0 0.0
    %1734 = vmatpush2.msra.mxu0 0.0
    %1735 = vmatprep.subr.mxu0 0.0
    %1736 = vmatpush2.msra.mxu0 0.0
    %1737 = vmatprep.subr.mxu0 0.0
    %1738 = vmatpush2.msra.mxu0 0.0
    %1739 = vmatprep.subr.mxu0 0.0
    %1740 = vmatpush2.msra.mxu0 0.0
    %1741 = vmatprep.subr.mxu0 0.0
    %1742 = vmatpush2.msra.mxu0 0.0
    %1743 = vmatprep.subr.mxu0 0.0
    %1744 = vmatpush2.msra.mxu0 0.0
    %1745 = vmatprep.subr.mxu0 0.0
    %1746 = vmatpush2.msra.mxu0 0.0
    %1747 = vmatprep.subr.mxu0 0.0
    %1748 = vmatpush2.msra.mxu0 0.0
    %1749 = vmatprep.subr.mxu0 0.0
    %1750 = vmatpush2.msra.mxu0 0.0
    %1751 = vmatprep.subr.mxu0 0.0
    %1752 = vmatpush2.msra.mxu0 0.0
    %1753 = vmatprep.subr.mxu0 0.0
    %1754 = vmatpush2.msra.mxu0 0.0
    %1755 = vmatprep.subr.mxu0 0.0
    %1756 = vmatpush2.msra.mxu0 0.0
    %1757 = vmatprep.mubr.f32.mxu0 0.0
    %1758 = vmatmul.mubr.f32.gmra.mxu0 %v1691
    %v1759 = vpop.f32.mrf.mxu0
    %v1760 = vadd.f32 0.0, %v1759
    %v1761 = vpop.f32.mrf.mxu0
    %1762 = vdwg.mxu0
    %v1764 = vrot.slane %v1760, 6
    %v1766 = vadd.f32 %v245, %v1764
    %v1767 = vxor.u32 %v1766, 2147483648
    %v1768 = vmul.f32 %v1767, 1.442695
    %v1769 = vpow.pop %v1768
    %v1770 = vadd.f32 %v1769, 1.0
    %v1771 = vrcp.pop %v1770
    %v1772 = vmul.f32 1.0, %v1771
    %v1773 = vtanh.pop %v1766
    %v1775 = vrot.slane %v1675, 1
    %v1777 = vmul.f32 %v1772, %v1775
    %1779 = vrot.lane.b32.xlu0 %v1773, 64
    %v1780 = vpop.permute.xlu0 %1779
    %v1782 = vmul.f32 %v1772, %v1780
    %1784 = vrot.lane.b32.xlu0 %v1782, 32
    %v1785 = vpop.permute.xlu0 %1784
    %v1787 = vadd.f32 %v1777, %v1785
    %v1788 = vtanh.pop %v1787
    %1790 = vrot.lane.b32.xlu0 %v1788, 64
    %v1791 = vpop.permute.xlu0 %1790
    %v1793 = vmul.f32 %v1772, %v1791
    %1795 = vrot.lane.b32.xlu0 %v1793, 32
    %v1796 = vpop.permute.xlu0 %1795
    %vm1798 = vcmask 256002
    %1799 = vst.msk [vmem:[#allocation2] sm:$0x4] %vm1798, %v1796
    %v1800 = vrot.slane %v1793, 2
    %1801 = vrot.lane.b32.xlu0 %v1800, 32
    %v1802 = vpop.permute.xlu0 %1801
    %v1803 = vsel %vm248, %v1802, 0
    %1805 = vmatprep.subr.mxu0 0.0
    %1806 = vmatpush1.msra.mxu0 0.0
    %1807 = vmatprep.subr.mxu0 0.0
    %1808 = vmatpush1.msra.mxu0 0.0
    %1809 = vmatprep.subr.mxu0 0.0
    %1810 = vmatpush1.msra.mxu0 0.0
    %1811 = vmatprep.subr.mxu0 0.0
    %1812 = vmatpush1.msra.mxu0 0.0
    %1813 = vmatprep.subr.mxu0 0.0
    %1814 = vmatpush1.msra.mxu0 0.0
    %1815 = vmatprep.subr.mxu0 0.0
    %1816 = vmatpush1.msra.mxu0 0.0
    %1817 = vmatprep.subr.mxu0 0.0
    %1818 = vmatpush1.msra.mxu0 0.0
    %1819 = vmatprep.subr.mxu0 0.0
    %1820 = vmatpush1.msra.mxu0 0.0
    %1821 = vmatprep.subr.mxu0 0.0
    %1822 = vmatpush1.msra.mxu0 0.0
    %1823 = vmatprep.subr.mxu0 0.0
    %1824 = vmatpush1.msra.mxu0 0.0
    %1825 = vmatprep.subr.mxu0 0.0
    %1826 = vmatpush1.msra.mxu0 0.0
    %1827 = vmatprep.subr.mxu0 0.0
    %1828 = vmatpush1.msra.mxu0 0.0
    %1829 = vmatprep.subr.mxu0 0.0
    %1830 = vmatpush1.msra.mxu0 %v90
    %1831 = vmatprep.subr.mxu0 0.0
    %1832 = vmatpush1.msra.mxu0 %v89
    %1833 = vmatprep.subr.mxu0 0.0
    %1834 = vmatpush1.msra.mxu0 %v88
    %1835 = vmatprep.subr.mxu0 0.0
    %1836 = vmatpush1.msra.mxu0 %v87
    %1837 = vmatprep.subr.mxu0 0.0
    %1838 = vmatpush2.msra.mxu0 0.0
    %1839 = vmatprep.subr.mxu0 0.0
    %1840 = vmatpush2.msra.mxu0 0.0
    %1841 = vmatprep.subr.mxu0 0.0
    %1842 = vmatpush2.msra.mxu0 0.0
    %1843 = vmatprep.subr.mxu0 0.0
    %1844 = vmatpush2.msra.mxu0 0.0
    %1845 = vmatprep.subr.mxu0 0.0
    %1846 = vmatpush2.msra.mxu0 0.0
    %1847 = vmatprep.subr.mxu0 0.0
    %1848 = vmatpush2.msra.mxu0 0.0
    %1849 = vmatprep.subr.mxu0 0.0
    %1850 = vmatpush2.msra.mxu0 0.0
    %1851 = vmatprep.subr.mxu0 0.0
    %1852 = vmatpush2.msra.mxu0 0.0
    %1853 = vmatprep.subr.mxu0 0.0
    %1854 = vmatpush2.msra.mxu0 0.0
    %1855 = vmatprep.subr.mxu0 0.0
    %1856 = vmatpush2.msra.mxu0 0.0
    %1857 = vmatprep.subr.mxu0 0.0
    %1858 = vmatpush2.msra.mxu0 0.0
    %1859 = vmatprep.subr.mxu0 0.0
    %1860 = vmatpush2.msra.mxu0 0.0
    %1861 = vmatprep.subr.mxu0 0.0
    %1862 = vmatpush2.msra.mxu0 0.0
    %1863 = vmatprep.subr.mxu0 0.0
    %1864 = vmatpush2.msra.mxu0 0.0
    %1865 = vmatprep.subr.mxu0 0.0
    %1866 = vmatpush2.msra.mxu0 0.0
    %1867 = vmatprep.subr.mxu0 0.0
    %1868 = vmatpush2.msra.mxu0 0.0
    %1869 = vmatprep.mubr.f32.mxu0 0.0
    %1870 = vmatmul.mubr.f32.gmra.mxu0 %v1803
    %v1871 = vpop.f32.mrf.mxu0
    %v1872 = vadd.f32 0.0, %v1871
    %v1873 = vpop.f32.mrf.mxu0
    %1874 = vdwg.mxu0
    %v1876 = vrot.slane %v1872, 7
    %v1878 = vadd.f32 %v245, %v1876
    %v1879 = vxor.u32 %v1878, 2147483648
    %v1880 = vmul.f32 %v1879, 1.442695
    %v1881 = vpow.pop %v1880
    %v1882 = vadd.f32 %v1881, 1.0
    %v1883 = vrcp.pop %v1882
    %v1884 = vmul.f32 1.0, %v1883
    %v1885 = vtanh.pop %v1878
    %v1887 = vrot.slane %v1787, 1
    %v1889 = vmul.f32 %v1884, %v1887
    %1891 = vrot.lane.b32.xlu0 %v1885, 64
    %v1892 = vpop.permute.xlu0 %1891
    %v1894 = vmul.f32 %v1884, %v1892
    %1896 = vrot.lane.b32.xlu0 %v1894, 32
    %v1897 = vpop.permute.xlu0 %1896
    %v1899 = vadd.f32 %v1889, %v1897
    %v1900 = vtanh.pop %v1899
    %1902 = vrot.lane.b32.xlu0 %v1900, 64
    %v1903 = vpop.permute.xlu0 %1902
    %v1905 = vmul.f32 %v1884, %v1903
    %1907 = vrot.lane.b32.xlu0 %v1905, 32
    %v1908 = vpop.permute.xlu0 %1907
    %vm1910 = vcmask 254977
    %1911 = vst.msk [vmem:[#allocation2] sm:$0x2] %vm1910, %v1908
    %v1912 = vrot.slane %v1905, 1
    %1913 = vrot.lane.b32.xlu0 %v1912, 32
    %v1914 = vpop.permute.xlu0 %1913
    %v1915 = vsel %vm248, %v1914, 0
    %1917 = vmatprep.subr.mxu0 0.0
    %1918 = vmatpush1.msra.mxu0 0.0
    %1919 = vmatprep.subr.mxu0 0.0
    %1920 = vmatpush1.msra.mxu0 0.0
    %1921 = vmatprep.subr.mxu0 0.0
    %1922 = vmatpush1.msra.mxu0 0.0
    %1923 = vmatprep.subr.mxu0 0.0
    %1924 = vmatpush1.msra.mxu0 0.0
    %1925 = vmatprep.subr.mxu0 0.0
    %1926 = vmatpush1.msra.mxu0 0.0
    %1927 = vmatprep.subr.mxu0 0.0
    %1928 = vmatpush1.msra.mxu0 0.0
    %1929 = vmatprep.subr.mxu0 0.0
    %1930 = vmatpush1.msra.mxu0 0.0
    %1931 = vmatprep.subr.mxu0 0.0
    %1932 = vmatpush1.msra.mxu0 0.0
    %1933 = vmatprep.subr.mxu0 0.0
    %1934 = vmatpush1.msra.mxu0 0.0
    %1935 = vmatprep.subr.mxu0 0.0
    %1936 = vmatpush1.msra.mxu0 0.0
    %1937 = vmatprep.subr.mxu0 0.0
    %1938 = vmatpush1.msra.mxu0 0.0
    %1939 = vmatprep.subr.mxu0 0.0
    %1940 = vmatpush1.msra.mxu0 0.0
    %1941 = vmatprep.subr.mxu0 0.0
    %1942 = vmatpush1.msra.mxu0 %v90
    %1943 = vmatprep.subr.mxu0 0.0
    %1944 = vmatpush1.msra.mxu0 %v89
    %1945 = vmatprep.subr.mxu0 0.0
    %1946 = vmatpush1.msra.mxu0 %v88
    %1947 = vmatprep.subr.mxu0 0.0
    %1948 = vmatpush1.msra.mxu0 %v87
    %1949 = vmatprep.subr.mxu0 0.0
    %1950 = vmatpush2.msra.mxu0 0.0
    %1951 = vmatprep.subr.mxu0 0.0
    %1952 = vmatpush2.msra.mxu0 0.0
    %1953 = vmatprep.subr.mxu0 0.0
    %1954 = vmatpush2.msra.mxu0 0.0
    %1955 = vmatprep.subr.mxu0 0.0
    %1956 = vmatpush2.msra.mxu0 0.0
    %1957 = vmatprep.subr.mxu0 0.0
    %1958 = vmatpush2.msra.mxu0 0.0
    %1959 = vmatprep.subr.mxu0 0.0
    %1960 = vmatpush2.msra.mxu0 0.0
    %1961 = vmatprep.subr.mxu0 0.0
    %1962 = vmatpush2.msra.mxu0 0.0
    %1963 = vmatprep.subr.mxu0 0.0
    %1964 = vmatpush2.msra.mxu0 0.0
    %1965 = vmatprep.subr.mxu0 0.0
    %1966 = vmatpush2.msra.mxu0 0.0
    %1967 = vmatprep.subr.mxu0 0.0
    %1968 = vmatpush2.msra.mxu0 0.0
    %1969 = vmatprep.subr.mxu0 0.0
    %1970 = vmatpush2.msra.mxu0 0.0
    %1971 = vmatprep.subr.mxu0 0.0
    %1972 = vmatpush2.msra.mxu0 0.0
    %1973 = vmatprep.subr.mxu0 0.0
    %1974 = vmatpush2.msra.mxu0 0.0
    %1975 = vmatprep.subr.mxu0 0.0
    %1976 = vmatpush2.msra.mxu0 0.0
    %1977 = vmatprep.subr.mxu0 0.0
    %1978 = vmatpush2.msra.mxu0 0.0
    %1979 = vmatprep.subr.mxu0 0.0
    %1980 = vmatpush2.msra.mxu0 0.0
    %1981 = vmatprep.mubr.f32.mxu0 0.0
    %1982 = vmatmul.mubr.f32.gmra.mxu0 %v1915
    %v1983 = vpop.f32.mrf.mxu0
    %v1984 = vadd.f32 0.0, %v1983
    %v1985 = vpop.f32.mrf.mxu0
    %1986 = vdwg.mxu0
    %v1987 = vadd.f32 %v245, %v1984
    %v1988 = vxor.u32 %v1987, 2147483648
    %v1989 = vmul.f32 %v1988, 1.442695
    %v1990 = vpow.pop %v1989
    %v1991 = vadd.f32 %v1990, 1.0
    %v1992 = vrcp.pop %v1991
    %v1993 = vmul.f32 1.0, %v1992
    %v1994 = vtanh.pop %v1987
    %v1996 = vrot.slane %v1899, 1
    %v1998 = vmul.f32 %v1993, %v1996
    %2000 = vrot.lane.b32.xlu0 %v1994, 64
    %v2001 = vpop.permute.xlu0 %2000
    %v2003 = vmul.f32 %v1993, %v2001
    %2005 = vrot.lane.b32.xlu0 %v2003, 32
    %v2006 = vpop.permute.xlu0 %2005
    %v2008 = vadd.f32 %v1998, %v2006
    %v2009 = vtanh.pop %v2008
    %2011 = vrot.lane.b32.xlu0 %v2009, 64
    %v2012 = vpop.permute.xlu0 %2011
    %v2014 = vmul.f32 %v1993, %v2012
    %2016 = vrot.lane.b32.xlu0 %v2014, 32
    %v2017 = vpop.permute.xlu0 %2016
    %vm2019 = vcmask 253952
    %2020 = vst.msk [vmem:[#allocation2] sm:$0x1] %vm2019, %v2017
    %v2021 = vld [vmem:[#allocation2] sm:$0xff]
    %v2022 = vld [vmem:[%s7] sm:$0xff]
    %v2023 = vld [vmem:[%s7 + $0x8] sm:$0xff]
    %v2024 = vld [vmem:[%s7 + $0x10] sm:$0xff]
    %v2025 = vld [vmem:[%s7 + $0x18] sm:$0xff]
    %v2026 = vld [vmem:[%s7 + $0x20] sm:$0xff]
    %v2027 = vld [vmem:[%s7 + $0x28] sm:$0xff]
    %v2028 = vld [vmem:[%s7 + $0x30] sm:$0xff]
    %v2029 = vld [vmem:[%s7 + $0x38] sm:$0xff]
    %v2030 = vld [vmem:[%s8] sm:$0xff]
    %v2031 = vld [vmem:[%s8 + $0x8] sm:$0xff]
    %v2032 = vld [vmem:[%s8 + $0x10] sm:$0xff]
    %v2033 = vld [vmem:[%s8 + $0x18] sm:$0xff]
    %v2034 = vld [vmem:[%s9] sm:$0x1]
    %v2035 = vld [vmem:[%s10] sm:$0xff]
    %v2036 = vld [vmem:[%s10 + $0x8] sm:$0xff]
    %v2037 = vld [vmem:[%s10 + $0x10] sm:$0xff]
    %v2038 = vld [vmem:[%s10 + $0x18] sm:$0xff]
    %v2039 = vld [vmem:[%s10 + $0x20] sm:$0xff]
    %v2040 = vld [vmem:[%s10 + $0x28] sm:$0xff]
    %v2041 = vld [vmem:[%s10 + $0x30] sm:$0xff]
    %v2042 = vld [vmem:[%s10 + $0x38] sm:$0xff]
    %v2043 = vld [vmem:[%s11] sm:$0xff]
    %v2044 = vld [vmem:[%s11 + $0x8] sm:$0xff]
    %v2045 = vld [vmem:[%s11 + $0x10] sm:$0xff]
    %v2046 = vld [vmem:[%s11 + $0x18] sm:$0xff]
    %v2047 = vld [vmem:[%s12] sm:$0x1]
    %v2049 = vlaneseq
    %v2050 = vshrl.u32 %v2049, 7
    %v2051 = vsub.s32 0, %v2050
    %v2052 = vrot.slane %v2034, %v2051
    %vm2054 = vcmask 523264
    %v2056 = vsel %vm2054, %v2021, 0
    %2058 = vmatprep.subr.mxu0 0.0
    %2059 = vmatpush1.msra.mxu0 0.0
    %2060 = vmatprep.subr.mxu0 0.0
    %2061 = vmatpush1.msra.mxu0 0.0
    %2062 = vmatprep.subr.mxu0 0.0
    %2063 = vmatpush1.msra.mxu0 0.0
    %2064 = vmatprep.subr.mxu0 0.0
    %2065 = vmatpush1.msra.mxu0 0.0
    %2066 = vmatprep.subr.mxu0 0.0
    %2067 = vmatpush1.msra.mxu0 0.0
    %2068 = vmatprep.subr.mxu0 0.0
    %2069 = vmatpush1.msra.mxu0 0.0
    %2070 = vmatprep.subr.mxu0 0.0
    %2071 = vmatpush1.msra.mxu0 0.0
    %2072 = vmatprep.subr.mxu0 0.0
    %2073 = vmatpush1.msra.mxu0 0.0
    %2074 = vmatprep.subr.mxu0 0.0
    %2075 = vmatpush1.msra.mxu0 %v2029
    %2076 = vmatprep.subr.mxu0 0.0
    %2077 = vmatpush1.msra.mxu0 %v2028
    %2078 = vmatprep.subr.mxu0 0.0
    %2079 = vmatpush1.msra.mxu0 %v2027
    %2080 = vmatprep.subr.mxu0 0.0
    %2081 = vmatpush1.msra.mxu0 %v2026
    %2082 = vmatprep.subr.mxu0 0.0
    %2083 = vmatpush1.msra.mxu0 %v2025
    %2084 = vmatprep.subr.mxu0 0.0
    %2085 = vmatpush1.msra.mxu0 %v2024
    %2086 = vmatprep.subr.mxu0 0.0
    %2087 = vmatpush1.msra.mxu0 %v2023
    %2088 = vmatprep.subr.mxu0 0.0
    %2089 = vmatpush1.msra.mxu0 %v2022
    %2090 = vmatprep.subr.mxu0 0.0
    %2091 = vmatpush2.msra.mxu0 0.0
    %2092 = vmatprep.subr.mxu0 0.0
    %2093 = vmatpush2.msra.mxu0 0.0
    %2094 = vmatprep.subr.mxu0 0.0
    %2095 = vmatpush2.msra.mxu0 0.0
    %2096 = vmatprep.subr.mxu0 0.0
    %2097 = vmatpush2.msra.mxu0 0.0
    %2098 = vmatprep.subr.mxu0 0.0
    %2099 = vmatpush2.msra.mxu0 0.0
    %2100 = vmatprep.subr.mxu0 0.0
    %2101 = vmatpush2.msra.mxu0 0.0
    %2102 = vmatprep.subr.mxu0 0.0
    %2103 = vmatpush2.msra.mxu0 0.0
    %2104 = vmatprep.subr.mxu0 0.0
    %2105 = vmatpush2.msra.mxu0 0.0
    %2106 = vmatprep.subr.mxu0 0.0
    %2107 = vmatpush2.msra.mxu0 0.0
    %2108 = vmatprep.subr.mxu0 0.0
    %2109 = vmatpush2.msra.mxu0 0.0
    %2110 = vmatprep.subr.mxu0 0.0
    %2111 = vmatpush2.msra.mxu0 0.0
    %2112 = vmatprep.subr.mxu0 0.0
    %2113 = vmatpush2.msra.mxu0 0.0
    %2114 = vmatprep.subr.mxu0 0.0
    %2115 = vmatpush2.msra.mxu0 0.0
    %2116 = vmatprep.subr.mxu0 0.0
    %2117 = vmatpush2.msra.mxu0 0.0
    %2118 = vmatprep.subr.mxu0 0.0
    %2119 = vmatpush2.msra.mxu0 0.0
    %2120 = vmatprep.subr.mxu0 0.0
    %2121 = vmatpush2.msra.mxu0 0.0
    %2122 = vmatprep.mubr.f32.mxu0 0.0
    %2123 = vmatmul.mubr.f32.gmra.mxu0 %v2056
    %v2124 = vpop.f32.mrf.mxu0
    %v2125 = vadd.f32 %v2052, %v2124
    %v2126 = vpop.f32.mrf.mxu0
    %2127 = vdwg.mxu0
    %v2129 = vlaneseq
    %v2130 = vshrl.u32 %v2129, 7
    %v2131 = vsub.s32 0, %v2130
    %v2132 = vrot.slane %v2047, %v2131
    %2134 = vmatprep.subr.mxu0 0.0
    %2135 = vmatpush1.msra.mxu0 0.0
    %2136 = vmatprep.subr.mxu0 0.0
    %2137 = vmatpush1.msra.mxu0 0.0
    %2138 = vmatprep.subr.mxu0 0.0
    %2139 = vmatpush1.msra.mxu0 0.0
    %2140 = vmatprep.subr.mxu0 0.0
    %2141 = vmatpush1.msra.mxu0 0.0
    %2142 = vmatprep.subr.mxu0 0.0
    %2143 = vmatpush1.msra.mxu0 0.0
    %2144 = vmatprep.subr.mxu0 0.0
    %2145 = vmatpush1.msra.mxu0 0.0
    %2146 = vmatprep.subr.mxu0 0.0
    %2147 = vmatpush1.msra.mxu0 0.0
    %2148 = vmatprep.subr.mxu0 0.0
    %2149 = vmatpush1.msra.mxu0 0.0
    %2150 = vmatprep.subr.mxu0 0.0
    %2151 = vmatpush1.msra.mxu0 %v2042
    %2152 = vmatprep.subr.mxu0 0.0
    %2153 = vmatpush1.msra.mxu0 %v2041
    %2154 = vmatprep.subr.mxu0 0.0
    %2155 = vmatpush1.msra.mxu0 %v2040
    %2156 = vmatprep.subr.mxu0 0.0
    %2157 = vmatpush1.msra.mxu0 %v2039
    %2158 = vmatprep.subr.mxu0 0.0
    %2159 = vmatpush1.msra.mxu0 %v2038
    %2160 = vmatprep.subr.mxu0 0.0
    %2161 = vmatpush1.msra.mxu0 %v2037
    %2162 = vmatprep.subr.mxu0 0.0
    %2163 = vmatpush1.msra.mxu0 %v2036
    %2164 = vmatprep.subr.mxu0 0.0
    %2165 = vmatpush1.msra.mxu0 %v2035
    %2166 = vmatprep.subr.mxu0 0.0
    %2167 = vmatpush2.msra.mxu0 0.0
    %2168 = vmatprep.subr.mxu0 0.0
    %2169 = vmatpush2.msra.mxu0 0.0
    %2170 = vmatprep.subr.mxu0 0.0
    %2171 = vmatpush2.msra.mxu0 0.0
    %2172 = vmatprep.subr.mxu0 0.0
    %2173 = vmatpush2.msra.mxu0 0.0
    %2174 = vmatprep.subr.mxu0 0.0
    %2175 = vmatpush2.msra.mxu0 0.0
    %2176 = vmatprep.subr.mxu0 0.0
    %2177 = vmatpush2.msra.mxu0 0.0
    %2178 = vmatprep.subr.mxu0 0.0
    %2179 = vmatpush2.msra.mxu0 0.0
    %2180 = vmatprep.subr.mxu0 0.0
    %2181 = vmatpush2.msra.mxu0 0.0
    %2182 = vmatprep.subr.mxu0 0.0
    %2183 = vmatpush2.msra.mxu0 0.0
    %2184 = vmatprep.subr.mxu0 0.0
    %2185 = vmatpush2.msra.mxu0 0.0
    %2186 = vmatprep.subr.mxu0 0.0
    %2187 = vmatpush2.msra.mxu0 0.0
    %2188 = vmatprep.subr.mxu0 0.0
    %2189 = vmatpush2.msra.mxu0 0.0
    %2190 = vmatprep.subr.mxu0 0.0
    %2191 = vmatpush2.msra.mxu0 0.0
    %2192 = vmatprep.subr.mxu0 0.0
    %2193 = vmatpush2.msra.mxu0 0.0
    %2194 = vmatprep.subr.mxu0 0.0
    %2195 = vmatpush2.msra.mxu0 0.0
    %2196 = vmatprep.subr.mxu0 0.0
    %2197 = vmatpush2.msra.mxu0 0.0
    %2198 = vmatprep.mubr.f32.mxu0 0.0
    %2199 = vmatmul.mubr.f32.gmra.mxu0 %v2056
    %v2200 = vpop.f32.mrf.mxu0
    %v2201 = vadd.f32 %v2132, %v2200
    %v2202 = vpop.f32.mrf.mxu0
    %2203 = vdwg.mxu0
    %2204 = vmatprep.subr.mxu0 0.0
    %2205 = vmatpush1.msra.mxu0 0.0
    %2206 = vmatprep.subr.mxu0 0.0
    %2207 = vmatpush1.msra.mxu0 0.0
    %2208 = vmatprep.subr.mxu0 0.0
    %2209 = vmatpush1.msra.mxu0 0.0
    %2210 = vmatprep.subr.mxu0 0.0
    %2211 = vmatpush1.msra.mxu0 0.0
    %2212 = vmatprep.subr.mxu0 0.0
    %2213 = vmatpush1.msra.mxu0 0.0
    %2214 = vmatprep.subr.mxu0 0.0
    %2215 = vmatpush1.msra.mxu0 0.0
    %2216 = vmatprep.subr.mxu0 0.0
    %2217 = vmatpush1.msra.mxu0 0.0
    %2218 = vmatprep.subr.mxu0 0.0
    %2219 = vmatpush1.msra.mxu0 0.0
    %2220 = vmatprep.subr.mxu0 0.0
    %2221 = vmatpush1.msra.mxu0 0.0
    %2222 = vmatprep.subr.mxu0 0.0
    %2223 = vmatpush1.msra.mxu0 0.0
    %2224 = vmatprep.subr.mxu0 0.0
    %2225 = vmatpush1.msra.mxu0 0.0
    %2226 = vmatprep.subr.mxu0 0.0
    %2227 = vmatpush1.msra.mxu0 0.0
    %2228 = vmatprep.subr.mxu0 0.0
    %2229 = vmatpush1.msra.mxu0 %v2033
    %2230 = vmatprep.subr.mxu0 0.0
    %2231 = vmatpush1.msra.mxu0 %v2032
    %2232 = vmatprep.subr.mxu0 0.0
    %2233 = vmatpush1.msra.mxu0 %v2031
    %2234 = vmatprep.subr.mxu0 0.0
    %2235 = vmatpush1.msra.mxu0 %v2030
    %2236 = vmatprep.subr.mxu0 0.0
    %2237 = vmatpush2.msra.mxu0 0.0
    %2238 = vmatprep.subr.mxu0 0.0
    %2239 = vmatpush2.msra.mxu0 0.0
    %2240 = vmatprep.subr.mxu0 0.0
    %2241 = vmatpush2.msra.mxu0 0.0
    %2242 = vmatprep.subr.mxu0 0.0
    %2243 = vmatpush2.msra.mxu0 0.0
    %2244 = vmatprep.subr.mxu0 0.0
    %2245 = vmatpush2.msra.mxu0 0.0
    %2246 = vmatprep.subr.mxu0 0.0
    %2247 = vmatpush2.msra.mxu0 0.0
    %2248 = vmatprep.subr.mxu0 0.0
    %2249 = vmatpush2.msra.mxu0 0.0
    %2250 = vmatprep.subr.mxu0 0.0
    %2251 = vmatpush2.msra.mxu0 0.0
    %2252 = vmatprep.subr.mxu0 0.0
    %2253 = vmatpush2.msra.mxu0 0.0
    %2254 = vmatprep.subr.mxu0 0.0
    %2255 = vmatpush2.msra.mxu0 0.0
    %2256 = vmatprep.subr.mxu0 0.0
    %2257 = vmatpush2.msra.mxu0 0.0
    %2258 = vmatprep.subr.mxu0 0.0
    %2259 = vmatpush2.msra.mxu0 0.0
    %2260 = vmatprep.subr.mxu0 0.0
    %2261 = vmatpush2.msra.mxu0 0.0
    %2262 = vmatprep.subr.mxu0 0.0
    %2263 = vmatpush2.msra.mxu0 0.0
    %2264 = vmatprep.subr.mxu0 0.0
    %2265 = vmatpush2.msra.mxu0 0.0
    %2266 = vmatprep.subr.mxu0 0.0
    %2267 = vmatpush2.msra.mxu0 0.0
    %2268 = vmatprep.mubr.f32.mxu0 0.0
    %2269 = vmatmul.mubr.f32.gmra.mxu0 %v250
    %v2270 = vpop.f32.mrf.mxu0
    %v2271 = vadd.f32 0.0, %v2270
    %v2272 = vpop.f32.mrf.mxu0
    %2273 = vdwg.mxu0
    %v2274 = vadd.f32 %v2125, %v2271
    %v2275 = vxor.u32 %v2274, 2147483648
    %v2276 = vmul.f32 %v2275, 1.442695
    %v2277 = vpow.pop %v2276
    %v2278 = vadd.f32 %v2277, 1.0
    %v2279 = vrcp.pop %v2278
    %v2280 = vmul.f32 1.0, %v2279
    %v2281 = vtanh.pop %v2274
    %v2282 = vmul.f32 %v2280, 0.0
    %2284 = vrot.lane.b32.xlu0 %v2281, 64
    %v2285 = vpop.permute.xlu0 %2284
    %v2287 = vmul.f32 %v2280, %v2285
    %2289 = vrot.lane.b32.xlu0 %v2287, 32
    %v2290 = vpop.permute.xlu0 %2289
    %v2292 = vadd.f32 %v2282, %v2290
    %v2293 = vtanh.pop %v2292
    %2295 = vrot.lane.b32.xlu0 %v2293, 64
    %v2296 = vpop.permute.xlu0 %2295
    %v2298 = vmul.f32 %v2280, %v2296
    %2300 = vrot.lane.b32.xlu0 %v2298, 64
    %v2301 = vpop.permute.xlu0 %2300
    %2303 = vst.msk [vmem:[#allocation3] sm:$0x1] %vm351, %v2301
    %2304 = vrot.lane.b32.xlu0 %v2298, 32
    %v2305 = vpop.permute.xlu0 %2304
    %v2306 = vsel %vm248, %v2305, 0
    %2308 = vmatprep.subr.mxu0 0.0
    %2309 = vmatpush1.msra.mxu0 0.0
    %2310 = vmatprep.subr.mxu0 0.0
    %2311 = vmatpush1.msra.mxu0 0.0
    %2312 = vmatprep.subr.mxu0 0.0
    %2313 = vmatpush1.msra.mxu0 0.0
    %2314 = vmatprep.subr.mxu0 0.0
    %2315 = vmatpush1.msra.mxu0 0.0
    %2316 = vmatprep.subr.mxu0 0.0
    %2317 = vmatpush1.msra.mxu0 0.0
    %2318 = vmatprep.subr.mxu0 0.0
    %2319 = vmatpush1.msra.mxu0 0.0
    %2320 = vmatprep.subr.mxu0 0.0
    %2321 = vmatpush1.msra.mxu0 0.0
    %2322 = vmatprep.subr.mxu0 0.0
    %2323 = vmatpush1.msra.mxu0 0.0
    %2324 = vmatprep.subr.mxu0 0.0
    %2325 = vmatpush1.msra.mxu0 0.0
    %2326 = vmatprep.subr.mxu0 0.0
    %2327 = vmatpush1.msra.mxu0 0.0
    %2328 = vmatprep.subr.mxu0 0.0
    %2329 = vmatpush1.msra.mxu0 0.0
    %2330 = vmatprep.subr.mxu0 0.0
    %2331 = vmatpush1.msra.mxu0 0.0
    %2332 = vmatprep.subr.mxu0 0.0
    %2333 = vmatpush1.msra.mxu0 %v2033
    %2334 = vmatprep.subr.mxu0 0.0
    %2335 = vmatpush1.msra.mxu0 %v2032
    %2336 = vmatprep.subr.mxu0 0.0
    %2337 = vmatpush1.msra.mxu0 %v2031
    %2338 = vmatprep.subr.mxu0 0.0
    %2339 = vmatpush1.msra.mxu0 %v2030
    %2340 = vmatprep.subr.mxu0 0.0
    %2341 = vmatpush2.msra.mxu0 0.0
    %2342 = vmatprep.subr.mxu0 0.0
    %2343 = vmatpush2.msra.mxu0 0.0
    %2344 = vmatprep.subr.mxu0 0.0
    %2345 = vmatpush2.msra.mxu0 0.0
    %2346 = vmatprep.subr.mxu0 0.0
    %2347 = vmatpush2.msra.mxu0 0.0
    %2348 = vmatprep.subr.mxu0 0.0
    %2349 = vmatpush2.msra.mxu0 0.0
    %2350 = vmatprep.subr.mxu0 0.0
    %2351 = vmatpush2.msra.mxu0 0.0
    %2352 = vmatprep.subr.mxu0 0.0
    %2353 = vmatpush2.msra.mxu0 0.0
    %2354 = vmatprep.subr.mxu0 0.0
    %2355 = vmatpush2.msra.mxu0 0.0
    %2356 = vmatprep.subr.mxu0 0.0
    %2357 = vmatpush2.msra.mxu0 0.0
    %2358 = vmatprep.subr.mxu0 0.0
    %2359 = vmatpush2.msra.mxu0 0.0
    %2360 = vmatprep.subr.mxu0 0.0
    %2361 = vmatpush2.msra.mxu0 0.0
    %2362 = vmatprep.subr.mxu0 0.0
    %2363 = vmatpush2.msra.mxu0 0.0
    %2364 = vmatprep.subr.mxu0 0.0
    %2365 = vmatpush2.msra.mxu0 0.0
    %2366 = vmatprep.subr.mxu0 0.0
    %2367 = vmatpush2.msra.mxu0 0.0
    %2368 = vmatprep.subr.mxu0 0.0
    %2369 = vmatpush2.msra.mxu0 0.0
    %2370 = vmatprep.subr.mxu0 0.0
    %2371 = vmatpush2.msra.mxu0 0.0
    %2372 = vmatprep.mubr.f32.mxu0 0.0
    %2373 = vmatmul.mubr.f32.gmra.mxu0 %v2306
    %v2374 = vpop.f32.mrf.mxu0
    %v2375 = vadd.f32 0.0, %v2374
    %v2376 = vpop.f32.mrf.mxu0
    %2377 = vdwg.mxu0
    %v2379 = vrot.slane %v2375, 7
    %v2381 = vadd.f32 %v2125, %v2379
    %v2382 = vxor.u32 %v2381, 2147483648
    %v2383 = vmul.f32 %v2382, 1.442695
    %v2384 = vpow.pop %v2383
    %v2385 = vadd.f32 %v2384, 1.0
    %v2386 = vrcp.pop %v2385
    %v2387 = vmul.f32 1.0, %v2386
    %v2388 = vtanh.pop %v2381
    %v2390 = vrot.slane %v2292, 7
    %v2392 = vmul.f32 %v2387, %v2390
    %2394 = vrot.lane.b32.xlu0 %v2388, 64
    %v2395 = vpop.permute.xlu0 %2394
    %v2397 = vmul.f32 %v2387, %v2395
    %2399 = vrot.lane.b32.xlu0 %v2397, 32
    %v2400 = vpop.permute.xlu0 %2399
    %v2402 = vadd.f32 %v2392, %v2400
    %v2403 = vtanh.pop %v2402
    %2405 = vrot.lane.b32.xlu0 %v2403, 64
    %v2406 = vpop.permute.xlu0 %2405
    %v2408 = vmul.f32 %v2387, %v2406
    %2410 = vrot.lane.b32.xlu0 %v2408, 64
    %v2411 = vpop.permute.xlu0 %2410
    %2413 = vst.msk [vmem:[#allocation3] sm:$0x2] %vm462, %v2411
    %v2414 = vrot.slane %v2408, 1
    %2415 = vrot.lane.b32.xlu0 %v2414, 32
    %v2416 = vpop.permute.xlu0 %2415
    %v2417 = vsel %vm248, %v2416, 0
    %2419 = vmatprep.subr.mxu0 0.0
    %2420 = vmatpush1.msra.mxu0 0.0
    %2421 = vmatprep.subr.mxu0 0.0
    %2422 = vmatpush1.msra.mxu0 0.0
    %2423 = vmatprep.subr.mxu0 0.0
    %2424 = vmatpush1.msra.mxu0 0.0
    %2425 = vmatprep.subr.mxu0 0.0
    %2426 = vmatpush1.msra.mxu0 0.0
    %2427 = vmatprep.subr.mxu0 0.0
    %2428 = vmatpush1.msra.mxu0 0.0
    %2429 = vmatprep.subr.mxu0 0.0
    %2430 = vmatpush1.msra.mxu0 0.0
    %2431 = vmatprep.subr.mxu0 0.0
    %2432 = vmatpush1.msra.mxu0 0.0
    %2433 = vmatprep.subr.mxu0 0.0
    %2434 = vmatpush1.msra.mxu0 0.0
    %2435 = vmatprep.subr.mxu0 0.0
    %2436 = vmatpush1.msra.mxu0 0.0
    %2437 = vmatprep.subr.mxu0 0.0
    %2438 = vmatpush1.msra.mxu0 0.0
    %2439 = vmatprep.subr.mxu0 0.0
    %2440 = vmatpush1.msra.mxu0 0.0
    %2441 = vmatprep.subr.mxu0 0.0
    %2442 = vmatpush1.msra.mxu0 0.0
    %2443 = vmatprep.subr.mxu0 0.0
    %2444 = vmatpush1.msra.mxu0 %v2033
    %2445 = vmatprep.subr.mxu0 0.0
    %2446 = vmatpush1.msra.mxu0 %v2032
    %2447 = vmatprep.subr.mxu0 0.0
    %2448 = vmatpush1.msra.mxu0 %v2031
    %2449 = vmatprep.subr.mxu0 0.0
    %2450 = vmatpush1.msra.mxu0 %v2030
    %2451 = vmatprep.subr.mxu0 0.0
    %2452 = vmatpush2.msra.mxu0 0.0
    %2453 = vmatprep.subr.mxu0 0.0
    %2454 = vmatpush2.msra.mxu0 0.0
    %2455 = vmatprep.subr.mxu0 0.0
    %2456 = vmatpush2.msra.mxu0 0.0
    %2457 = vmatprep.subr.mxu0 0.0
    %2458 = vmatpush2.msra.mxu0 0.0
    %2459 = vmatprep.subr.mxu0 0.0
    %2460 = vmatpush2.msra.mxu0 0.0
    %2461 = vmatprep.subr.mxu0 0.0
    %2462 = vmatpush2.msra.mxu0 0.0
    %2463 = vmatprep.subr.mxu0 0.0
    %2464 = vmatpush2.msra.mxu0 0.0
    %2465 = vmatprep.subr.mxu0 0.0
    %2466 = vmatpush2.msra.mxu0 0.0
    %2467 = vmatprep.subr.mxu0 0.0
    %2468 = vmatpush2.msra.mxu0 0.0
    %2469 = vmatprep.subr.mxu0 0.0
    %2470 = vmatpush2.msra.mxu0 0.0
    %2471 = vmatprep.subr.mxu0 0.0
    %2472 = vmatpush2.msra.mxu0 0.0
    %2473 = vmatprep.subr.mxu0 0.0
    %2474 = vmatpush2.msra.mxu0 0.0
    %2475 = vmatprep.subr.mxu0 0.0
    %2476 = vmatpush2.msra.mxu0 0.0
    %2477 = vmatprep.subr.mxu0 0.0
    %2478 = vmatpush2.msra.mxu0 0.0
    %2479 = vmatprep.subr.mxu0 0.0
    %2480 = vmatpush2.msra.mxu0 0.0
    %2481 = vmatprep.subr.mxu0 0.0
    %2482 = vmatpush2.msra.mxu0 0.0
    %2483 = vmatprep.mubr.f32.mxu0 0.0
    %2484 = vmatmul.mubr.f32.gmra.mxu0 %v2417
    %v2485 = vpop.f32.mrf.mxu0
    %v2486 = vadd.f32 0.0, %v2485
    %v2487 = vpop.f32.mrf.mxu0
    %2488 = vdwg.mxu0
    %v2490 = vrot.slane %v2486, 6
    %v2492 = vadd.f32 %v2125, %v2490
    %v2493 = vxor.u32 %v2492, 2147483648
    %v2494 = vmul.f32 %v2493, 1.442695
    %v2495 = vpow.pop %v2494
    %v2496 = vadd.f32 %v2495, 1.0
    %v2497 = vrcp.pop %v2496
    %v2498 = vmul.f32 1.0, %v2497
    %v2499 = vtanh.pop %v2492
    %v2501 = vrot.slane %v2402, 7
    %v2503 = vmul.f32 %v2498, %v2501
    %2505 = vrot.lane.b32.xlu0 %v2499, 64
    %v2506 = vpop.permute.xlu0 %2505
    %v2508 = vmul.f32 %v2498, %v2506
    %2510 = vrot.lane.b32.xlu0 %v2508, 32
    %v2511 = vpop.permute.xlu0 %2510
    %v2513 = vadd.f32 %v2503, %v2511
    %v2514 = vtanh.pop %v2513
    %2516 = vrot.lane.b32.xlu0 %v2514, 64
    %v2517 = vpop.permute.xlu0 %2516
    %v2519 = vmul.f32 %v2498, %v2517
    %2521 = vrot.lane.b32.xlu0 %v2519, 64
    %v2522 = vpop.permute.xlu0 %2521
    %2524 = vst.msk [vmem:[#allocation3] sm:$0x4] %vm574, %v2522
    %v2525 = vrot.slane %v2519, 2
    %2526 = vrot.lane.b32.xlu0 %v2525, 32
    %v2527 = vpop.permute.xlu0 %2526
    %v2528 = vsel %vm248, %v2527, 0
    %2530 = vmatprep.subr.mxu0 0.0
    %2531 = vmatpush1.msra.mxu0 0.0
    %2532 = vmatprep.subr.mxu0 0.0
    %2533 = vmatpush1.msra.mxu0 0.0
    %2534 = vmatprep.subr.mxu0 0.0
    %2535 = vmatpush1.msra.mxu0 0.0
    %2536 = vmatprep.subr.mxu0 0.0
    %2537 = vmatpush1.msra.mxu0 0.0
    %2538 = vmatprep.subr.mxu0 0.0
    %2539 = vmatpush1.msra.mxu0 0.0
    %2540 = vmatprep.subr.mxu0 0.0
    %2541 = vmatpush1.msra.mxu0 0.0
    %2542 = vmatprep.subr.mxu0 0.0
    %2543 = vmatpush1.msra.mxu0 0.0
    %2544 = vmatprep.subr.mxu0 0.0
    %2545 = vmatpush1.msra.mxu0 0.0
    %2546 = vmatprep.subr.mxu0 0.0
    %2547 = vmatpush1.msra.mxu0 0.0
    %2548 = vmatprep.subr.mxu0 0.0
    %2549 = vmatpush1.msra.mxu0 0.0
    %2550 = vmatprep.subr.mxu0 0.0
    %2551 = vmatpush1.msra.mxu0 0.0
    %2552 = vmatprep.subr.mxu0 0.0
    %2553 = vmatpush1.msra.mxu0 0.0
    %2554 = vmatprep.subr.mxu0 0.0
    %2555 = vmatpush1.msra.mxu0 %v2033
    %2556 = vmatprep.subr.mxu0 0.0
    %2557 = vmatpush1.msra.mxu0 %v2032
    %2558 = vmatprep.subr.mxu0 0.0
    %2559 = vmatpush1.msra.mxu0 %v2031
    %2560 = vmatprep.subr.mxu0 0.0
    %2561 = vmatpush1.msra.mxu0 %v2030
    %2562 = vmatprep.subr.mxu0 0.0
    %2563 = vmatpush2.msra.mxu0 0.0
    %2564 = vmatprep.subr.mxu0 0.0
    %2565 = vmatpush2.msra.mxu0 0.0
    %2566 = vmatprep.subr.mxu0 0.0
    %2567 = vmatpush2.msra.mxu0 0.0
    %2568 = vmatprep.subr.mxu0 0.0
    %2569 = vmatpush2.msra.mxu0 0.0
    %2570 = vmatprep.subr.mxu0 0.0
    %2571 = vmatpush2.msra.mxu0 0.0
    %2572 = vmatprep.subr.mxu0 0.0
    %2573 = vmatpush2.msra.mxu0 0.0
    %2574 = vmatprep.subr.mxu0 0.0
    %2575 = vmatpush2.msra.mxu0 0.0
    %2576 = vmatprep.subr.mxu0 0.0
    %2577 = vmatpush2.msra.mxu0 0.0
    %2578 = vmatprep.subr.mxu0 0.0
    %2579 = vmatpush2.msra.mxu0 0.0
    %2580 = vmatprep.subr.mxu0 0.0
    %2581 = vmatpush2.msra.mxu0 0.0
    %2582 = vmatprep.subr.mxu0 0.0
    %2583 = vmatpush2.msra.mxu0 0.0
    %2584 = vmatprep.subr.mxu0 0.0
    %2585 = vmatpush2.msra.mxu0 0.0
    %2586 = vmatprep.subr.mxu0 0.0
    %2587 = vmatpush2.msra.mxu0 0.0
    %2588 = vmatprep.subr.mxu0 0.0
    %2589 = vmatpush2.msra.mxu0 0.0
    %2590 = vmatprep.subr.mxu0 0.0
    %2591 = vmatpush2.msra.mxu0 0.0
    %2592 = vmatprep.subr.mxu0 0.0
    %2593 = vmatpush2.msra.mxu0 0.0
    %2594 = vmatprep.mubr.f32.mxu0 0.0
    %2595 = vmatmul.mubr.f32.gmra.mxu0 %v2528
    %v2596 = vpop.f32.mrf.mxu0
    %v2597 = vadd.f32 0.0, %v2596
    %v2598 = vpop.f32.mrf.mxu0
    %2599 = vdwg.mxu0
    %v2601 = vrot.slane %v2597, 5
    %v2603 = vadd.f32 %v2125, %v2601
    %v2604 = vxor.u32 %v2603, 2147483648
    %v2605 = vmul.f32 %v2604, 1.442695
    %v2606 = vpow.pop %v2605
    %v2607 = vadd.f32 %v2606, 1.0
    %v2608 = vrcp.pop %v2607
    %v2609 = vmul.f32 1.0, %v2608
    %v2610 = vtanh.pop %v2603
    %v2612 = vrot.slane %v2513, 7
    %v2614 = vmul.f32 %v2609, %v2612
    %2616 = vrot.lane.b32.xlu0 %v2610, 64
    %v2617 = vpop.permute.xlu0 %2616
    %v2619 = vmul.f32 %v2609, %v2617
    %2621 = vrot.lane.b32.xlu0 %v2619, 32
    %v2622 = vpop.permute.xlu0 %2621
    %v2624 = vadd.f32 %v2614, %v2622
    %v2625 = vtanh.pop %v2624
    %2627 = vrot.lane.b32.xlu0 %v2625, 64
    %v2628 = vpop.permute.xlu0 %2627
    %v2630 = vmul.f32 %v2609, %v2628
    %2632 = vrot.lane.b32.xlu0 %v2630, 64
    %v2633 = vpop.permute.xlu0 %2632
    %2635 = vst.msk [vmem:[#allocation3] sm:$0x8] %vm686, %v2633
    %v2636 = vrot.slane %v2630, 3
    %2637 = vrot.lane.b32.xlu0 %v2636, 32
    %v2638 = vpop.permute.xlu0 %2637
    %v2639 = vsel %vm248, %v2638, 0
    %2641 = vmatprep.subr.mxu0 0.0
    %2642 = vmatpush1.msra.mxu0 0.0
    %2643 = vmatprep.subr.mxu0 0.0
    %2644 = vmatpush1.msra.mxu0 0.0
    %2645 = vmatprep.subr.mxu0 0.0
    %2646 = vmatpush1.msra.mxu0 0.0
    %2647 = vmatprep.subr.mxu0 0.0
    %2648 = vmatpush1.msra.mxu0 0.0
    %2649 = vmatprep.subr.mxu0 0.0
    %2650 = vmatpush1.msra.mxu0 0.0
    %2651 = vmatprep.subr.mxu0 0.0
    %2652 = vmatpush1.msra.mxu0 0.0
    %2653 = vmatprep.subr.mxu0 0.0
    %2654 = vmatpush1.msra.mxu0 0.0
    %2655 = vmatprep.subr.mxu0 0.0
    %2656 = vmatpush1.msra.mxu0 0.0
    %2657 = vmatprep.subr.mxu0 0.0
    %2658 = vmatpush1.msra.mxu0 0.0
    %2659 = vmatprep.subr.mxu0 0.0
    %2660 = vmatpush1.msra.mxu0 0.0
    %2661 = vmatprep.subr.mxu0 0.0
    %2662 = vmatpush1.msra.mxu0 0.0
    %2663 = vmatprep.subr.mxu0 0.0
    %2664 = vmatpush1.msra.mxu0 0.0
    %2665 = vmatprep.subr.mxu0 0.0
    %2666 = vmatpush1.msra.mxu0 %v2033
    %2667 = vmatprep.subr.mxu0 0.0
    %2668 = vmatpush1.msra.mxu0 %v2032
    %2669 = vmatprep.subr.mxu0 0.0
    %2670 = vmatpush1.msra.mxu0 %v2031
    %2671 = vmatprep.subr.mxu0 0.0
    %2672 = vmatpush1.msra.mxu0 %v2030
    %2673 = vmatprep.subr.mxu0 0.0
    %2674 = vmatpush2.msra.mxu0 0.0
    %2675 = vmatprep.subr.mxu0 0.0
    %2676 = vmatpush2.msra.mxu0 0.0
    %2677 = vmatprep.subr.mxu0 0.0
    %2678 = vmatpush2.msra.mxu0 0.0
    %2679 = vmatprep.subr.mxu0 0.0
    %2680 = vmatpush2.msra.mxu0 0.0
    %2681 = vmatprep.subr.mxu0 0.0
    %2682 = vmatpush2.msra.mxu0 0.0
    %2683 = vmatprep.subr.mxu0 0.0
    %2684 = vmatpush2.msra.mxu0 0.0
    %2685 = vmatprep.subr.mxu0 0.0
    %2686 = vmatpush2.msra.mxu0 0.0
    %2687 = vmatprep.subr.mxu0 0.0
    %2688 = vmatpush2.msra.mxu0 0.0
    %2689 = vmatprep.subr.mxu0 0.0
    %2690 = vmatpush2.msra.mxu0 0.0
    %2691 = vmatprep.subr.mxu0 0.0
    %2692 = vmatpush2.msra.mxu0 0.0
    %2693 = vmatprep.subr.mxu0 0.0
    %2694 = vmatpush2.msra.mxu0 0.0
    %2695 = vmatprep.subr.mxu0 0.0
    %2696 = vmatpush2.msra.mxu0 0.0
    %2697 = vmatprep.subr.mxu0 0.0
    %2698 = vmatpush2.msra.mxu0 0.0
    %2699 = vmatprep.subr.mxu0 0.0
    %2700 = vmatpush2.msra.mxu0 0.0
    %2701 = vmatprep.subr.mxu0 0.0
    %2702 = vmatpush2.msra.mxu0 0.0
    %2703 = vmatprep.subr.mxu0 0.0
    %2704 = vmatpush2.msra.mxu0 0.0
    %2705 = vmatprep.mubr.f32.mxu0 0.0
    %2706 = vmatmul.mubr.f32.gmra.mxu0 %v2639
    %v2707 = vpop.f32.mrf.mxu0
    %v2708 = vadd.f32 0.0, %v2707
    %v2709 = vpop.f32.mrf.mxu0
    %2710 = vdwg.mxu0
    %v2712 = vrot.slane %v2708, 4
    %v2714 = vadd.f32 %v2125, %v2712
    %v2715 = vxor.u32 %v2714, 2147483648
    %v2716 = vmul.f32 %v2715, 1.442695
    %v2717 = vpow.pop %v2716
    %v2718 = vadd.f32 %v2717, 1.0
    %v2719 = vrcp.pop %v2718
    %v2720 = vmul.f32 1.0, %v2719
    %v2721 = vtanh.pop %v2714
    %v2723 = vrot.slane %v2624, 7
    %v2725 = vmul.f32 %v2720, %v2723
    %2727 = vrot.lane.b32.xlu0 %v2721, 64
    %v2728 = vpop.permute.xlu0 %2727
    %v2730 = vmul.f32 %v2720, %v2728
    %2732 = vrot.lane.b32.xlu0 %v2730, 32
    %v2733 = vpop.permute.xlu0 %2732
    %v2735 = vadd.f32 %v2725, %v2733
    %v2736 = vtanh.pop %v2735
    %2738 = vrot.lane.b32.xlu0 %v2736, 64
    %v2739 = vpop.permute.xlu0 %2738
    %v2741 = vmul.f32 %v2720, %v2739
    %2743 = vrot.lane.b32.xlu0 %v2741, 64
    %v2744 = vpop.permute.xlu0 %2743
    %2746 = vst.msk [vmem:[#allocation3] sm:$0x10] %vm798, %v2744
    %v2747 = vrot.slane %v2741, 4
    %2748 = vrot.lane.b32.xlu0 %v2747, 32
    %v2749 = vpop.permute.xlu0 %2748
    %v2750 = vsel %vm248, %v2749, 0
    %2752 = vmatprep.subr.mxu0 0.0
    %2753 = vmatpush1.msra.mxu0 0.0
    %2754 = vmatprep.subr.mxu0 0.0
    %2755 = vmatpush1.msra.mxu0 0.0
    %2756 = vmatprep.subr.mxu0 0.0
    %2757 = vmatpush1.msra.mxu0 0.0
    %2758 = vmatprep.subr.mxu0 0.0
    %2759 = vmatpush1.msra.mxu0 0.0
    %2760 = vmatprep.subr.mxu0 0.0
    %2761 = vmatpush1.msra.mxu0 0.0
    %2762 = vmatprep.subr.mxu0 0.0
    %2763 = vmatpush1.msra.mxu0 0.0
    %2764 = vmatprep.subr.mxu0 0.0
    %2765 = vmatpush1.msra.mxu0 0.0
    %2766 = vmatprep.subr.mxu0 0.0
    %2767 = vmatpush1.msra.mxu0 0.0
    %2768 = vmatprep.subr.mxu0 0.0
    %2769 = vmatpush1.msra.mxu0 0.0
    %2770 = vmatprep.subr.mxu0 0.0
    %2771 = vmatpush1.msra.mxu0 0.0
    %2772 = vmatprep.subr.mxu0 0.0
    %2773 = vmatpush1.msra.mxu0 0.0
    %2774 = vmatprep.subr.mxu0 0.0
    %2775 = vmatpush1.msra.mxu0 0.0
    %2776 = vmatprep.subr.mxu0 0.0
    %2777 = vmatpush1.msra.mxu0 %v2033
    %2778 = vmatprep.subr.mxu0 0.0
    %2779 = vmatpush1.msra.mxu0 %v2032
    %2780 = vmatprep.subr.mxu0 0.0
    %2781 = vmatpush1.msra.mxu0 %v2031
    %2782 = vmatprep.subr.mxu0 0.0
    %2783 = vmatpush1.msra.mxu0 %v2030
    %2784 = vmatprep.subr.mxu0 0.0
    %2785 = vmatpush2.msra.mxu0 0.0
    %2786 = vmatprep.subr.mxu0 0.0
    %2787 = vmatpush2.msra.mxu0 0.0
    %2788 = vmatprep.subr.mxu0 0.0
    %2789 = vmatpush2.msra.mxu0 0.0
    %2790 = vmatprep.subr.mxu0 0.0
    %2791 = vmatpush2.msra.mxu0 0.0
    %2792 = vmatprep.subr.mxu0 0.0
    %2793 = vmatpush2.msra.mxu0 0.0
    %2794 = vmatprep.subr.mxu0 0.0
    %2795 = vmatpush2.msra.mxu0 0.0
    %2796 = vmatprep.subr.mxu0 0.0
    %2797 = vmatpush2.msra.mxu0 0.0
    %2798 = vmatprep.subr.mxu0 0.0
    %2799 = vmatpush2.msra.mxu0 0.0
    %2800 = vmatprep.subr.mxu0 0.0
    %2801 = vmatpush2.msra.mxu0 0.0
    %2802 = vmatprep.subr.mxu0 0.0
    %2803 = vmatpush2.msra.mxu0 0.0
    %2804 = vmatprep.subr.mxu0 0.0
    %2805 = vmatpush2.msra.mxu0 0.0
    %2806 = vmatprep.subr.mxu0 0.0
    %2807 = vmatpush2.msra.mxu0 0.0
    %2808 = vmatprep.subr.mxu0 0.0
    %2809 = vmatpush2.msra.mxu0 0.0
    %2810 = vmatprep.subr.mxu0 0.0
    %2811 = vmatpush2.msra.mxu0 0.0
    %2812 = vmatprep.subr.mxu0 0.0
    %2813 = vmatpush2.msra.mxu0 0.0
    %2814 = vmatprep.subr.mxu0 0.0
    %2815 = vmatpush2.msra.mxu0 0.0
    %2816 = vmatprep.mubr.f32.mxu0 0.0
    %2817 = vmatmul.mubr.f32.gmra.mxu0 %v2750
    %v2818 = vpop.f32.mrf.mxu0
    %v2819 = vadd.f32 0.0, %v2818
    %v2820 = vpop.f32.mrf.mxu0
    %2821 = vdwg.mxu0
    %v2823 = vrot.slane %v2819, 3
    %v2825 = vadd.f32 %v2125, %v2823
    %v2826 = vxor.u32 %v2825, 2147483648
    %v2827 = vmul.f32 %v2826, 1.442695
    %v2828 = vpow.pop %v2827
    %v2829 = vadd.f32 %v2828, 1.0
    %v2830 = vrcp.pop %v2829
    %v2831 = vmul.f32 1.0, %v2830
    %v2832 = vtanh.pop %v2825
    %v2834 = vrot.slane %v2735, 7
    %v2836 = vmul.f32 %v2831, %v2834
    %2838 = vrot.lane.b32.xlu0 %v2832, 64
    %v2839 = vpop.permute.xlu0 %2838
    %v2841 = vmul.f32 %v2831, %v2839
    %2843 = vrot.lane.b32.xlu0 %v2841, 32
    %v2844 = vpop.permute.xlu0 %2843
    %v2846 = vadd.f32 %v2836, %v2844
    %v2847 = vtanh.pop %v2846
    %2849 = vrot.lane.b32.xlu0 %v2847, 64
    %v2850 = vpop.permute.xlu0 %2849
    %v2852 = vmul.f32 %v2831, %v2850
    %2854 = vrot.lane.b32.xlu0 %v2852, 64
    %v2855 = vpop.permute.xlu0 %2854
    %2857 = vst.msk [vmem:[#allocation3] sm:$0x20] %vm910, %v2855
    %v2858 = vrot.slane %v2852, 5
    %2859 = vrot.lane.b32.xlu0 %v2858, 32
    %v2860 = vpop.permute.xlu0 %2859
    %v2861 = vsel %vm248, %v2860, 0
    %2863 = vmatprep.subr.mxu0 0.0
    %2864 = vmatpush1.msra.mxu0 0.0
    %2865 = vmatprep.subr.mxu0 0.0
    %2866 = vmatpush1.msra.mxu0 0.0
    %2867 = vmatprep.subr.mxu0 0.0
    %2868 = vmatpush1.msra.mxu0 0.0
    %2869 = vmatprep.subr.mxu0 0.0
    %2870 = vmatpush1.msra.mxu0 0.0
    %2871 = vmatprep.subr.mxu0 0.0
    %2872 = vmatpush1.msra.mxu0 0.0
    %2873 = vmatprep.subr.mxu0 0.0
    %2874 = vmatpush1.msra.mxu0 0.0
    %2875 = vmatprep.subr.mxu0 0.0
    %2876 = vmatpush1.msra.mxu0 0.0
    %2877 = vmatprep.subr.mxu0 0.0
    %2878 = vmatpush1.msra.mxu0 0.0
    %2879 = vmatprep.subr.mxu0 0.0
    %2880 = vmatpush1.msra.mxu0 0.0
    %2881 = vmatprep.subr.mxu0 0.0
    %2882 = vmatpush1.msra.mxu0 0.0
    %2883 = vmatprep.subr.mxu0 0.0
    %2884 = vmatpush1.msra.mxu0 0.0
    %2885 = vmatprep.subr.mxu0 0.0
    %2886 = vmatpush1.msra.mxu0 0.0
    %2887 = vmatprep.subr.mxu0 0.0
    %2888 = vmatpush1.msra.mxu0 %v2033
    %2889 = vmatprep.subr.mxu0 0.0
    %2890 = vmatpush1.msra.mxu0 %v2032
    %2891 = vmatprep.subr.mxu0 0.0
    %2892 = vmatpush1.msra.mxu0 %v2031
    %2893 = vmatprep.subr.mxu0 0.0
    %2894 = vmatpush1.msra.mxu0 %v2030
    %2895 = vmatprep.subr.mxu0 0.0
    %2896 = vmatpush2.msra.mxu0 0.0
    %2897 = vmatprep.subr.mxu0 0.0
    %2898 = vmatpush2.msra.mxu0 0.0
    %2899 = vmatprep.subr.mxu0 0.0
    %2900 = vmatpush2.msra.mxu0 0.0
    %2901 = vmatprep.subr.mxu0 0.0
    %2902 = vmatpush2.msra.mxu0 0.0
    %2903 = vmatprep.subr.mxu0 0.0
    %2904 = vmatpush2.msra.mxu0 0.0
    %2905 = vmatprep.subr.mxu0 0.0
    %2906 = vmatpush2.msra.mxu0 0.0
    %2907 = vmatprep.subr.mxu0 0.0
    %2908 = vmatpush2.msra.mxu0 0.0
    %2909 = vmatprep.subr.mxu0 0.0
    %2910 = vmatpush2.msra.mxu0 0.0
    %2911 = vmatprep.subr.mxu0 0.0
    %2912 = vmatpush2.msra.mxu0 0.0
    %2913 = vmatprep.subr.mxu0 0.0
    %2914 = vmatpush2.msra.mxu0 0.0
    %2915 = vmatprep.subr.mxu0 0.0
    %2916 = vmatpush2.msra.mxu0 0.0
    %2917 = vmatprep.subr.mxu0 0.0
    %2918 = vmatpush2.msra.mxu0 0.0
    %2919 = vmatprep.subr.mxu0 0.0
    %2920 = vmatpush2.msra.mxu0 0.0
    %2921 = vmatprep.subr.mxu0 0.0
    %2922 = vmatpush2.msra.mxu0 0.0
    %2923 = vmatprep.subr.mxu0 0.0
    %2924 = vmatpush2.msra.mxu0 0.0
    %2925 = vmatprep.subr.mxu0 0.0
    %2926 = vmatpush2.msra.mxu0 0.0
    %2927 = vmatprep.mubr.f32.mxu0 0.0
    %2928 = vmatmul.mubr.f32.gmra.mxu0 %v2861
    %v2929 = vpop.f32.mrf.mxu0
    %v2930 = vadd.f32 0.0, %v2929
    %v2931 = vpop.f32.mrf.mxu0
    %2932 = vdwg.mxu0
    %v2934 = vrot.slane %v2930, 2
    %v2936 = vadd.f32 %v2125, %v2934
    %v2937 = vxor.u32 %v2936, 2147483648
    %v2938 = vmul.f32 %v2937, 1.442695
    %v2939 = vpow.pop %v2938
    %v2940 = vadd.f32 %v2939, 1.0
    %v2941 = vrcp.pop %v2940
    %v2942 = vmul.f32 1.0, %v2941
    %v2943 = vtanh.pop %v2936
    %v2945 = vrot.slane %v2846, 7
    %v2947 = vmul.f32 %v2942, %v2945
    %2949 = vrot.lane.b32.xlu0 %v2943, 64
    %v2950 = vpop.permute.xlu0 %2949
    %v2952 = vmul.f32 %v2942, %v2950
    %2954 = vrot.lane.b32.xlu0 %v2952, 32
    %v2955 = vpop.permute.xlu0 %2954
    %v2957 = vadd.f32 %v2947, %v2955
    %v2958 = vtanh.pop %v2957
    %2960 = vrot.lane.b32.xlu0 %v2958, 64
    %v2961 = vpop.permute.xlu0 %2960
    %v2963 = vmul.f32 %v2942, %v2961
    %2965 = vrot.lane.b32.xlu0 %v2963, 64
    %v2966 = vpop.permute.xlu0 %2965
    %2968 = vst.msk [vmem:[#allocation3] sm:$0x40] %vm1022, %v2966
    %v2969 = vrot.slane %v2963, 6
    %2970 = vrot.lane.b32.xlu0 %v2969, 32
    %v2971 = vpop.permute.xlu0 %2970
    %v2972 = vsel %vm248, %v2971, 0
    %2974 = vmatprep.subr.mxu0 0.0
    %2975 = vmatpush1.msra.mxu0 0.0
    %2976 = vmatprep.subr.mxu0 0.0
    %2977 = vmatpush1.msra.mxu0 0.0
    %2978 = vmatprep.subr.mxu0 0.0
    %2979 = vmatpush1.msra.mxu0 0.0
    %2980 = vmatprep.subr.mxu0 0.0
    %2981 = vmatpush1.msra.mxu0 0.0
    %2982 = vmatprep.subr.mxu0 0.0
    %2983 = vmatpush1.msra.mxu0 0.0
    %2984 = vmatprep.subr.mxu0 0.0
    %2985 = vmatpush1.msra.mxu0 0.0
    %2986 = vmatprep.subr.mxu0 0.0
    %2987 = vmatpush1.msra.mxu0 0.0
    %2988 = vmatprep.subr.mxu0 0.0
    %2989 = vmatpush1.msra.mxu0 0.0
    %2990 = vmatprep.subr.mxu0 0.0
    %2991 = vmatpush1.msra.mxu0 0.0
    %2992 = vmatprep.subr.mxu0 0.0
    %2993 = vmatpush1.msra.mxu0 0.0
    %2994 = vmatprep.subr.mxu0 0.0
    %2995 = vmatpush1.msra.mxu0 0.0
    %2996 = vmatprep.subr.mxu0 0.0
    %2997 = vmatpush1.msra.mxu0 0.0
    %2998 = vmatprep.subr.mxu0 0.0
    %2999 = vmatpush1.msra.mxu0 %v2033
    %3000 = vmatprep.subr.mxu0 0.0
    %3001 = vmatpush1.msra.mxu0 %v2032
    %3002 = vmatprep.subr.mxu0 0.0
    %3003 = vmatpush1.msra.mxu0 %v2031
    %3004 = vmatprep.subr.mxu0 0.0
    %3005 = vmatpush1.msra.mxu0 %v2030
    %3006 = vmatprep.subr.mxu0 0.0
    %3007 = vmatpush2.msra.mxu0 0.0
    %3008 = vmatprep.subr.mxu0 0.0
    %3009 = vmatpush2.msra.mxu0 0.0
    %3010 = vmatprep.subr.mxu0 0.0
    %3011 = vmatpush2.msra.mxu0 0.0
    %3012 = vmatprep.subr.mxu0 0.0
    %3013 = vmatpush2.msra.mxu0 0.0
    %3014 = vmatprep.subr.mxu0 0.0
    %3015 = vmatpush2.msra.mxu0 0.0
    %3016 = vmatprep.subr.mxu0 0.0
    %3017 = vmatpush2.msra.mxu0 0.0
    %3018 = vmatprep.subr.mxu0 0.0
    %3019 = vmatpush2.msra.mxu0 0.0
    %3020 = vmatprep.subr.mxu0 0.0
    %3021 = vmatpush2.msra.mxu0 0.0
    %3022 = vmatprep.subr.mxu0 0.0
    %3023 = vmatpush2.msra.mxu0 0.0
    %3024 = vmatprep.subr.mxu0 0.0
    %3025 = vmatpush2.msra.mxu0 0.0
    %3026 = vmatprep.subr.mxu0 0.0
    %3027 = vmatpush2.msra.mxu0 0.0
    %3028 = vmatprep.subr.mxu0 0.0
    %3029 = vmatpush2.msra.mxu0 0.0
    %3030 = vmatprep.subr.mxu0 0.0
    %3031 = vmatpush2.msra.mxu0 0.0
    %3032 = vmatprep.subr.mxu0 0.0
    %3033 = vmatpush2.msra.mxu0 0.0
    %3034 = vmatprep.subr.mxu0 0.0
    %3035 = vmatpush2.msra.mxu0 0.0
    %3036 = vmatprep.subr.mxu0 0.0
    %3037 = vmatpush2.msra.mxu0 0.0
    %3038 = vmatprep.mubr.f32.mxu0 0.0
    %3039 = vmatmul.mubr.f32.gmra.mxu0 %v2972
    %v3040 = vpop.f32.mrf.mxu0
    %v3041 = vadd.f32 0.0, %v3040
    %v3042 = vpop.f32.mrf.mxu0
    %3043 = vdwg.mxu0
    %v3045 = vrot.slane %v3041, 1
    %v3047 = vadd.f32 %v2125, %v3045
    %v3048 = vxor.u32 %v3047, 2147483648
    %v3049 = vmul.f32 %v3048, 1.442695
    %v3050 = vpow.pop %v3049
    %v3051 = vadd.f32 %v3050, 1.0
    %v3052 = vrcp.pop %v3051
    %v3053 = vmul.f32 1.0, %v3052
    %v3054 = vtanh.pop %v3047
    %v3056 = vrot.slane %v2957, 7
    %v3058 = vmul.f32 %v3053, %v3056
    %3060 = vrot.lane.b32.xlu0 %v3054, 64
    %v3061 = vpop.permute.xlu0 %3060
    %v3063 = vmul.f32 %v3053, %v3061
    %3065 = vrot.lane.b32.xlu0 %v3063, 32
    %v3066 = vpop.permute.xlu0 %3065
    %v3068 = vadd.f32 %v3058, %v3066
    %v3069 = vtanh.pop %v3068
    %3071 = vrot.lane.b32.xlu0 %v3069, 64
    %v3072 = vpop.permute.xlu0 %3071
    %v3074 = vmul.f32 %v3053, %v3072
    %3076 = vrot.lane.b32.xlu0 %v3074, 64
    %v3077 = vpop.permute.xlu0 %3076
    %3079 = vst.msk [vmem:[#allocation3] sm:$0x80] %vm1134, %v3077
    %3080 = vmatprep.subr.mxu0 0.0
    %3081 = vmatpush1.msra.mxu0 0.0
    %3082 = vmatprep.subr.mxu0 0.0
    %3083 = vmatpush1.msra.mxu0 0.0
    %3084 = vmatprep.subr.mxu0 0.0
    %3085 = vmatpush1.msra.mxu0 0.0
    %3086 = vmatprep.subr.mxu0 0.0
    %3087 = vmatpush1.msra.mxu0 0.0
    %3088 = vmatprep.subr.mxu0 0.0
    %3089 = vmatpush1.msra.mxu0 0.0
    %3090 = vmatprep.subr.mxu0 0.0
    %3091 = vmatpush1.msra.mxu0 0.0
    %3092 = vmatprep.subr.mxu0 0.0
    %3093 = vmatpush1.msra.mxu0 0.0
    %3094 = vmatprep.subr.mxu0 0.0
    %3095 = vmatpush1.msra.mxu0 0.0
    %3096 = vmatprep.subr.mxu0 0.0
    %3097 = vmatpush1.msra.mxu0 0.0
    %3098 = vmatprep.subr.mxu0 0.0
    %3099 = vmatpush1.msra.mxu0 0.0
    %3100 = vmatprep.subr.mxu0 0.0
    %3101 = vmatpush1.msra.mxu0 0.0
    %3102 = vmatprep.subr.mxu0 0.0
    %3103 = vmatpush1.msra.mxu0 0.0
    %3104 = vmatprep.subr.mxu0 0.0
    %3105 = vmatpush1.msra.mxu0 %v2046
    %3106 = vmatprep.subr.mxu0 0.0
    %3107 = vmatpush1.msra.mxu0 %v2045
    %3108 = vmatprep.subr.mxu0 0.0
    %3109 = vmatpush1.msra.mxu0 %v2044
    %3110 = vmatprep.subr.mxu0 0.0
    %3111 = vmatpush1.msra.mxu0 %v2043
    %3112 = vmatprep.subr.mxu0 0.0
    %3113 = vmatpush2.msra.mxu0 0.0
    %3114 = vmatprep.subr.mxu0 0.0
    %3115 = vmatpush2.msra.mxu0 0.0
    %3116 = vmatprep.subr.mxu0 0.0
    %3117 = vmatpush2.msra.mxu0 0.0
    %3118 = vmatprep.subr.mxu0 0.0
    %3119 = vmatpush2.msra.mxu0 0.0
    %3120 = vmatprep.subr.mxu0 0.0
    %3121 = vmatpush2.msra.mxu0 0.0
    %3122 = vmatprep.subr.mxu0 0.0
    %3123 = vmatpush2.msra.mxu0 0.0
    %3124 = vmatprep.subr.mxu0 0.0
    %3125 = vmatpush2.msra.mxu0 0.0
    %3126 = vmatprep.subr.mxu0 0.0
    %3127 = vmatpush2.msra.mxu0 0.0
    %3128 = vmatprep.subr.mxu0 0.0
    %3129 = vmatpush2.msra.mxu0 0.0
    %3130 = vmatprep.subr.mxu0 0.0
    %3131 = vmatpush2.msra.mxu0 0.0
    %3132 = vmatprep.subr.mxu0 0.0
    %3133 = vmatpush2.msra.mxu0 0.0
    %3134 = vmatprep.subr.mxu0 0.0
    %3135 = vmatpush2.msra.mxu0 0.0
    %3136 = vmatprep.subr.mxu0 0.0
    %3137 = vmatpush2.msra.mxu0 0.0
    %3138 = vmatprep.subr.mxu0 0.0
    %3139 = vmatpush2.msra.mxu0 0.0
    %3140 = vmatprep.subr.mxu0 0.0
    %3141 = vmatpush2.msra.mxu0 0.0
    %3142 = vmatprep.subr.mxu0 0.0
    %3143 = vmatpush2.msra.mxu0 0.0
    %3144 = vmatprep.mubr.f32.mxu0 0.0
    %3145 = vmatmul.mubr.f32.gmra.mxu0 %v250
    %v3146 = vpop.f32.mrf.mxu0
    %v3147 = vadd.f32 0.0, %v3146
    %v3148 = vpop.f32.mrf.mxu0
    %3149 = vdwg.mxu0
    %v3151 = vrot.slane %v3147, 1
    %v3153 = vadd.f32 %v2201, %v3151
    %v3154 = vxor.u32 %v3153, 2147483648
    %v3155 = vmul.f32 %v3154, 1.442695
    %v3156 = vpow.pop %v3155
    %v3157 = vadd.f32 %v3156, 1.0
    %v3158 = vrcp.pop %v3157
    %v3159 = vmul.f32 1.0, %v3158
    %v3160 = vtanh.pop %v3153
    %v3161 = vmul.f32 %v3159, 0.0
    %3163 = vrot.lane.b32.xlu0 %v3160, 64
    %v3164 = vpop.permute.xlu0 %3163
    %v3166 = vmul.f32 %v3159, %v3164
    %3168 = vrot.lane.b32.xlu0 %v3166, 32
    %v3169 = vpop.permute.xlu0 %3168
    %v3171 = vadd.f32 %v3161, %v3169
    %v3172 = vtanh.pop %v3171
    %3174 = vrot.lane.b32.xlu0 %v3172, 64
    %v3175 = vpop.permute.xlu0 %3174
    %v3177 = vmul.f32 %v3159, %v3175
    %3179 = vrot.lane.b32.xlu0 %v3177, 32
    %v3180 = vpop.permute.xlu0 %3179
    %3182 = vst.msk [vmem:[#allocation3] sm:$0x80] %vm1238, %v3180
    %v3183 = vrot.slane %v3177, 7
    %3184 = vrot.lane.b32.xlu0 %v3183, 32
    %v3185 = vpop.permute.xlu0 %3184
    %v3186 = vsel %vm248, %v3185, 0
    %3188 = vmatprep.subr.mxu0 0.0
    %3189 = vmatpush1.msra.mxu0 0.0
    %3190 = vmatprep.subr.mxu0 0.0
    %3191 = vmatpush1.msra.mxu0 0.0
    %3192 = vmatprep.subr.mxu0 0.0
    %3193 = vmatpush1.msra.mxu0 0.0
    %3194 = vmatprep.subr.mxu0 0.0
    %3195 = vmatpush1.msra.mxu0 0.0
    %3196 = vmatprep.subr.mxu0 0.0
    %3197 = vmatpush1.msra.mxu0 0.0
    %3198 = vmatprep.subr.mxu0 0.0
    %3199 = vmatpush1.msra.mxu0 0.0
    %3200 = vmatprep.subr.mxu0 0.0
    %3201 = vmatpush1.msra.mxu0 0.0
    %3202 = vmatprep.subr.mxu0 0.0
    %3203 = vmatpush1.msra.mxu0 0.0
    %3204 = vmatprep.subr.mxu0 0.0
    %3205 = vmatpush1.msra.mxu0 0.0
    %3206 = vmatprep.subr.mxu0 0.0
    %3207 = vmatpush1.msra.mxu0 0.0
    %3208 = vmatprep.subr.mxu0 0.0
    %3209 = vmatpush1.msra.mxu0 0.0
    %3210 = vmatprep.subr.mxu0 0.0
    %3211 = vmatpush1.msra.mxu0 0.0
    %3212 = vmatprep.subr.mxu0 0.0
    %3213 = vmatpush1.msra.mxu0 %v2046
    %3214 = vmatprep.subr.mxu0 0.0
    %3215 = vmatpush1.msra.mxu0 %v2045
    %3216 = vmatprep.subr.mxu0 0.0
    %3217 = vmatpush1.msra.mxu0 %v2044
    %3218 = vmatprep.subr.mxu0 0.0
    %3219 = vmatpush1.msra.mxu0 %v2043
    %3220 = vmatprep.subr.mxu0 0.0
    %3221 = vmatpush2.msra.mxu0 0.0
    %3222 = vmatprep.subr.mxu0 0.0
    %3223 = vmatpush2.msra.mxu0 0.0
    %3224 = vmatprep.subr.mxu0 0.0
    %3225 = vmatpush2.msra.mxu0 0.0
    %3226 = vmatprep.subr.mxu0 0.0
    %3227 = vmatpush2.msra.mxu0 0.0
    %3228 = vmatprep.subr.mxu0 0.0
    %3229 = vmatpush2.msra.mxu0 0.0
    %3230 = vmatprep.subr.mxu0 0.0
    %3231 = vmatpush2.msra.mxu0 0.0
    %3232 = vmatprep.subr.mxu0 0.0
    %3233 = vmatpush2.msra.mxu0 0.0
    %3234 = vmatprep.subr.mxu0 0.0
    %3235 = vmatpush2.msra.mxu0 0.0
    %3236 = vmatprep.subr.mxu0 0.0
    %3237 = vmatpush2.msra.mxu0 0.0
    %3238 = vmatprep.subr.mxu0 0.0
    %3239 = vmatpush2.msra.mxu0 0.0
    %3240 = vmatprep.subr.mxu0 0.0
    %3241 = vmatpush2.msra.mxu0 0.0
    %3242 = vmatprep.subr.mxu0 0.0
    %3243 = vmatpush2.msra.mxu0 0.0
    %3244 = vmatprep.subr.mxu0 0.0
    %3245 = vmatpush2.msra.mxu0 0.0
    %3246 = vmatprep.subr.mxu0 0.0
    %3247 = vmatpush2.msra.mxu0 0.0
    %3248 = vmatprep.subr.mxu0 0.0
    %3249 = vmatpush2.msra.mxu0 0.0
    %3250 = vmatprep.subr.mxu0 0.0
    %3251 = vmatpush2.msra.mxu0 0.0
    %3252 = vmatprep.mubr.f32.mxu0 0.0
    %3253 = vmatmul.mubr.f32.gmra.mxu0 %v3186
    %v3254 = vpop.f32.mrf.mxu0
    %v3255 = vadd.f32 0.0, %v3254
    %v3256 = vpop.f32.mrf.mxu0
    %3257 = vdwg.mxu0
    %v3259 = vrot.slane %v3255, 2
    %v3261 = vadd.f32 %v2201, %v3259
    %v3262 = vxor.u32 %v3261, 2147483648
    %v3263 = vmul.f32 %v3262, 1.442695
    %v3264 = vpow.pop %v3263
    %v3265 = vadd.f32 %v3264, 1.0
    %v3266 = vrcp.pop %v3265
    %v3267 = vmul.f32 1.0, %v3266
    %v3268 = vtanh.pop %v3261
    %v3270 = vrot.slane %v3171, 1
    %v3272 = vmul.f32 %v3267, %v3270
    %3274 = vrot.lane.b32.xlu0 %v3268, 64
    %v3275 = vpop.permute.xlu0 %3274
    %v3277 = vmul.f32 %v3267, %v3275
    %3279 = vrot.lane.b32.xlu0 %v3277, 32
    %v3280 = vpop.permute.xlu0 %3279
    %v3282 = vadd.f32 %v3272, %v3280
    %v3283 = vtanh.pop %v3282
    %3285 = vrot.lane.b32.xlu0 %v3283, 64
    %v3286 = vpop.permute.xlu0 %3285
    %v3288 = vmul.f32 %v3267, %v3286
    %3290 = vrot.lane.b32.xlu0 %v3288, 32
    %v3291 = vpop.permute.xlu0 %3290
    %3293 = vst.msk [vmem:[#allocation3] sm:$0x40] %vm1350, %v3291
    %v3294 = vrot.slane %v3288, 6
    %3295 = vrot.lane.b32.xlu0 %v3294, 32
    %v3296 = vpop.permute.xlu0 %3295
    %v3297 = vsel %vm248, %v3296, 0
    %3299 = vmatprep.subr.mxu0 0.0
    %3300 = vmatpush1.msra.mxu0 0.0
    %3301 = vmatprep.subr.mxu0 0.0
    %3302 = vmatpush1.msra.mxu0 0.0
    %3303 = vmatprep.subr.mxu0 0.0
    %3304 = vmatpush1.msra.mxu0 0.0
    %3305 = vmatprep.subr.mxu0 0.0
    %3306 = vmatpush1.msra.mxu0 0.0
    %3307 = vmatprep.subr.mxu0 0.0
    %3308 = vmatpush1.msra.mxu0 0.0
    %3309 = vmatprep.subr.mxu0 0.0
    %3310 = vmatpush1.msra.mxu0 0.0
    %3311 = vmatprep.subr.mxu0 0.0
    %3312 = vmatpush1.msra.mxu0 0.0
    %3313 = vmatprep.subr.mxu0 0.0
    %3314 = vmatpush1.msra.mxu0 0.0
    %3315 = vmatprep.subr.mxu0 0.0
    %3316 = vmatpush1.msra.mxu0 0.0
    %3317 = vmatprep.subr.mxu0 0.0
    %3318 = vmatpush1.msra.mxu0 0.0
    %3319 = vmatprep.subr.mxu0 0.0
    %3320 = vmatpush1.msra.mxu0 0.0
    %3321 = vmatprep.subr.mxu0 0.0
    %3322 = vmatpush1.msra.mxu0 0.0
    %3323 = vmatprep.subr.mxu0 0.0
    %3324 = vmatpush1.msra.mxu0 %v2046
    %3325 = vmatprep.subr.mxu0 0.0
    %3326 = vmatpush1.msra.mxu0 %v2045
    %3327 = vmatprep.subr.mxu0 0.0
    %3328 = vmatpush1.msra.mxu0 %v2044
    %3329 = vmatprep.subr.mxu0 0.0
    %3330 = vmatpush1.msra.mxu0 %v2043
    %3331 = vmatprep.subr.mxu0 0.0
    %3332 = vmatpush2.msra.mxu0 0.0
    %3333 = vmatprep.subr.mxu0 0.0
    %3334 = vmatpush2.msra.mxu0 0.0
    %3335 = vmatprep.subr.mxu0 0.0
    %3336 = vmatpush2.msra.mxu0 0.0
    %3337 = vmatprep.subr.mxu0 0.0
    %3338 = vmatpush2.msra.mxu0 0.0
    %3339 = vmatprep.subr.mxu0 0.0
    %3340 = vmatpush2.msra.mxu0 0.0
    %3341 = vmatprep.subr.mxu0 0.0
    %3342 = vmatpush2.msra.mxu0 0.0
    %3343 = vmatprep.subr.mxu0 0.0
    %3344 = vmatpush2.msra.mxu0 0.0
    %3345 = vmatprep.subr.mxu0 0.0
    %3346 = vmatpush2.msra.mxu0 0.0
    %3347 = vmatprep.subr.mxu0 0.0
    %3348 = vmatpush2.msra.mxu0 0.0
    %3349 = vmatprep.subr.mxu0 0.0
    %3350 = vmatpush2.msra.mxu0 0.0
    %3351 = vmatprep.subr.mxu0 0.0
    %3352 = vmatpush2.msra.mxu0 0.0
    %3353 = vmatprep.subr.mxu0 0.0
    %3354 = vmatpush2.msra.mxu0 0.0
    %3355 = vmatprep.subr.mxu0 0.0
    %3356 = vmatpush2.msra.mxu0 0.0
    %3357 = vmatprep.subr.mxu0 0.0
    %3358 = vmatpush2.msra.mxu0 0.0
    %3359 = vmatprep.subr.mxu0 0.0
    %3360 = vmatpush2.msra.mxu0 0.0
    %3361 = vmatprep.subr.mxu0 0.0
    %3362 = vmatpush2.msra.mxu0 0.0
    %3363 = vmatprep.mubr.f32.mxu0 0.0
    %3364 = vmatmul.mubr.f32.gmra.mxu0 %v3297
    %v3365 = vpop.f32.mrf.mxu0
    %v3366 = vadd.f32 0.0, %v3365
    %v3367 = vpop.f32.mrf.mxu0
    %3368 = vdwg.mxu0
    %v3370 = vrot.slane %v3366, 3
    %v3372 = vadd.f32 %v2201, %v3370
    %v3373 = vxor.u32 %v3372, 2147483648
    %v3374 = vmul.f32 %v3373, 1.442695
    %v3375 = vpow.pop %v3374
    %v3376 = vadd.f32 %v3375, 1.0
    %v3377 = vrcp.pop %v3376
    %v3378 = vmul.f32 1.0, %v3377
    %v3379 = vtanh.pop %v3372
    %v3381 = vrot.slane %v3282, 1
    %v3383 = vmul.f32 %v3378, %v3381
    %3385 = vrot.lane.b32.xlu0 %v3379, 64
    %v3386 = vpop.permute.xlu0 %3385
    %v3388 = vmul.f32 %v3378, %v3386
    %3390 = vrot.lane.b32.xlu0 %v3388, 32
    %v3391 = vpop.permute.xlu0 %3390
    %v3393 = vadd.f32 %v3383, %v3391
    %v3394 = vtanh.pop %v3393
    %3396 = vrot.lane.b32.xlu0 %v3394, 64
    %v3397 = vpop.permute.xlu0 %3396
    %v3399 = vmul.f32 %v3378, %v3397
    %3401 = vrot.lane.b32.xlu0 %v3399, 32
    %v3402 = vpop.permute.xlu0 %3401
    %3404 = vst.msk [vmem:[#allocation3] sm:$0x20] %vm1462, %v3402
    %v3405 = vrot.slane %v3399, 5
    %3406 = vrot.lane.b32.xlu0 %v3405, 32
    %v3407 = vpop.permute.xlu0 %3406
    %v3408 = vsel %vm248, %v3407, 0
    %3410 = vmatprep.subr.mxu0 0.0
    %3411 = vmatpush1.msra.mxu0 0.0
    %3412 = vmatprep.subr.mxu0 0.0
    %3413 = vmatpush1.msra.mxu0 0.0
    %3414 = vmatprep.subr.mxu0 0.0
    %3415 = vmatpush1.msra.mxu0 0.0
    %3416 = vmatprep.subr.mxu0 0.0
    %3417 = vmatpush1.msra.mxu0 0.0
    %3418 = vmatprep.subr.mxu0 0.0
    %3419 = vmatpush1.msra.mxu0 0.0
    %3420 = vmatprep.subr.mxu0 0.0
    %3421 = vmatpush1.msra.mxu0 0.0
    %3422 = vmatprep.subr.mxu0 0.0
    %3423 = vmatpush1.msra.mxu0 0.0
    %3424 = vmatprep.subr.mxu0 0.0
    %3425 = vmatpush1.msra.mxu0 0.0
    %3426 = vmatprep.subr.mxu0 0.0
    %3427 = vmatpush1.msra.mxu0 0.0
    %3428 = vmatprep.subr.mxu0 0.0
    %3429 = vmatpush1.msra.mxu0 0.0
    %3430 = vmatprep.subr.mxu0 0.0
    %3431 = vmatpush1.msra.mxu0 0.0
    %3432 = vmatprep.subr.mxu0 0.0
    %3433 = vmatpush1.msra.mxu0 0.0
    %3434 = vmatprep.subr.mxu0 0.0
    %3435 = vmatpush1.msra.mxu0 %v2046
    %3436 = vmatprep.subr.mxu0 0.0
    %3437 = vmatpush1.msra.mxu0 %v2045
    %3438 = vmatprep.subr.mxu0 0.0
    %3439 = vmatpush1.msra.mxu0 %v2044
    %3440 = vmatprep.subr.mxu0 0.0
    %3441 = vmatpush1.msra.mxu0 %v2043
    %3442 = vmatprep.subr.mxu0 0.0
    %3443 = vmatpush2.msra.mxu0 0.0
    %3444 = vmatprep.subr.mxu0 0.0
    %3445 = vmatpush2.msra.mxu0 0.0
    %3446 = vmatprep.subr.mxu0 0.0
    %3447 = vmatpush2.msra.mxu0 0.0
    %3448 = vmatprep.subr.mxu0 0.0
    %3449 = vmatpush2.msra.mxu0 0.0
    %3450 = vmatprep.subr.mxu0 0.0
    %3451 = vmatpush2.msra.mxu0 0.0
    %3452 = vmatprep.subr.mxu0 0.0
    %3453 = vmatpush2.msra.mxu0 0.0
    %3454 = vmatprep.subr.mxu0 0.0
    %3455 = vmatpush2.msra.mxu0 0.0
    %3456 = vmatprep.subr.mxu0 0.0
    %3457 = vmatpush2.msra.mxu0 0.0
    %3458 = vmatprep.subr.mxu0 0.0
    %3459 = vmatpush2.msra.mxu0 0.0
    %3460 = vmatprep.subr.mxu0 0.0
    %3461 = vmatpush2.msra.mxu0 0.0
    %3462 = vmatprep.subr.mxu0 0.0
    %3463 = vmatpush2.msra.mxu0 0.0
    %3464 = vmatprep.subr.mxu0 0.0
    %3465 = vmatpush2.msra.mxu0 0.0
    %3466 = vmatprep.subr.mxu0 0.0
    %3467 = vmatpush2.msra.mxu0 0.0
    %3468 = vmatprep.subr.mxu0 0.0
    %3469 = vmatpush2.msra.mxu0 0.0
    %3470 = vmatprep.subr.mxu0 0.0
    %3471 = vmatpush2.msra.mxu0 0.0
    %3472 = vmatprep.subr.mxu0 0.0
    %3473 = vmatpush2.msra.mxu0 0.0
    %3474 = vmatprep.mubr.f32.mxu0 0.0
    %3475 = vmatmul.mubr.f32.gmra.mxu0 %v3408
    %v3476 = vpop.f32.mrf.mxu0
    %v3477 = vadd.f32 0.0, %v3476
    %v3478 = vpop.f32.mrf.mxu0
    %3479 = vdwg.mxu0
    %v3481 = vrot.slane %v3477, 4
    %v3483 = vadd.f32 %v2201, %v3481
    %v3484 = vxor.u32 %v3483, 2147483648
    %v3485 = vmul.f32 %v3484, 1.442695
    %v3486 = vpow.pop %v3485
    %v3487 = vadd.f32 %v3486, 1.0
    %v3488 = vrcp.pop %v3487
    %v3489 = vmul.f32 1.0, %v3488
    %v3490 = vtanh.pop %v3483
    %v3492 = vrot.slane %v3393, 1
    %v3494 = vmul.f32 %v3489, %v3492
    %3496 = vrot.lane.b32.xlu0 %v3490, 64
    %v3497 = vpop.permute.xlu0 %3496
    %v3499 = vmul.f32 %v3489, %v3497
    %3501 = vrot.lane.b32.xlu0 %v3499, 32
    %v3502 = vpop.permute.xlu0 %3501
    %v3504 = vadd.f32 %v3494, %v3502
    %v3505 = vtanh.pop %v3504
    %3507 = vrot.lane.b32.xlu0 %v3505, 64
    %v3508 = vpop.permute.xlu0 %3507
    %v3510 = vmul.f32 %v3489, %v3508
    %3512 = vrot.lane.b32.xlu0 %v3510, 32
    %v3513 = vpop.permute.xlu0 %3512
    %3515 = vst.msk [vmem:[#allocation3] sm:$0x10] %vm1574, %v3513
    %v3516 = vrot.slane %v3510, 4
    %3517 = vrot.lane.b32.xlu0 %v3516, 32
    %v3518 = vpop.permute.xlu0 %3517
    %v3519 = vsel %vm248, %v3518, 0
    %3521 = vmatprep.subr.mxu0 0.0
    %3522 = vmatpush1.msra.mxu0 0.0
    %3523 = vmatprep.subr.mxu0 0.0
    %3524 = vmatpush1.msra.mxu0 0.0
    %3525 = vmatprep.subr.mxu0 0.0
    %3526 = vmatpush1.msra.mxu0 0.0
    %3527 = vmatprep.subr.mxu0 0.0
    %3528 = vmatpush1.msra.mxu0 0.0
    %3529 = vmatprep.subr.mxu0 0.0
    %3530 = vmatpush1.msra.mxu0 0.0
    %3531 = vmatprep.subr.mxu0 0.0
    %3532 = vmatpush1.msra.mxu0 0.0
    %3533 = vmatprep.subr.mxu0 0.0
    %3534 = vmatpush1.msra.mxu0 0.0
    %3535 = vmatprep.subr.mxu0 0.0
    %3536 = vmatpush1.msra.mxu0 0.0
    %3537 = vmatprep.subr.mxu0 0.0
    %3538 = vmatpush1.msra.mxu0 0.0
    %3539 = vmatprep.subr.mxu0 0.0
    %3540 = vmatpush1.msra.mxu0 0.0
    %3541 = vmatprep.subr.mxu0 0.0
    %3542 = vmatpush1.msra.mxu0 0.0
    %3543 = vmatprep.subr.mxu0 0.0
    %3544 = vmatpush1.msra.mxu0 0.0
    %3545 = vmatprep.subr.mxu0 0.0
    %3546 = vmatpush1.msra.mxu0 %v2046
    %3547 = vmatprep.subr.mxu0 0.0
    %3548 = vmatpush1.msra.mxu0 %v2045
    %3549 = vmatprep.subr.mxu0 0.0
    %3550 = vmatpush1.msra.mxu0 %v2044
    %3551 = vmatprep.subr.mxu0 0.0
    %3552 = vmatpush1.msra.mxu0 %v2043
    %3553 = vmatprep.subr.mxu0 0.0
    %3554 = vmatpush2.msra.mxu0 0.0
    %3555 = vmatprep.subr.mxu0 0.0
    %3556 = vmatpush2.msra.mxu0 0.0
    %3557 = vmatprep.subr.mxu0 0.0
    %3558 = vmatpush2.msra.mxu0 0.0
    %3559 = vmatprep.subr.mxu0 0.0
    %3560 = vmatpush2.msra.mxu0 0.0
    %3561 = vmatprep.subr.mxu0 0.0
    %3562 = vmatpush2.msra.mxu0 0.0
    %3563 = vmatprep.subr.mxu0 0.0
    %3564 = vmatpush2.msra.mxu0 0.0
    %3565 = vmatprep.subr.mxu0 0.0
    %3566 = vmatpush2.msra.mxu0 0.0
    %3567 = vmatprep.subr.mxu0 0.0
    %3568 = vmatpush2.msra.mxu0 0.0
    %3569 = vmatprep.subr.mxu0 0.0
    %3570 = vmatpush2.msra.mxu0 0.0
    %3571 = vmatprep.subr.mxu0 0.0
    %3572 = vmatpush2.msra.mxu0 0.0
    %3573 = vmatprep.subr.mxu0 0.0
    %3574 = vmatpush2.msra.mxu0 0.0
    %3575 = vmatprep.subr.mxu0 0.0
    %3576 = vmatpush2.msra.mxu0 0.0
    %3577 = vmatprep.subr.mxu0 0.0
    %3578 = vmatpush2.msra.mxu0 0.0
    %3579 = vmatprep.subr.mxu0 0.0
    %3580 = vmatpush2.msra.mxu0 0.0
    %3581 = vmatprep.subr.mxu0 0.0
    %3582 = vmatpush2.msra.mxu0 0.0
    %3583 = vmatprep.subr.mxu0 0.0
    %3584 = vmatpush2.msra.mxu0 0.0
    %3585 = vmatprep.mubr.f32.mxu0 0.0
    %3586 = vmatmul.mubr.f32.gmra.mxu0 %v3519
    %v3587 = vpop.f32.mrf.mxu0
    %v3588 = vadd.f32 0.0, %v3587
    %v3589 = vpop.f32.mrf.mxu0
    %3590 = vdwg.mxu0
    %v3592 = vrot.slane %v3588, 5
    %v3594 = vadd.f32 %v2201, %v3592
    %v3595 = vxor.u32 %v3594, 2147483648
    %v3596 = vmul.f32 %v3595, 1.442695
    %v3597 = vpow.pop %v3596
    %v3598 = vadd.f32 %v3597, 1.0
    %v3599 = vrcp.pop %v3598
    %v3600 = vmul.f32 1.0, %v3599
    %v3601 = vtanh.pop %v3594
    %v3603 = vrot.slane %v3504, 1
    %v3605 = vmul.f32 %v3600, %v3603
    %3607 = vrot.lane.b32.xlu0 %v3601, 64
    %v3608 = vpop.permute.xlu0 %3607
    %v3610 = vmul.f32 %v3600, %v3608
    %3612 = vrot.lane.b32.xlu0 %v3610, 32
    %v3613 = vpop.permute.xlu0 %3612
    %v3615 = vadd.f32 %v3605, %v3613
    %v3616 = vtanh.pop %v3615
    %3618 = vrot.lane.b32.xlu0 %v3616, 64
    %v3619 = vpop.permute.xlu0 %3618
    %v3621 = vmul.f32 %v3600, %v3619
    %3623 = vrot.lane.b32.xlu0 %v3621, 32
    %v3624 = vpop.permute.xlu0 %3623
    %3626 = vst.msk [vmem:[#allocation3] sm:$0x8] %vm1686, %v3624
    %v3627 = vrot.slane %v3621, 3
    %3628 = vrot.lane.b32.xlu0 %v3627, 32
    %v3629 = vpop.permute.xlu0 %3628
    %v3630 = vsel %vm248, %v3629, 0
    %3632 = vmatprep.subr.mxu0 0.0
    %3633 = vmatpush1.msra.mxu0 0.0
    %3634 = vmatprep.subr.mxu0 0.0
    %3635 = vmatpush1.msra.mxu0 0.0
    %3636 = vmatprep.subr.mxu0 0.0
    %3637 = vmatpush1.msra.mxu0 0.0
    %3638 = vmatprep.subr.mxu0 0.0
    %3639 = vmatpush1.msra.mxu0 0.0
    %3640 = vmatprep.subr.mxu0 0.0
    %3641 = vmatpush1.msra.mxu0 0.0
    %3642 = vmatprep.subr.mxu0 0.0
    %3643 = vmatpush1.msra.mxu0 0.0
    %3644 = vmatprep.subr.mxu0 0.0
    %3645 = vmatpush1.msra.mxu0 0.0
    %3646 = vmatprep.subr.mxu0 0.0
    %3647 = vmatpush1.msra.mxu0 0.0
    %3648 = vmatprep.subr.mxu0 0.0
    %3649 = vmatpush1.msra.mxu0 0.0
    %3650 = vmatprep.subr.mxu0 0.0
    %3651 = vmatpush1.msra.mxu0 0.0
    %3652 = vmatprep.subr.mxu0 0.0
    %3653 = vmatpush1.msra.mxu0 0.0
    %3654 = vmatprep.subr.mxu0 0.0
    %3655 = vmatpush1.msra.mxu0 0.0
    %3656 = vmatprep.subr.mxu0 0.0
    %3657 = vmatpush1.msra.mxu0 %v2046
    %3658 = vmatprep.subr.mxu0 0.0
    %3659 = vmatpush1.msra.mxu0 %v2045
    %3660 = vmatprep.subr.mxu0 0.0
    %3661 = vmatpush1.msra.mxu0 %v2044
    %3662 = vmatprep.subr.mxu0 0.0
    %3663 = vmatpush1.msra.mxu0 %v2043
    %3664 = vmatprep.subr.mxu0 0.0
    %3665 = vmatpush2.msra.mxu0 0.0
    %3666 = vmatprep.subr.mxu0 0.0
    %3667 = vmatpush2.msra.mxu0 0.0
    %3668 = vmatprep.subr.mxu0 0.0
    %3669 = vmatpush2.msra.mxu0 0.0
    %3670 = vmatprep.subr.mxu0 0.0
    %3671 = vmatpush2.msra.mxu0 0.0
    %3672 = vmatprep.subr.mxu0 0.0
    %3673 = vmatpush2.msra.mxu0 0.0
    %3674 = vmatprep.subr.mxu0 0.0
    %3675 = vmatpush2.msra.mxu0 0.0
    %3676 = vmatprep.subr.mxu0 0.0
    %3677 = vmatpush2.msra.mxu0 0.0
    %3678 = vmatprep.subr.mxu0 0.0
    %3679 = vmatpush2.msra.mxu0 0.0
    %3680 = vmatprep.subr.mxu0 0.0
    %3681 = vmatpush2.msra.mxu0 0.0
    %3682 = vmatprep.subr.mxu0 0.0
    %3683 = vmatpush2.msra.mxu0 0.0
    %3684 = vmatprep.subr.mxu0 0.0
    %3685 = vmatpush2.msra.mxu0 0.0
    %3686 = vmatprep.subr.mxu0 0.0
    %3687 = vmatpush2.msra.mxu0 0.0
    %3688 = vmatprep.subr.mxu0 0.0
    %3689 = vmatpush2.msra.mxu0 0.0
    %3690 = vmatprep.subr.mxu0 0.0
    %3691 = vmatpush2.msra.mxu0 0.0
    %3692 = vmatprep.subr.mxu0 0.0
    %3693 = vmatpush2.msra.mxu0 0.0
    %3694 = vmatprep.subr.mxu0 0.0
    %3695 = vmatpush2.msra.mxu0 0.0
    %3696 = vmatprep.mubr.f32.mxu0 0.0
    %3697 = vmatmul.mubr.f32.gmra.mxu0 %v3630
    %v3698 = vpop.f32.mrf.mxu0
    %v3699 = vadd.f32 0.0, %v3698
    %v3700 = vpop.f32.mrf.mxu0
    %3701 = vdwg.mxu0
    %v3703 = vrot.slane %v3699, 6
    %v3705 = vadd.f32 %v2201, %v3703
    %v3706 = vxor.u32 %v3705, 2147483648
    %v3707 = vmul.f32 %v3706, 1.442695
    %v3708 = vpow.pop %v3707
    %v3709 = vadd.f32 %v3708, 1.0
    %v3710 = vrcp.pop %v3709
    %v3711 = vmul.f32 1.0, %v3710
    %v3712 = vtanh.pop %v3705
    %v3714 = vrot.slane %v3615, 1
    %v3716 = vmul.f32 %v3711, %v3714
    %3718 = vrot.lane.b32.xlu0 %v3712, 64
    %v3719 = vpop.permute.xlu0 %3718
    %v3721 = vmul.f32 %v3711, %v3719
    %3723 = vrot.lane.b32.xlu0 %v3721, 32
    %v3724 = vpop.permute.xlu0 %3723
    %v3726 = vadd.f32 %v3716, %v3724
    %v3727 = vtanh.pop %v3726
    %3729 = vrot.lane.b32.xlu0 %v3727, 64
    %v3730 = vpop.permute.xlu0 %3729
    %v3732 = vmul.f32 %v3711, %v3730
    %3734 = vrot.lane.b32.xlu0 %v3732, 32
    %v3735 = vpop.permute.xlu0 %3734
    %3737 = vst.msk [vmem:[#allocation3] sm:$0x4] %vm1798, %v3735
    %v3738 = vrot.slane %v3732, 2
    %3739 = vrot.lane.b32.xlu0 %v3738, 32
    %v3740 = vpop.permute.xlu0 %3739
    %v3741 = vsel %vm248, %v3740, 0
    %3743 = vmatprep.subr.mxu0 0.0
    %3744 = vmatpush1.msra.mxu0 0.0
    %3745 = vmatprep.subr.mxu0 0.0
    %3746 = vmatpush1.msra.mxu0 0.0
    %3747 = vmatprep.subr.mxu0 0.0
    %3748 = vmatpush1.msra.mxu0 0.0
    %3749 = vmatprep.subr.mxu0 0.0
    %3750 = vmatpush1.msra.mxu0 0.0
    %3751 = vmatprep.subr.mxu0 0.0
    %3752 = vmatpush1.msra.mxu0 0.0
    %3753 = vmatprep.subr.mxu0 0.0
    %3754 = vmatpush1.msra.mxu0 0.0
    %3755 = vmatprep.subr.mxu0 0.0
    %3756 = vmatpush1.msra.mxu0 0.0
    %3757 = vmatprep.subr.mxu0 0.0
    %3758 = vmatpush1.msra.mxu0 0.0
    %3759 = vmatprep.subr.mxu0 0.0
    %3760 = vmatpush1.msra.mxu0 0.0
    %3761 = vmatprep.subr.mxu0 0.0
    %3762 = vmatpush1.msra.mxu0 0.0
    %3763 = vmatprep.subr.mxu0 0.0
    %3764 = vmatpush1.msra.mxu0 0.0
    %3765 = vmatprep.subr.mxu0 0.0
    %3766 = vmatpush1.msra.mxu0 0.0
    %3767 = vmatprep.subr.mxu0 0.0
    %3768 = vmatpush1.msra.mxu0 %v2046
    %3769 = vmatprep.subr.mxu0 0.0
    %3770 = vmatpush1.msra.mxu0 %v2045
    %3771 = vmatprep.subr.mxu0 0.0
    %3772 = vmatpush1.msra.mxu0 %v2044
    %3773 = vmatprep.subr.mxu0 0.0
    %3774 = vmatpush1.msra.mxu0 %v2043
    %3775 = vmatprep.subr.mxu0 0.0
    %3776 = vmatpush2.msra.mxu0 0.0
    %3777 = vmatprep.subr.mxu0 0.0
    %3778 = vmatpush2.msra.mxu0 0.0
    %3779 = vmatprep.subr.mxu0 0.0
    %3780 = vmatpush2.msra.mxu0 0.0
    %3781 = vmatprep.subr.mxu0 0.0
    %3782 = vmatpush2.msra.mxu0 0.0
    %3783 = vmatprep.subr.mxu0 0.0
    %3784 = vmatpush2.msra.mxu0 0.0
    %3785 = vmatprep.subr.mxu0 0.0
    %3786 = vmatpush2.msra.mxu0 0.0
    %3787 = vmatprep.subr.mxu0 0.0
    %3788 = vmatpush2.msra.mxu0 0.0
    %3789 = vmatprep.subr.mxu0 0.0
    %3790 = vmatpush2.msra.mxu0 0.0
    %3791 = vmatprep.subr.mxu0 0.0
    %3792 = vmatpush2.msra.mxu0 0.0
    %3793 = vmatprep.subr.mxu0 0.0
    %3794 = vmatpush2.msra.mxu0 0.0
    %3795 = vmatprep.subr.mxu0 0.0
    %3796 = vmatpush2.msra.mxu0 0.0
    %3797 = vmatprep.subr.mxu0 0.0
    %3798 = vmatpush2.msra.mxu0 0.0
    %3799 = vmatprep.subr.mxu0 0.0
    %3800 = vmatpush2.msra.mxu0 0.0
    %3801 = vmatprep.subr.mxu0 0.0
    %3802 = vmatpush2.msra.mxu0 0.0
    %3803 = vmatprep.subr.mxu0 0.0
    %3804 = vmatpush2.msra.mxu0 0.0
    %3805 = vmatprep.subr.mxu0 0.0
    %3806 = vmatpush2.msra.mxu0 0.0
    %3807 = vmatprep.mubr.f32.mxu0 0.0
    %3808 = vmatmul.mubr.f32.gmra.mxu0 %v3741
    %v3809 = vpop.f32.mrf.mxu0
    %v3810 = vadd.f32 0.0, %v3809
    %v3811 = vpop.f32.mrf.mxu0
    %3812 = vdwg.mxu0
    %v3814 = vrot.slane %v3810, 7
    %v3816 = vadd.f32 %v2201, %v3814
    %v3817 = vxor.u32 %v3816, 2147483648
    %v3818 = vmul.f32 %v3817, 1.442695
    %v3819 = vpow.pop %v3818
    %v3820 = vadd.f32 %v3819, 1.0
    %v3821 = vrcp.pop %v3820
    %v3822 = vmul.f32 1.0, %v3821
    %v3823 = vtanh.pop %v3816
    %v3825 = vrot.slane %v3726, 1
    %v3827 = vmul.f32 %v3822, %v3825
    %3829 = vrot.lane.b32.xlu0 %v3823, 64
    %v3830 = vpop.permute.xlu0 %3829
    %v3832 = vmul.f32 %v3822, %v3830
    %3834 = vrot.lane.b32.xlu0 %v3832, 32
    %v3835 = vpop.permute.xlu0 %3834
    %v3837 = vadd.f32 %v3827, %v3835
    %v3838 = vtanh.pop %v3837
    %3840 = vrot.lane.b32.xlu0 %v3838, 64
    %v3841 = vpop.permute.xlu0 %3840
    %v3843 = vmul.f32 %v3822, %v3841
    %3845 = vrot.lane.b32.xlu0 %v3843, 32
    %v3846 = vpop.permute.xlu0 %3845
    %3848 = vst.msk [vmem:[#allocation3] sm:$0x2] %vm1910, %v3846
    %v3849 = vrot.slane %v3843, 1
    %3850 = vrot.lane.b32.xlu0 %v3849, 32
    %v3851 = vpop.permute.xlu0 %3850
    %v3852 = vsel %vm248, %v3851, 0
    %3854 = vmatprep.subr.mxu0 0.0
    %3855 = vmatpush1.msra.mxu0 0.0
    %3856 = vmatprep.subr.mxu0 0.0
    %3857 = vmatpush1.msra.mxu0 0.0
    %3858 = vmatprep.subr.mxu0 0.0
    %3859 = vmatpush1.msra.mxu0 0.0
    %3860 = vmatprep.subr.mxu0 0.0
    %3861 = vmatpush1.msra.mxu0 0.0
    %3862 = vmatprep.subr.mxu0 0.0
    %3863 = vmatpush1.msra.mxu0 0.0
    %3864 = vmatprep.subr.mxu0 0.0
    %3865 = vmatpush1.msra.mxu0 0.0
    %3866 = vmatprep.subr.mxu0 0.0
    %3867 = vmatpush1.msra.mxu0 0.0
    %3868 = vmatprep.subr.mxu0 0.0
    %3869 = vmatpush1.msra.mxu0 0.0
    %3870 = vmatprep.subr.mxu0 0.0
    %3871 = vmatpush1.msra.mxu0 0.0
    %3872 = vmatprep.subr.mxu0 0.0
    %3873 = vmatpush1.msra.mxu0 0.0
    %3874 = vmatprep.subr.mxu0 0.0
    %3875 = vmatpush1.msra.mxu0 0.0
    %3876 = vmatprep.subr.mxu0 0.0
    %3877 = vmatpush1.msra.mxu0 0.0
    %3878 = vmatprep.subr.mxu0 0.0
    %3879 = vmatpush1.msra.mxu0 %v2046
    %3880 = vmatprep.subr.mxu0 0.0
    %3881 = vmatpush1.msra.mxu0 %v2045
    %3882 = vmatprep.subr.mxu0 0.0
    %3883 = vmatpush1.msra.mxu0 %v2044
    %3884 = vmatprep.subr.mxu0 0.0
    %3885 = vmatpush1.msra.mxu0 %v2043
    %3886 = vmatprep.subr.mxu0 0.0
    %3887 = vmatpush2.msra.mxu0 0.0
    %3888 = vmatprep.subr.mxu0 0.0
    %3889 = vmatpush2.msra.mxu0 0.0
    %3890 = vmatprep.subr.mxu0 0.0
    %3891 = vmatpush2.msra.mxu0 0.0
    %3892 = vmatprep.subr.mxu0 0.0
    %3893 = vmatpush2.msra.mxu0 0.0
    %3894 = vmatprep.subr.mxu0 0.0
    %3895 = vmatpush2.msra.mxu0 0.0
    %3896 = vmatprep.subr.mxu0 0.0
    %3897 = vmatpush2.msra.mxu0 0.0
    %3898 = vmatprep.subr.mxu0 0.0
    %3899 = vmatpush2.msra.mxu0 0.0
    %3900 = vmatprep.subr.mxu0 0.0
    %3901 = vmatpush2.msra.mxu0 0.0
    %3902 = vmatprep.subr.mxu0 0.0
    %3903 = vmatpush2.msra.mxu0 0.0
    %3904 = vmatprep.subr.mxu0 0.0
    %3905 = vmatpush2.msra.mxu0 0.0
    %3906 = vmatprep.subr.mxu0 0.0
    %3907 = vmatpush2.msra.mxu0 0.0
    %3908 = vmatprep.subr.mxu0 0.0
    %3909 = vmatpush2.msra.mxu0 0.0
    %3910 = vmatprep.subr.mxu0 0.0
    %3911 = vmatpush2.msra.mxu0 0.0
    %3912 = vmatprep.subr.mxu0 0.0
    %3913 = vmatpush2.msra.mxu0 0.0
    %3914 = vmatprep.subr.mxu0 0.0
    %3915 = vmatpush2.msra.mxu0 0.0
    %3916 = vmatprep.subr.mxu0 0.0
    %3917 = vmatpush2.msra.mxu0 0.0
    %3918 = vmatprep.mubr.f32.mxu0 0.0
    %3919 = vmatmul.mubr.f32.gmra.mxu0 %v3852
    %v3920 = vpop.f32.mrf.mxu0
    %v3921 = vadd.f32 0.0, %v3920
    %v3922 = vpop.f32.mrf.mxu0
    %3923 = vdwg.mxu0
    %v3924 = vadd.f32 %v2201, %v3921
    %v3925 = vxor.u32 %v3924, 2147483648
    %v3926 = vmul.f32 %v3925, 1.442695
    %v3927 = vpow.pop %v3926
    %v3928 = vadd.f32 %v3927, 1.0
    %v3929 = vrcp.pop %v3928
    %v3930 = vmul.f32 1.0, %v3929
    %v3931 = vtanh.pop %v3924
    %v3933 = vrot.slane %v3837, 1
    %v3935 = vmul.f32 %v3930, %v3933
    %3937 = vrot.lane.b32.xlu0 %v3931, 64
    %v3938 = vpop.permute.xlu0 %3937
    %v3940 = vmul.f32 %v3930, %v3938
    %3942 = vrot.lane.b32.xlu0 %v3940, 32
    %v3943 = vpop.permute.xlu0 %3942
    %v3945 = vadd.f32 %v3935, %v3943
    %v3946 = vtanh.pop %v3945
    %3948 = vrot.lane.b32.xlu0 %v3946, 64
    %v3949 = vpop.permute.xlu0 %3948
    %v3951 = vmul.f32 %v3930, %v3949
    %3953 = vrot.lane.b32.xlu0 %v3951, 32
    %v3954 = vpop.permute.xlu0 %3953
    %3956 = vst.msk [vmem:[#allocation3] sm:$0x1] %vm2019, %v3954
    %v3957 = vld [vmem:[#allocation3] sm:$0xff]
    %v3958 = vld [vmem:[%s13] sm:$0xff]
    %v3959 = vld [vmem:[%s13 + $0x8] sm:$0xff]
    %v3960 = vld [vmem:[%s13 + $0x10] sm:$0xff]
    %v3961 = vld [vmem:[%s13 + $0x18] sm:$0xff]
    %v3962 = vld [vmem:[%s13 + $0x20] sm:$0xff]
    %v3963 = vld [vmem:[%s13 + $0x28] sm:$0xff]
    %v3964 = vld [vmem:[%s13 + $0x30] sm:$0xff]
    %v3965 = vld [vmem:[%s13 + $0x38] sm:$0xff]
    %v3966 = vld [vmem:[%s13 + $0x40] sm:$0xff]
    %v3967 = vld [vmem:[%s13 + $0x48] sm:$0xff]
    %v3968 = vld [vmem:[%s13 + $0x50] sm:$0xff]
    %v3969 = vld [vmem:[%s13 + $0x58] sm:$0xff]
    %v3970 = vld [vmem:[%s13 + $0x60] sm:$0xff]
    %v3971 = vld [vmem:[%s13 + $0x68] sm:$0xff]
    %v3972 = vld [vmem:[%s13 + $0x70] sm:$0xff]
    %v3973 = vld [vmem:[%s13 + $0x78] sm:$0xff]
    %v3975 = vsel %vm2054, %v3957, 0
    %3977 = vmatprep.subr.mxu0 0.0
    %3978 = vmatpush1.msra.mxu0 0.0
    %3979 = vmatprep.subr.mxu0 0.0
    %3980 = vmatpush1.msra.mxu0 0.0
    %3981 = vmatprep.subr.mxu0 0.0
    %3982 = vmatpush1.msra.mxu0 0.0
    %3983 = vmatprep.subr.mxu0 0.0
    %3984 = vmatpush1.msra.mxu0 0.0
    %3985 = vmatprep.subr.mxu0 0.0
    %3986 = vmatpush1.msra.mxu0 0.0
    %3987 = vmatprep.subr.mxu0 0.0
    %3988 = vmatpush1.msra.mxu0 0.0
    %3989 = vmatprep.subr.mxu0 0.0
    %3990 = vmatpush1.msra.mxu0 0.0
    %3991 = vmatprep.subr.mxu0 0.0
    %3992 = vmatpush1.msra.mxu0 0.0
    %3993 = vmatprep.subr.mxu0 %v3973
    %3994 = vmatpush1.msra.mxu0 %v3972
    %3995 = vmatprep.subr.mxu0 %v3971
    %3996 = vmatpush1.msra.mxu0 %v3970
    %3997 = vmatprep.subr.mxu0 %v3969
    %3998 = vmatpush1.msra.mxu0 %v3968
    %3999 = vmatprep.subr.mxu0 %v3967
    %4000 = vmatpush1.msra.mxu0 %v3966
    %4001 = vmatprep.subr.mxu0 %v3965
    %4002 = vmatpush1.msra.mxu0 %v3964
    %4003 = vmatprep.subr.mxu0 %v3963
    %4004 = vmatpush1.msra.mxu0 %v3962
    %4005 = vmatprep.subr.mxu0 %v3961
    %4006 = vmatpush1.msra.mxu0 %v3960
    %4007 = vmatprep.subr.mxu0 %v3959
    %4008 = vmatpush1.msra.mxu0 %v3958
    %4009 = vmatprep.subr.mxu0 0.0
    %4010 = vmatpush2.msra.mxu0 0.0
    %4011 = vmatprep.subr.mxu0 0.0
    %4012 = vmatpush2.msra.mxu0 0.0
    %4013 = vmatprep.subr.mxu0 0.0
    %4014 = vmatpush2.msra.mxu0 0.0
    %4015 = vmatprep.subr.mxu0 0.0
    %4016 = vmatpush2.msra.mxu0 0.0
    %4017 = vmatprep.subr.mxu0 0.0
    %4018 = vmatpush2.msra.mxu0 0.0
    %4019 = vmatprep.subr.mxu0 0.0
    %4020 = vmatpush2.msra.mxu0 0.0
    %4021 = vmatprep.subr.mxu0 0.0
    %4022 = vmatpush2.msra.mxu0 0.0
    %4023 = vmatprep.subr.mxu0 0.0
    %4024 = vmatpush2.msra.mxu0 0.0
    %4025 = vmatprep.subr.mxu0 0.0
    %4026 = vmatpush2.msra.mxu0 0.0
    %4027 = vmatprep.subr.mxu0 0.0
    %4028 = vmatpush2.msra.mxu0 0.0
    %4029 = vmatprep.subr.mxu0 0.0
    %4030 = vmatpush2.msra.mxu0 0.0
    %4031 = vmatprep.subr.mxu0 0.0
    %4032 = vmatpush2.msra.mxu0 0.0
    %4033 = vmatprep.subr.mxu0 0.0
    %4034 = vmatpush2.msra.mxu0 0.0
    %4035 = vmatprep.subr.mxu0 0.0
    %4036 = vmatpush2.msra.mxu0 0.0
    %4037 = vmatprep.subr.mxu0 0.0
    %4038 = vmatpush2.msra.mxu0 0.0
    %4039 = vmatprep.subr.mxu0 0.0
    %4040 = vmatpush2.msra.mxu0 0.0
    %4041 = vmatprep.mubr.f32.mxu0 0.0
    %4042 = vmatmul.mubr.f32.gmra.mxu0 %v3975
    %v4043 = vpop.f32.mrf.mxu0
    %v4044 = vadd.f32 0.0, %v4043
    %v4045 = vpop.f32.mrf.mxu0
    %v4046 = vadd.f32 0.0, %v4045
    %4047 = vdwg.mxu0
    %s4048 = sld [smem:[#allocation4]]
    %s4049 = sld [smem:[#allocation4 + $0x1]]
    %v4050 = vlaneseq
    %v4051 = vshrl.u32 %v4050, 7
    %v4052 = vsub.s32 0, %v4051
    %v4053 = vrot.slane %v4044, %v4052
    %4055 = vrot.lane.b32.xlu0 %v4044, 64
    %v4056 = vpop.permute.xlu0 %4055
    %v4058 = vadd.f32 %v4053, %v4056
    %v4059 = vstv %s4048
    %v4060 = vadd.f32 %v4058, %v4059
    %v4061 = vtanh.pop %v4060
    %v4062 = vlaneseq
    %v4063 = vshrl.u32 %v4062, 7
    %v4064 = vsub.s32 1, %v4063
    %v4065 = vrot.slane %v4044, %v4064
    %v4066 = vadd.f32 %v4065, %v4056
    %v4067 = vadd.f32 %v4066, %v4059
    %v4068 = vtanh.pop %v4067
    %v4069 = vlaneseq
    %v4070 = vshrl.u32 %v4069, 7
    %v4071 = vsub.s32 2, %v4070
    %v4072 = vrot.slane %v4044, %v4071
    %v4073 = vadd.f32 %v4072, %v4056
    %v4074 = vadd.f32 %v4073, %v4059
    %v4075 = vtanh.pop %v4074
    %v4076 = vlaneseq
    %v4077 = vshrl.u32 %v4076, 7
    %v4078 = vsub.s32 3, %v4077
    %v4079 = vrot.slane %v4044, %v4078
    %v4080 = vadd.f32 %v4079, %v4056
    %v4081 = vadd.f32 %v4080, %v4059
    %v4082 = vtanh.pop %v4081
    %v4083 = vlaneseq
    %v4084 = vshrl.u32 %v4083, 7
    %v4085 = vsub.s32 4, %v4084
    %v4086 = vrot.slane %v4044, %v4085
    %v4087 = vadd.f32 %v4086, %v4056
    %v4088 = vadd.f32 %v4087, %v4059
    %v4089 = vtanh.pop %v4088
    %v4090 = vlaneseq
    %v4091 = vshrl.u32 %v4090, 7
    %v4092 = vsub.s32 5, %v4091
    %v4093 = vrot.slane %v4044, %v4092
    %v4094 = vadd.f32 %v4093, %v4056
    %v4095 = vadd.f32 %v4094, %v4059
    %v4096 = vtanh.pop %v4095
    %v4097 = vlaneseq
    %v4098 = vshrl.u32 %v4097, 7
    %v4099 = vsub.s32 6, %v4098
    %v4100 = vrot.slane %v4044, %v4099
    %v4101 = vadd.f32 %v4100, %v4056
    %v4102 = vadd.f32 %v4101, %v4059
    %v4103 = vtanh.pop %v4102
    %v4104 = vlaneseq
    %v4105 = vshrl.u32 %v4104, 7
    %v4106 = vsub.s32 7, %v4105
    %v4107 = vrot.slane %v4044, %v4106
    %v4108 = vadd.f32 %v4107, %v4056
    %v4109 = vadd.f32 %v4108, %v4059
    %v4110 = vtanh.pop %v4109
    %v4111 = vlaneseq
    %v4112 = vshrl.u32 %v4111, 7
    %v4113 = vsub.s32 0, %v4112
    %v4114 = vrot.slane %v4046, %v4113
    %4116 = vrot.lane.b32.xlu0 %v4046, 64
    %v4117 = vpop.permute.xlu0 %4116
    %v4119 = vadd.f32 %v4114, %v4117
    %v4120 = vstv %s4049
    %v4121 = vadd.f32 %v4119, %v4120
    %v4122 = vtanh.pop %v4121
    %v4123 = vlaneseq
    %v4124 = vshrl.u32 %v4123, 7
    %v4125 = vsub.s32 1, %v4124
    %v4126 = vrot.slane %v4046, %v4125
    %v4127 = vadd.f32 %v4126, %v4117
    %v4128 = vadd.f32 %v4127, %v4120
    %v4129 = vtanh.pop %v4128
    %v4130 = vlaneseq
    %v4131 = vshrl.u32 %v4130, 7
    %v4132 = vsub.s32 2, %v4131
    %v4133 = vrot.slane %v4046, %v4132
    %v4134 = vadd.f32 %v4133, %v4117
    %v4135 = vadd.f32 %v4134, %v4120
    %v4136 = vtanh.pop %v4135
    %v4137 = vlaneseq
    %v4138 = vshrl.u32 %v4137, 7
    %v4139 = vsub.s32 3, %v4138
    %v4140 = vrot.slane %v4046, %v4139
    %v4141 = vadd.f32 %v4140, %v4117
    %v4142 = vadd.f32 %v4141, %v4120
    %v4143 = vtanh.pop %v4142
    %v4144 = vlaneseq
    %v4145 = vshrl.u32 %v4144, 7
    %v4146 = vsub.s32 4, %v4145
    %v4147 = vrot.slane %v4046, %v4146
    %v4148 = vadd.f32 %v4147, %v4117
    %v4149 = vadd.f32 %v4148, %v4120
    %v4150 = vtanh.pop %v4149
    %v4151 = vlaneseq
    %v4152 = vshrl.u32 %v4151, 7
    %v4153 = vsub.s32 5, %v4152
    %v4154 = vrot.slane %v4046, %v4153
    %v4155 = vadd.f32 %v4154, %v4117
    %v4156 = vadd.f32 %v4155, %v4120
    %v4157 = vtanh.pop %v4156
    %v4158 = vlaneseq
    %v4159 = vshrl.u32 %v4158, 7
    %v4160 = vsub.s32 6, %v4159
    %v4161 = vrot.slane %v4046, %v4160
    %v4162 = vadd.f32 %v4161, %v4117
    %v4163 = vadd.f32 %v4162, %v4120
    %v4164 = vtanh.pop %v4163
    %v4165 = vlaneseq
    %v4166 = vshrl.u32 %v4165, 7
    %v4167 = vsub.s32 7, %v4166
    %v4168 = vrot.slane %v4046, %v4167
    %v4169 = vadd.f32 %v4168, %v4117
    %v4170 = vadd.f32 %v4169, %v4120
    %v4171 = vtanh.pop %v4170
    %v4172 = vld [vmem:[%s14] sm:$0xff]
    %v4173 = vld [vmem:[%s14 + $0x8] sm:$0xff]
    %v4174 = vld [vmem:[%s14 + $0x10] sm:$0xff]
    %v4175 = vld [vmem:[%s14 + $0x18] sm:$0xff]
    %v4176 = vld [vmem:[%s14 + $0x20] sm:$0xff]
    %v4177 = vld [vmem:[%s14 + $0x28] sm:$0xff]
    %v4178 = vld [vmem:[%s14 + $0x30] sm:$0xff]
    %v4179 = vld [vmem:[%s14 + $0x38] sm:$0xff]
    %v4180 = vld [vmem:[%s14 + $0x40] sm:$0xff]
    %v4181 = vld [vmem:[%s14 + $0x48] sm:$0xff]
    %v4182 = vld [vmem:[%s14 + $0x50] sm:$0xff]
    %v4183 = vld [vmem:[%s14 + $0x58] sm:$0xff]
    %v4184 = vld [vmem:[%s14 + $0x60] sm:$0xff]
    %v4185 = vld [vmem:[%s14 + $0x68] sm:$0xff]
    %v4186 = vld [vmem:[%s14 + $0x70] sm:$0xff]
    %v4187 = vld [vmem:[%s14 + $0x78] sm:$0xff]
    %4196 = vrot.lane.b32.xlu0 %v4122, 64
    %v4197 = vpop.permute.xlu0 %4196
    %4198 = vrot.lane.b32.xlu0 %v4129, 64
    %v4199 = vpop.permute.xlu0 %4198
    %4200 = vrot.lane.b32.xlu0 %v4136, 64
    %v4201 = vpop.permute.xlu0 %4200
    %4202 = vrot.lane.b32.xlu0 %v4143, 64
    %v4203 = vpop.permute.xlu0 %4202
    %4204 = vrot.lane.b32.xlu0 %v4150, 64
    %v4205 = vpop.permute.xlu0 %4204
    %4206 = vrot.lane.b32.xlu0 %v4157, 64
    %v4207 = vpop.permute.xlu0 %4206
    %4208 = vrot.lane.b32.xlu0 %v4164, 64
    %v4209 = vpop.permute.xlu0 %4208
    %4210 = vrot.lane.b32.xlu0 %v4171, 64
    %v4211 = vpop.permute.xlu0 %4210
    %v4212 = vsel %vm2054, %v4197, 0
    %v4214 = vsel %vm2054, %v4199, 0
    %v4216 = vsel %vm2054, %v4201, 0
    %v4218 = vsel %vm2054, %v4203, 0
    %v4220 = vsel %vm2054, %v4205, 0
    %v4222 = vsel %vm2054, %v4207, 0
    %v4224 = vsel %vm2054, %v4209, 0
    %v4226 = vsel %vm2054, %v4211, 0
    %4228 = vmatprep.subr.mxu0 0.0
    %4229 = vmatpush1.msra.mxu0 0.0
    %4230 = vmatprep.subr.mxu0 0.0
    %4231 = vmatpush1.msra.mxu0 0.0
    %4232 = vmatprep.subr.mxu0 0.0
    %4233 = vmatpush1.msra.mxu0 0.0
    %4234 = vmatprep.subr.mxu0 0.0
    %4235 = vmatpush1.msra.mxu0 0.0
    %4236 = vmatprep.subr.mxu0 0.0
    %4237 = vmatpush1.msra.mxu0 0.0
    %4238 = vmatprep.subr.mxu0 0.0
    %4239 = vmatpush1.msra.mxu0 0.0
    %4240 = vmatprep.subr.mxu0 0.0
    %4241 = vmatpush1.msra.mxu0 0.0
    %4242 = vmatprep.subr.mxu0 0.0
    %4243 = vmatpush1.msra.mxu0 0.0
    %4244 = vmatprep.subr.mxu0 0.0
    %4245 = vmatpush1.msra.mxu0 %v4187
    %4246 = vmatprep.subr.mxu0 0.0
    %4247 = vmatpush1.msra.mxu0 %v4186
    %4248 = vmatprep.subr.mxu0 0.0
    %4249 = vmatpush1.msra.mxu0 %v4185
    %4250 = vmatprep.subr.mxu0 0.0
    %4251 = vmatpush1.msra.mxu0 %v4184
    %4252 = vmatprep.subr.mxu0 0.0
    %4253 = vmatpush1.msra.mxu0 %v4183
    %4254 = vmatprep.subr.mxu0 0.0
    %4255 = vmatpush1.msra.mxu0 %v4182
    %4256 = vmatprep.subr.mxu0 0.0
    %4257 = vmatpush1.msra.mxu0 %v4181
    %4258 = vmatprep.subr.mxu0 0.0
    %4259 = vmatpush1.msra.mxu0 %v4180
    %4260 = vmatprep.subr.mxu0 0.0
    %4261 = vmatpush2.msra.mxu0 0.0
    %4262 = vmatprep.subr.mxu0 0.0
    %4263 = vmatpush2.msra.mxu0 0.0
    %4264 = vmatprep.subr.mxu0 0.0
    %4265 = vmatpush2.msra.mxu0 0.0
    %4266 = vmatprep.subr.mxu0 0.0
    %4267 = vmatpush2.msra.mxu0 0.0
    %4268 = vmatprep.subr.mxu0 0.0
    %4269 = vmatpush2.msra.mxu0 0.0
    %4270 = vmatprep.subr.mxu0 0.0
    %4271 = vmatpush2.msra.mxu0 0.0
    %4272 = vmatprep.subr.mxu0 0.0
    %4273 = vmatpush2.msra.mxu0 0.0
    %4274 = vmatprep.subr.mxu0 0.0
    %4275 = vmatpush2.msra.mxu0 0.0
    %4276 = vmatprep.subr.mxu0 0.0
    %4277 = vmatpush2.msra.mxu0 0.0
    %4278 = vmatprep.subr.mxu0 0.0
    %4279 = vmatpush2.msra.mxu0 0.0
    %4280 = vmatprep.subr.mxu0 0.0
    %4281 = vmatpush2.msra.mxu0 0.0
    %4282 = vmatprep.subr.mxu0 0.0
    %4283 = vmatpush2.msra.mxu0 0.0
    %4284 = vmatprep.subr.mxu0 0.0
    %4285 = vmatpush2.msra.mxu0 0.0
    %4286 = vmatprep.subr.mxu0 0.0
    %4287 = vmatpush2.msra.mxu0 0.0
    %4288 = vmatprep.subr.mxu0 0.0
    %4289 = vmatpush2.msra.mxu0 0.0
    %4290 = vmatprep.subr.mxu0 0.0
    %4291 = vmatpush2.msra.mxu0 0.0
    %4292 = vmatprep.mubr.f32.mxu0 0.0
    %4293 = vmatmul.mubr.f32.gmra.mxu0 %v4212
    %v4294 = vpop.f32.mrf.mxu0
    %v4295 = vadd.f32 0.0, %v4294
    %v4296 = vpop.f32.mrf.mxu0
    %4297 = vmatprep.mubr.f32.mxu0 0.0
    %4298 = vmatmul.mubr.f32.gmra.mxu0 %v4214
    %v4299 = vpop.f32.mrf.mxu0
    %v4300 = vadd.f32 0.0, %v4299
    %v4301 = vpop.f32.mrf.mxu0
    %4302 = vmatprep.mubr.f32.mxu0 0.0
    %4303 = vmatmul.mubr.f32.gmra.mxu0 %v4216
    %v4304 = vpop.f32.mrf.mxu0
    %v4305 = vadd.f32 0.0, %v4304
    %v4306 = vpop.f32.mrf.mxu0
    %4307 = vmatprep.mubr.f32.mxu0 0.0
    %4308 = vmatmul.mubr.f32.gmra.mxu0 %v4218
    %v4309 = vpop.f32.mrf.mxu0
    %v4310 = vadd.f32 0.0, %v4309
    %v4311 = vpop.f32.mrf.mxu0
    %4312 = vmatprep.mubr.f32.mxu0 0.0
    %4313 = vmatmul.mubr.f32.gmra.mxu0 %v4220
    %v4314 = vpop.f32.mrf.mxu0
    %v4315 = vadd.f32 0.0, %v4314
    %v4316 = vpop.f32.mrf.mxu0
    %4317 = vmatprep.mubr.f32.mxu0 0.0
    %4318 = vmatmul.mubr.f32.gmra.mxu0 %v4222
    %v4319 = vpop.f32.mrf.mxu0
    %v4320 = vadd.f32 0.0, %v4319
    %v4321 = vpop.f32.mrf.mxu0
    %4322 = vmatprep.mubr.f32.mxu0 0.0
    %4323 = vmatmul.mubr.f32.gmra.mxu0 %v4224
    %v4324 = vpop.f32.mrf.mxu0
    %v4325 = vadd.f32 0.0, %v4324
    %v4326 = vpop.f32.mrf.mxu0
    %4327 = vmatprep.mubr.f32.mxu0 0.0
    %4328 = vmatmul.mubr.f32.gmra.mxu0 %v4226
    %v4329 = vpop.f32.mrf.mxu0
    %v4330 = vadd.f32 0.0, %v4329
    %v4331 = vpop.f32.mrf.mxu0
    %4332 = vdwg.mxu0
    %v4334 = vsel %vm2054, %v4061, 0
    %v4337 = vsel %vm2054, %v4068, 0
    %v4340 = vsel %vm2054, %v4075, 0
    %v4343 = vsel %vm2054, %v4082, 0
    %v4346 = vsel %vm2054, %v4089, 0
    %v4349 = vsel %vm2054, %v4096, 0
    %v4352 = vsel %vm2054, %v4103, 0
    %v4355 = vsel %vm2054, %v4110, 0
    %4357 = vmatprep.subr.mxu0 0.0
    %4358 = vmatpush1.msra.mxu0 0.0
    %4359 = vmatprep.subr.mxu0 0.0
    %4360 = vmatpush1.msra.mxu0 0.0
    %4361 = vmatprep.subr.mxu0 0.0
    %4362 = vmatpush1.msra.mxu0 0.0
    %4363 = vmatprep.subr.mxu0 0.0
    %4364 = vmatpush1.msra.mxu0 0.0
    %4365 = vmatprep.subr.mxu0 0.0
    %4366 = vmatpush1.msra.mxu0 0.0
    %4367 = vmatprep.subr.mxu0 0.0
    %4368 = vmatpush1.msra.mxu0 0.0
    %4369 = vmatprep.subr.mxu0 0.0
    %4370 = vmatpush1.msra.mxu0 0.0
    %4371 = vmatprep.subr.mxu0 0.0
    %4372 = vmatpush1.msra.mxu0 0.0
    %4373 = vmatprep.subr.mxu0 0.0
    %4374 = vmatpush1.msra.mxu0 %v4179
    %4375 = vmatprep.subr.mxu0 0.0
    %4376 = vmatpush1.msra.mxu0 %v4178
    %4377 = vmatprep.subr.mxu0 0.0
    %4378 = vmatpush1.msra.mxu0 %v4177
    %4379 = vmatprep.subr.mxu0 0.0
    %4380 = vmatpush1.msra.mxu0 %v4176
    %4381 = vmatprep.subr.mxu0 0.0
    %4382 = vmatpush1.msra.mxu0 %v4175
    %4383 = vmatprep.subr.mxu0 0.0
    %4384 = vmatpush1.msra.mxu0 %v4174
    %4385 = vmatprep.subr.mxu0 0.0
    %4386 = vmatpush1.msra.mxu0 %v4173
    %4387 = vmatprep.subr.mxu0 0.0
    %4388 = vmatpush1.msra.mxu0 %v4172
    %4389 = vmatprep.subr.mxu0 0.0
    %4390 = vmatpush2.msra.mxu0 0.0
    %4391 = vmatprep.subr.mxu0 0.0
    %4392 = vmatpush2.msra.mxu0 0.0
    %4393 = vmatprep.subr.mxu0 0.0
    %4394 = vmatpush2.msra.mxu0 0.0
    %4395 = vmatprep.subr.mxu0 0.0
    %4396 = vmatpush2.msra.mxu0 0.0
    %4397 = vmatprep.subr.mxu0 0.0
    %4398 = vmatpush2.msra.mxu0 0.0
    %4399 = vmatprep.subr.mxu0 0.0
    %4400 = vmatpush2.msra.mxu0 0.0
    %4401 = vmatprep.subr.mxu0 0.0
    %4402 = vmatpush2.msra.mxu0 0.0
    %4403 = vmatprep.subr.mxu0 0.0
    %4404 = vmatpush2.msra.mxu0 0.0
    %4405 = vmatprep.subr.mxu0 0.0
    %4406 = vmatpush2.msra.mxu0 0.0
    %4407 = vmatprep.subr.mxu0 0.0
    %4408 = vmatpush2.msra.mxu0 0.0
    %4409 = vmatprep.subr.mxu0 0.0
    %4410 = vmatpush2.msra.mxu0 0.0
    %4411 = vmatprep.subr.mxu0 0.0
    %4412 = vmatpush2.msra.mxu0 0.0
    %4413 = vmatprep.subr.mxu0 0.0
    %4414 = vmatpush2.msra.mxu0 0.0
    %4415 = vmatprep.subr.mxu0 0.0
    %4416 = vmatpush2.msra.mxu0 0.0
    %4417 = vmatprep.subr.mxu0 0.0
    %4418 = vmatpush2.msra.mxu0 0.0
    %4419 = vmatprep.subr.mxu0 0.0
    %4420 = vmatpush2.msra.mxu0 0.0
    %4421 = vmatprep.mubr.f32.mxu0 0.0
    %4422 = vmatmul.mubr.f32.gmra.mxu0 %v4334
    %v4423 = vpop.f32.mrf.mxu0
    %v4424 = vadd.f32 %v4295, %v4423
    %v4425 = vpop.f32.mrf.mxu0
    %4426 = vmatprep.mubr.f32.mxu0 0.0
    %4427 = vmatmul.mubr.f32.gmra.mxu0 %v4337
    %v4428 = vpop.f32.mrf.mxu0
    %v4429 = vadd.f32 %v4300, %v4428
    %v4430 = vpop.f32.mrf.mxu0
    %4431 = vmatprep.mubr.f32.mxu0 0.0
    %4432 = vmatmul.mubr.f32.gmra.mxu0 %v4340
    %v4433 = vpop.f32.mrf.mxu0
    %v4434 = vadd.f32 %v4305, %v4433
    %v4435 = vpop.f32.mrf.mxu0
    %4436 = vmatprep.mubr.f32.mxu0 0.0
    %4437 = vmatmul.mubr.f32.gmra.mxu0 %v4343
    %v4438 = vpop.f32.mrf.mxu0
    %v4439 = vadd.f32 %v4310, %v4438
    %v4440 = vpop.f32.mrf.mxu0
    %4441 = vmatprep.mubr.f32.mxu0 0.0
    %4442 = vmatmul.mubr.f32.gmra.mxu0 %v4346
    %v4443 = vpop.f32.mrf.mxu0
    %v4444 = vadd.f32 %v4315, %v4443
    %v4445 = vpop.f32.mrf.mxu0
    %4446 = vmatprep.mubr.f32.mxu0 0.0
    %4447 = vmatmul.mubr.f32.gmra.mxu0 %v4349
    %v4448 = vpop.f32.mrf.mxu0
    %v4449 = vadd.f32 %v4320, %v4448
    %v4450 = vpop.f32.mrf.mxu0
    %4451 = vmatprep.mubr.f32.mxu0 0.0
    %4452 = vmatmul.mubr.f32.gmra.mxu0 %v4352
    %v4453 = vpop.f32.mrf.mxu0
    %v4454 = vadd.f32 %v4325, %v4453
    %v4455 = vpop.f32.mrf.mxu0
    %4456 = vmatprep.mubr.f32.mxu0 0.0
    %4457 = vmatmul.mubr.f32.gmra.mxu0 %v4355
    %v4458 = vpop.f32.mrf.mxu0
    %v4459 = vadd.f32 %v4330, %v4458
    %v4460 = vpop.f32.mrf.mxu0
    %4461 = vdwg.mxu0
    %v4462 = vld [vmem:[%s15] sm:$0x1]
    %v4464 = vlaneseq
    %v4465 = vshrl.u32 %v4464, 7
    %v4466 = vsub.s32 0, %v4465
    %v4467 = vrot.slane %v4462, %v4466
    %v4469 = vadd.f32 %v4424, %v4467
    %v4470 = vadd.f32 %v4429, %v4467
    %v4471 = vadd.f32 %v4434, %v4467
    %v4472 = vadd.f32 %v4439, %v4467
    %v4473 = vadd.f32 %v4444, %v4467
    %v4474 = vadd.f32 %v4449, %v4467
    %v4475 = vadd.f32 %v4454, %v4467
    %v4476 = vadd.f32 %v4459, %v4467
    %4477 = vst [vmem:[%s17] sm:$0xff] %v4469
    %4478 = vst [vmem:[%s17 + $0x8] sm:$0xff] %v4470
    %4479 = vst [vmem:[%s17 + $0x10] sm:$0xff] %v4471
    %4480 = vst [vmem:[%s17 + $0x18] sm:$0xff] %v4472
    %4481 = vst [vmem:[%s17 + $0x20] sm:$0xff] %v4473
    %4482 = vst [vmem:[%s17 + $0x28] sm:$0xff] %v4474
    %4483 = vst [vmem:[%s17 + $0x30] sm:$0xff] %v4475
    %4484 = vst [vmem:[%s17 + $0x38] sm:$0xff] %v4476
    // Predicated region
    $region74: #{forward.1} parent=1 // pred_check
      _
    $region75: #{forward.1} parent=1 // pred_check_branch
      %4486 = sbr.rel (0) target = $region77
    $region76: #{forward.1} parent=1 // pred_region
      _
    $region77: #{forward.1} parent=1 // pred_fallthru
      _
    // Predicated region
    $region78: #{forward.1} parent=1 // pred_check
      _
    $region79: #{forward.1} parent=1 // pred_check_branch
      %4488 = sbr.rel (0) target = $region81
    $region80: #{forward.1} parent=1 // pred_region
      _
    $region81: #{forward.1} parent=1 // pred_fallthru
      _
    %4489 = vsyncpa [#allocation5], 1

</llo_original>
